<compile_context>
chip_gen: v7x
topology: tpu7x:2x2x1
jax: 0.10.0
libtpu: 0.0.40
codegen_flags: <defaults>
</compile_context>

<pallas_src>
import math
import jax
import jax.numpy as jnp
from jax.experimental import pallas as pl
from jax.experimental.pallas import tpu as pltpu  # noqa: F401  (no TPU-specific params needed at this size)

# ------------------------ configuration (small synthetic T5 encoder) ------------------
EMBED_DIM   = 32          # "dpe" (real ProstT5 uses 1024) -- small shapes for this demo
NUM_HEADS   = 4
HEAD_DIM    = EMBED_DIM // NUM_HEADS
FF_DIM      = 64
NUM_LAYERS  = 2
NUM_BUCKETS = 32          # T5 relative-attention buckets
MAX_DIST    = 128
EPS         = 1e-6
NEG_INF     = -1e9

NUM_RESTYPES = 21         # 20 standard AAs + 'X' (ProstT5 mask token)
PAD_ID, EOS_ID, PREFIX_ID = 0, 1, 2
VOCAB = 3 + NUM_RESTYPES  # [pad, </s>, prefix, residue tokens...]


# ------------------------------- Pallas kernel -----------------------------------------
def _rmsnorm(x, w):
    var = jnp.mean(x * x, axis=-1, keepdims=True)
    return x * jax.lax.rsqrt(var + EPS) * w


def prost_t5_encoder_kernel(x_ref, bias_ref, ln0_ref, wqkv_ref, wo_ref,
                            ln1_ref, wi_ref, wof_ref, final_ln_ref, out_ref):
    """Full encoder: NUM_LAYERS T5 blocks + final RMSNorm, whole batch resident in VMEM.

    x_ref/out_ref: (B, T, D) f32.  bias_ref: (H, T, T) f32 (rel-pos bias + pad-key mask).
    Stacked weights: ln0/ln1 (L,1,D), wqkv (L,H,D,3*dh), wo (L,H,dh,D), wi (L,D,F),
    wof (L,F,D), final_ln (1,D).
    """
    B, T, D = x_ref.shape
    H, dh = NUM_HEADS, HEAD_DIM
    G = B * H
    bf16 = jnp.bfloat16

    x = x_ref[...]                                                     # (B, T, D) f32

    # Rel-pos bias + pad mask, replicated per batch element: index g = b*H + h.
    bias_g = jnp.broadcast_to(bias_ref[...][None], (B, H, T, T)).reshape(G, T, T)

    for l in range(NUM_LAYERS):
        # -------- self-attention sub-block --------
        h = _rmsnorm(x, ln0_ref[l])                                    # (B, T, D) f32
        # Head-major batched QKV projection (one batched MXU matmul, no per-head loop).
        h_g = jnp.broadcast_to(h[:, None], (B, H, T, D)).reshape(G, T, D).astype(bf16)
        wqkv_g = jnp.broadcast_to(wqkv_ref[l][None],
                                  (B, H, D, 3 * dh)).reshape(G, D, 3 * dh).astype(bf16)
        qkv = jnp.einsum('gtd,gde->gte', h_g, wqkv_g,
                         preferred_element_type=jnp.float32)           # (G, T, 3*dh) f32
        q = qkv[:, :, 0:dh].astype(bf16)
        k = qkv[:, :, dh:2 * dh].astype(bf16)
        v = qkv[:, :, 2 * dh:3 * dh].astype(bf16)

        # T5 does NOT scale by 1/sqrt(dh); bias already contains rel-pos + pad mask.
        scores = jnp.einsum('gtd,gsd->gts', q, k,
                            preferred_element_type=jnp.float32) + bias_g   # (G, T, T) f32
        m = jnp.max(scores, axis=-1, keepdims=True)
        p = jnp.exp(scores - m)
        denom = jnp.sum(p, axis=-1, keepdims=True)
        p = p * pl.reciprocal(denom, approx=True)                      # EUP reciprocal

        ctx = jnp.einsum('gts,gsd->gtd', p.astype(bf16), v,
                         preferred_element_type=jnp.float32)           # (G, T, dh) f32
        wo_g = jnp.broadcast_to(wo_ref[l][None],
                                (B, H, dh, D)).reshape(G, dh, D).astype(bf16)
        o_g = jnp.einsum('gtd,gde->gte', ctx.astype(bf16), wo_g,
                         preferred_element_type=jnp.float32)           # (G, T, D) f32
        x = x + o_g.reshape(B, H, T, D).sum(axis=1)                    # residual

        # -------- feed-forward sub-block --------
        h2 = _rmsnorm(x, ln1_ref[l]).reshape(B * T, D).astype(bf16)
        ff = jnp.maximum(jnp.dot(h2, wi_ref[l].astype(bf16),
                                 preferred_element_type=jnp.float32), 0.0)   # ReLU
        y = jnp.dot(ff.astype(bf16), wof_ref[l].astype(bf16),
                    preferred_element_type=jnp.float32)
        x = x + y.reshape(B, T, D)

    # final RMSNorm
    out_ref[...] = _rmsnorm(x, final_ln_ref[...])


def prost_t5_encoder(x, bias, ln0, wqkv, wo, ln1, wi, wof, final_ln):
    B, T, D = x.shape
    # No grid: everything (activations + weights, well under 1 MiB here) is resident in
    # VMEM for the whole forward -> one kernel launch, one DMA in, one DMA out.
    # TODO(synk): D=32 < 128 lanes -> masked stores; real ProstT5 (D=1024) is lane-dense.
    return pl.pallas_call(
        prost_t5_encoder_kernel,
        out_shape=jax.ShapeDtypeStruct((B, T, D), jnp.float32),
    )(x, bias, ln0, wqkv, wo, ln1, wi, wof, final_ln)


# ------------------------------- plain-JAX glue ----------------------------------------
def relative_position_bucket(rel_pos, num_buckets=NUM_BUCKETS, max_distance=MAX_DIST):
    """HF T5 bidirectional relative-position bucketing (integer math glue)."""
    num_buckets = num_buckets // 2
    ret = (rel_pos > 0).astype(jnp.int32) * num_buckets
    n = jnp.abs(rel_pos)
    max_exact = num_buckets // 2
    is_small = n < max_exact
    n_f = jnp.maximum(n, 1).astype(jnp.float32)
    val_if_large = max_exact + (
        jnp.log(n_f / max_exact) / math.log(max_distance / max_exact)
        * (num_buckets - max_exact)
    ).astype(jnp.int32)
    val_if_large = jnp.minimum(val_if_large, num_buckets - 1)
    return ret + jnp.where(is_small, n, val_if_large)


def compute_position_bias(rel_emb, T):
    ctx = jnp.arange(T)[:, None]
    mem = jnp.arange(T)[None, :]
    buckets = relative_position_bucket(mem - ctx)       # (T, T)
    bias = rel_emb[buckets]                             # (T, T, H)
    return jnp.transpose(bias, (2, 0, 1))               # (H, T, T)


def make_tokens(aa_ids):
    """-1 -> 'X' token; residue i -> token 3+i; prefix + residues + </s> + pad to 8-mult."""
    B, n = aa_ids.shape
    res_tok = jnp.where(aa_ids < 0, 3 + NUM_RESTYPES - 1, aa_ids + 3).astype(jnp.int32)
    prefix = jnp.full((B, 1), PREFIX_ID, jnp.int32)
    eos = jnp.full((B, 1), EOS_ID, jnp.int32)
    tokens = jnp.concatenate([prefix, res_tok, eos], axis=1)          # (B, n+2)
    t_real = n + 2
    t_pad = ((t_real + 7) // 8) * 8                                   # sublane-align T
    tokens = jnp.concatenate(
        [tokens, jnp.full((B, t_pad - t_real), PAD_ID, jnp.int32)], axis=1)
    return tokens, t_real, t_pad


def init_params(seed=42):
    key = jax.random.PRNGKey(seed)

    def nxt():
        nonlocal key
        key, sub = jax.random.split(key)
        return sub

    scale = 0.05
    params = {
        "embed": jax.random.normal(nxt(), (VOCAB, EMBED_DIM), jnp.float32) * scale,
        "rel_bias": jax.random.normal(nxt(), (NUM_BUCKETS, NUM_HEADS), jnp.float32) * scale,
        "final_ln": jnp.ones((1, EMBED_DIM), jnp.float32),
        "layers": [],
    }
    for _ in range(NUM_LAYERS):
        params["layers"].append({
            "ln0": jnp.ones((1, EMBED_DIM), jnp.float32),
            "wq": jax.random.normal(nxt(), (EMBED_DIM, EMBED_DIM), jnp.float32) * scale,
            "wk": jax.random.normal(nxt(), (EMBED_DIM, EMBED_DIM), jnp.float32) * scale,
            "wv": jax.random.normal(nxt(), (EMBED_DIM, EMBED_DIM), jnp.float32) * scale,
            "wo": jax.random.normal(nxt(), (EMBED_DIM, EMBED_DIM), jnp.float32) * scale,
            "ln1": jnp.ones((1, EMBED_DIM), jnp.float32),
            "wi": jax.random.normal(nxt(), (EMBED_DIM, FF_DIM), jnp.float32) * scale,
            "wo_ff": jax.random.normal(nxt(), (FF_DIM, EMBED_DIM), jnp.float32) * scale,
        })
    return params


def pack_params(params):
    """Stack layer weights with a leading layer axis; split Q/K/V/O weights by head."""
    def head_major(w):  # (D, D) -> (H, D, dh)
        return jnp.transpose(w.reshape(EMBED_DIM, NUM_HEADS, HEAD_DIM), (1, 0, 2))

    ln0 = jnp.stack([lyr["ln0"] for lyr in params["layers"]])                     # (L,1,D)
    ln1 = jnp.stack([lyr["ln1"] for lyr in params["layers"]])                     # (L,1,D)
    wqkv = jnp.stack([jnp.concatenate([head_major(lyr["wq"]),
                                       head_major(lyr["wk"]),
                                       head_major(lyr["wv"])], axis=-1)
                      for lyr in params["layers"]])                               # (L,H,D,3dh)
    wo = jnp.stack([lyr["wo"].reshape(NUM_HEADS, HEAD_DIM, EMBED_DIM)
                    for lyr in params["layers"]])                                 # (L,H,dh,D)
    wi = jnp.stack([lyr["wi"] for lyr in params["layers"]])                       # (L,D,F)
    wof = jnp.stack([lyr["wo_ff"] for lyr in params["layers"]])                   # (L,F,D)
    return ln0, wqkv, wo, ln1, wi, wof


def prost_t5_forward(aa_ids, params):
    """aa_ids: [B, n] int32  ->  PLM embeddings [B, n, EMBED_DIM] float32."""
    B, n = aa_ids.shape
    tokens, t_real, t_pad = make_tokens(aa_ids)

    # FIX (review): padded KEY positions get -1e9 (previous version had the sign flipped).
    key_bias = jnp.where(jnp.arange(t_pad) < t_real, 0.0, NEG_INF).astype(jnp.float32)

    x = params["embed"][tokens]                                       # (B, T, D) f32
    bias = compute_position_bias(params["rel_bias"], t_pad)           # (H, T, T)
    bias = (bias + key_bias[None, None, :]).astype(jnp.float32)

    ln0, wqkv, wo, ln1, wi, wof = pack_params(params)
    hidden = prost_t5_encoder(x, bias, ln0, wqkv, wo, ln1, wi, wof, params["final_ln"])

    # last_hidden_state[:, 1 : seq_len + 1]  (drop prefix token, keep n residue positions)
    return hidden[:, 1:n + 1, :]


def prost_t5_forward_ref(aa_ids, params):
    """Pure-JAX float32 reference (same semantics, no Pallas)."""
    B, n = aa_ids.shape
    tokens, t_real, t_pad = make_tokens(aa_ids)
    key_bias = jnp.where(jnp.arange(t_pad) < t_real, 0.0, NEG_INF).astype(jnp.float32)
    x = params["embed"][tokens]
    bias = compute_position_bias(params["rel_bias"], t_pad) + key_bias[None, None, :]
    H, dh = NUM_HEADS, HEAD_DIM
    for lyr in params["layers"]:
        hn = _rmsnorm(x, lyr["ln0"])
        q = (hn @ lyr["wq"]).reshape(B, t_pad, H, dh)
        k = (hn @ lyr["wk"]).reshape(B, t_pad, H, dh)
        v = (hn @ lyr["wv"]).reshape(B, t_pad, H, dh)
        s = jnp.einsum('bqhd,bkhd->bhqk', q, k) + bias[None]
        p = jax.nn.softmax(s, axis=-1)
        ctx = jnp.einsum('bhqk,bkhd->bqhd', p, v).reshape(B, t_pad, EMBED_DIM)
        x = x + ctx @ lyr["wo"]
        h2 = _rmsnorm(x, lyr["ln1"])
        x = x + jnp.maximum(h2 @ lyr["wi"], 0.0) @ lyr["wo_ff"]
    x = _rmsnorm(x, params["final_ln"])
    return x[:, 1:n + 1, :]


# ------------------------------------ main ---------------------------------------------
if __name__ == "__main__":
    B, n = 2, 8
    key = jax.random.PRNGKey(0)
    # residue indices in [-1, 20]; -1 means masked ('X')
    aa_ids = jax.random.randint(key, (B, n), minval=-1, maxval=NUM_RESTYPES, dtype=jnp.int32)

    params = init_params(seed=42)

    fwd = jax.jit(prost_t5_forward)
    out = jax.block_until_ready(fwd(aa_ids, params))

    assert out.shape == (B, n, EMBED_DIM), out.shape
    assert out.dtype == jnp.float32
    assert bool(jnp.all(jnp.isfinite(out)))

    # Loose tolerance: kernel uses bf16 MXU operands + approx reciprocal (f32 accumulate).
    ref = prost_t5_forward_ref(aa_ids, params)
    max_err = float(jnp.max(jnp.abs(out - ref)))
    assert max_err < 0.1, f"kernel deviates from f32 reference: max_err={max_err}"

    print("KERNEL_OK")
</pallas_src>

<mosaic_0001>
module attributes {stable_mosaic.version = 11 : i64} {
  func.func @prost_t5_encoder_kernel(%arg0: memref<2x16x32xf32, #tpu.memory_space<vmem>>, %arg1: memref<4x16x16xf32, #tpu.memory_space<vmem>>, %arg2: memref<2x1x32xf32, #tpu.memory_space<vmem>>, %arg3: memref<2x4x32x24xf32, #tpu.memory_space<vmem>>, %arg4: memref<2x4x8x32xf32, #tpu.memory_space<vmem>>, %arg5: memref<2x1x32xf32, #tpu.memory_space<vmem>>, %arg6: memref<2x32x64xf32, #tpu.memory_space<vmem>>, %arg7: memref<2x64x32xf32, #tpu.memory_space<vmem>>, %arg8: memref<1x32xf32, #tpu.memory_space<vmem>>, %arg9: memref<2x16x32xf32, #tpu.memory_space<vmem>>) attributes {dimension_semantics = [], scalar_prefetch = 0 : i64, scratch_operands = 0 : i64, tpu.core_type = #tpu.core_type<tc>} {
    %c0 = arith.constant 0 : index
    %c0_0 = arith.constant 0 : index
    %c0_1 = arith.constant 0 : index
    %0 = vector.load %arg0[%c0, %c0_0, %c0_1] : memref<2x16x32xf32, #tpu.memory_space<vmem>>, vector<2x16x32xf32>
    %c0_2 = arith.constant 0 : index
    %c0_3 = arith.constant 0 : index
    %c0_4 = arith.constant 0 : index
    %1 = vector.load %arg1[%c0_2, %c0_3, %c0_4] : memref<4x16x16xf32, #tpu.memory_space<vmem>>, vector<4x16x16xf32>
    %2 = vector.shape_cast %1 : vector<4x16x16xf32> to vector<1x4x16x16xf32>
    %3 = vector.shape_cast %2 : vector<1x4x16x16xf32> to vector<1x4x16x16xf32>
    %4 = vector.broadcast %3 : vector<1x4x16x16xf32> to vector<2x4x16x16xf32>
    %5 = vector.shape_cast %4 : vector<2x4x16x16xf32> to vector<8x16x16xf32>
    %c0_5 = arith.constant 0 : index
    %c0_6 = arith.constant 0 : index
    %c0_7 = arith.constant 0 : index
    %6 = vector.load %arg2[%c0_5, %c0_6, %c0_7] : memref<2x1x32xf32, #tpu.memory_space<vmem>>, vector<1x1x32xf32>
    %7 = vector.shape_cast %6 : vector<1x1x32xf32> to vector<1x32xf32>
    %8 = arith.mulf %0, %0 : vector<2x16x32xf32>
    %cst = arith.constant dense<0.000000e+00> : vector<2x16xf32>
    %9 = vector.multi_reduction <add>, %8, %cst [2] : vector<2x16x32xf32> to vector<2x16xf32>
    %10 = vector.shape_cast %9 : vector<2x16xf32> to vector<2x16x1xf32>
    %cst_8 = arith.constant 3.200000e+01 : f32
    %11 = vector.broadcast %cst_8 : f32 to vector<2x16x1xf32>
    %12 = arith.divf %10, %11 : vector<2x16x1xf32>
    %cst_9 = arith.constant 9.99999997E-7 : f32
    %13 = vector.broadcast %cst_9 : f32 to vector<2x16x1xf32>
    %14 = arith.addf %12, %13 : vector<2x16x1xf32>
    %15 = math.rsqrt %14 : vector<2x16x1xf32>
    %16 = vector.broadcast %15 : vector<2x16x1xf32> to vector<2x16x32xf32>
    %17 = arith.mulf %0, %16 : vector<2x16x32xf32>
    %18 = vector.shape_cast %7 : vector<1x32xf32> to vector<1x1x32xf32>
    %19 = vector.broadcast %18 : vector<1x1x32xf32> to vector<2x16x32xf32>
    %20 = arith.mulf %17, %19 : vector<2x16x32xf32>
    %21 = vector.shape_cast %20 : vector<2x16x32xf32> to vector<2x1x16x32xf32>
    %22 = vector.shape_cast %21 : vector<2x1x16x32xf32> to vector<2x1x16x32xf32>
    %23 = vector.broadcast %22 : vector<2x1x16x32xf32> to vector<2x4x16x32xf32>
    %24 = vector.shape_cast %23 : vector<2x4x16x32xf32> to vector<8x16x32xf32>
    %25 = arith.truncf %24 : vector<8x16x32xf32> to vector<8x16x32xbf16>
    %c0_10 = arith.constant 0 : index
    %c0_11 = arith.constant 0 : index
    %c0_12 = arith.constant 0 : index
    %c0_13 = arith.constant 0 : index
    %26 = vector.load %arg3[%c0_10, %c0_11, %c0_12, %c0_13] : memref<2x4x32x24xf32, #tpu.memory_space<vmem>>, vector<1x4x32x24xf32>
    %27 = vector.shape_cast %26 : vector<1x4x32x24xf32> to vector<4x32x24xf32>
    %28 = vector.shape_cast %27 : vector<4x32x24xf32> to vector<1x4x32x24xf32>
    %29 = vector.shape_cast %28 : vector<1x4x32x24xf32> to vector<1x4x32x24xf32>
    %30 = vector.broadcast %29 : vector<1x4x32x24xf32> to vector<2x4x32x24xf32>
    %31 = vector.shape_cast %30 : vector<2x4x32x24xf32> to vector<8x32x24xf32>
    %32 = arith.truncf %31 : vector<8x32x24xf32> to vector<8x32x24xbf16>
    "tpu.trace_start"() <{level = 10 : i32, message = "gtd,gde->gte"}> : () -> ()
    %cst_14 = arith.constant dense<0.000000e+00> : vector<8x16x24xf32>
    %33 = tpu.matmul %25, %32, %cst_14 {dimension_numbers = #tpu.dot_dimension_numbers<[2], [1], [1], [2], [0, 0, 0, 1, 1, 2], [0], [0]>} : vector<8x16x32xbf16>, vector<8x32x24xbf16>, vector<8x16x24xf32> -> vector<8x16x24xf32>
    "tpu.trace_stop"() : () -> ()
    %34 = vector.extract_strided_slice %33 {offsets = [0, 0, 0], sizes = [8, 16, 8], strides = [1, 1, 1]} : vector<8x16x24xf32> to vector<8x16x8xf32>
    %35 = arith.truncf %34 : vector<8x16x8xf32> to vector<8x16x8xbf16>
    %36 = vector.extract_strided_slice %33 {offsets = [0, 0, 8], sizes = [8, 16, 8], strides = [1, 1, 1]} : vector<8x16x24xf32> to vector<8x16x8xf32>
    %37 = arith.truncf %36 : vector<8x16x8xf32> to vector<8x16x8xbf16>
    %38 = vector.extract_strided_slice %33 {offsets = [0, 0, 16], sizes = [8, 16, 8], strides = [1, 1, 1]} : vector<8x16x24xf32> to vector<8x16x8xf32>
    %39 = arith.truncf %38 : vector<8x16x8xf32> to vector<8x16x8xbf16>
    "tpu.trace_start"() <{level = 10 : i32, message = "gtd,gsd->gts"}> : () -> ()
    %cst_15 = arith.constant dense<0.000000e+00> : vector<8x16x16xf32>
    %40 = tpu.matmul %35, %37, %cst_15 {dimension_numbers = #tpu.dot_dimension_numbers<[2], [2], [1], [1], [0, 0, 0, 1, 1, 1], [0], [0]>} : vector<8x16x8xbf16>, vector<8x16x8xbf16>, vector<8x16x16xf32> -> vector<8x16x16xf32>
    "tpu.trace_stop"() : () -> ()
    %41 = arith.addf %40, %5 : vector<8x16x16xf32>
    %cst_16 = arith.constant dense<0xFF800000> : vector<8x16xf32>
    %42 = vector.multi_reduction <maximumf>, %41, %cst_16 [2] : vector<8x16x16xf32> to vector<8x16xf32>
    %43 = vector.shape_cast %42 : vector<8x16xf32> to vector<8x16x1xf32>
    %44 = vector.broadcast %43 : vector<8x16x1xf32> to vector<8x16x16xf32>
    %45 = arith.subf %41, %44 : vector<8x16x16xf32>
    %46 = math.exp %45 : vector<8x16x16xf32>
    %cst_17 = arith.constant dense<0.000000e+00> : vector<8x16xf32>
    %47 = vector.multi_reduction <add>, %46, %cst_17 [2] : vector<8x16x16xf32> to vector<8x16xf32>
    %48 = vector.shape_cast %47 : vector<8x16xf32> to vector<8x16x1xf32>
    %49 = tpu.reciprocal %48 {approx = true} : vector<8x16x1xf32> -> vector<8x16x1xf32>
    %50 = vector.broadcast %49 : vector<8x16x1xf32> to vector<8x16x16xf32>
    %51 = arith.mulf %46, %50 : vector<8x16x16xf32>
    %52 = arith.truncf %51 : vector<8x16x16xf32> to vector<8x16x16xbf16>
    "tpu.trace_start"() <{level = 10 : i32, message = "gts,gsd->gtd"}> : () -> ()
    %cst_18 = arith.constant dense<0.000000e+00> : vector<8x16x8xf32>
    %53 = tpu.matmul %52, %39, %cst_18 {dimension_numbers = #tpu.dot_dimension_numbers<[2], [1], [1], [2], [0, 0, 0, 1, 1, 2], [0], [0]>} : vector<8x16x16xbf16>, vector<8x16x8xbf16>, vector<8x16x8xf32> -> vector<8x16x8xf32>
    "tpu.trace_stop"() : () -> ()
    %c0_19 = arith.constant 0 : index
    %c0_20 = arith.constant 0 : index
    %c0_21 = arith.constant 0 : index
    %c0_22 = arith.constant 0 : index
    %54 = vector.load %arg4[%c0_19, %c0_20, %c0_21, %c0_22] : memref<2x4x8x32xf32, #tpu.memory_space<vmem>>, vector<1x4x8x32xf32>
    %55 = vector.shape_cast %54 : vector<1x4x8x32xf32> to vector<4x8x32xf32>
    %56 = vector.shape_cast %55 : vector<4x8x32xf32> to vector<1x4x8x32xf32>
    %57 = vector.shape_cast %56 : vector<1x4x8x32xf32> to vector<1x4x8x32xf32>
    %58 = vector.broadcast %57 : vector<1x4x8x32xf32> to vector<2x4x8x32xf32>
    %59 = vector.shape_cast %58 : vector<2x4x8x32xf32> to vector<8x8x32xf32>
    %60 = arith.truncf %59 : vector<8x8x32xf32> to vector<8x8x32xbf16>
    %61 = arith.truncf %53 : vector<8x16x8xf32> to vector<8x16x8xbf16>
    "tpu.trace_start"() <{level = 10 : i32, message = "gtd,gde->gte"}> : () -> ()
    %cst_23 = arith.constant dense<0.000000e+00> : vector<8x16x32xf32>
    %62 = tpu.matmul %61, %60, %cst_23 {dimension_numbers = #tpu.dot_dimension_numbers<[2], [1], [1], [2], [0, 0, 0, 1, 1, 2], [0], [0]>} : vector<8x16x8xbf16>, vector<8x8x32xbf16>, vector<8x16x32xf32> -> vector<8x16x32xf32>
    "tpu.trace_stop"() : () -> ()
    %63 = vector.shape_cast %62 : vector<8x16x32xf32> to vector<2x4x16x32xf32>
    %cst_24 = arith.constant dense<0.000000e+00> : vector<2x16x32xf32>
    %64 = vector.multi_reduction <add>, %63, %cst_24 [1] : vector<2x4x16x32xf32> to vector<2x16x32xf32>
    %65 = arith.addf %0, %64 : vector<2x16x32xf32>
    %c0_25 = arith.constant 0 : index
    %c0_26 = arith.constant 0 : index
    %c0_27 = arith.constant 0 : index
    %66 = vector.load %arg5[%c0_25, %c0_26, %c0_27] : memref<2x1x32xf32, #tpu.memory_space<vmem>>, vector<1x1x32xf32>
    %67 = vector.shape_cast %66 : vector<1x1x32xf32> to vector<1x32xf32>
    %68 = arith.mulf %65, %65 : vector<2x16x32xf32>
    %cst_28 = arith.constant dense<0.000000e+00> : vector<2x16xf32>
    %69 = vector.multi_reduction <add>, %68, %cst_28 [2] : vector<2x16x32xf32> to vector<2x16xf32>
    %70 = vector.shape_cast %69 : vector<2x16xf32> to vector<2x16x1xf32>
    %cst_29 = arith.constant 3.200000e+01 : f32
    %71 = vector.broadcast %cst_29 : f32 to vector<2x16x1xf32>
    %72 = arith.divf %70, %71 : vector<2x16x1xf32>
    %cst_30 = arith.constant 9.99999997E-7 : f32
    %73 = vector.broadcast %cst_30 : f32 to vector<2x16x1xf32>
    %74 = arith.addf %72, %73 : vector<2x16x1xf32>
    %75 = math.rsqrt %74 : vector<2x16x1xf32>
    %76 = vector.broadcast %75 : vector<2x16x1xf32> to vector<2x16x32xf32>
    %77 = arith.mulf %65, %76 : vector<2x16x32xf32>
    %78 = vector.shape_cast %67 : vector<1x32xf32> to vector<1x1x32xf32>
    %79 = vector.broadcast %78 : vector<1x1x32xf32> to vector<2x16x32xf32>
    %80 = arith.mulf %77, %79 : vector<2x16x32xf32>
    %81 = vector.shape_cast %80 : vector<2x16x32xf32> to vector<32x32xf32>
    %82 = arith.truncf %81 : vector<32x32xf32> to vector<32x32xbf16>
    %c0_31 = arith.constant 0 : index
    %c0_32 = arith.constant 0 : index
    %c0_33 = arith.constant 0 : index
    %83 = vector.load %arg6[%c0_31, %c0_32, %c0_33] : memref<2x32x64xf32, #tpu.memory_space<vmem>>, vector<1x32x64xf32>
    %84 = vector.shape_cast %83 : vector<1x32x64xf32> to vector<32x64xf32>
    %85 = arith.truncf %84 : vector<32x64xf32> to vector<32x64xbf16>
    %cst_34 = arith.constant dense<0.000000e+00> : vector<32x64xf32>
    %86 = tpu.matmul %82, %85, %cst_34 {dimension_numbers = #tpu.dot_dimension_numbers<[1], [0], [0], [1], [0, 0, 1, 1], [], []>} : vector<32x32xbf16>, vector<32x64xbf16>, vector<32x64xf32> -> vector<32x64xf32>
    %cst_35 = arith.constant 0.000000e+00 : f32
    %87 = vector.broadcast %cst_35 : f32 to vector<32x64xf32>
    %88 = arith.maximumf %86, %87 : vector<32x64xf32>
    %89 = arith.truncf %88 : vector<32x64xf32> to vector<32x64xbf16>
    %c0_36 = arith.constant 0 : index
    %c0_37 = arith.constant 0 : index
    %c0_38 = arith.constant 0 : index
    %90 = vector.load %arg7[%c0_36, %c0_37, %c0_38] : memref<2x64x32xf32, #tpu.memory_space<vmem>>, vector<1x64x32xf32>
    %91 = vector.shape_cast %90 : vector<1x64x32xf32> to vector<64x32xf32>
    %92 = arith.truncf %91 : vector<64x32xf32> to vector<64x32xbf16>
    %cst_39 = arith.constant dense<0.000000e+00> : vector<32x32xf32>
    %93 = tpu.matmul %89, %92, %cst_39 {dimension_numbers = #tpu.dot_dimension_numbers<[1], [0], [0], [1], [0, 0, 1, 1], [], []>} : vector<32x64xbf16>, vector<64x32xbf16>, vector<32x32xf32> -> vector<32x32xf32>
    %94 = vector.shape_cast %93 : vector<32x32xf32> to vector<2x16x32xf32>
    %95 = arith.addf %65, %94 : vector<2x16x32xf32>
    %c1 = arith.constant 1 : index
    %c0_40 = arith.constant 0 : index
    %c0_41 = arith.constant 0 : index
    %96 = vector.load %arg2[%c1, %c0_40, %c0_41] : memref<2x1x32xf32, #tpu.memory_space<vmem>>, vector<1x1x32xf32>
    %97 = vector.shape_cast %96 : vector<1x1x32xf32> to vector<1x32xf32>
    %98 = arith.mulf %95, %95 : vector<2x16x32xf32>
    %cst_42 = arith.constant dense<0.000000e+00> : vector<2x16xf32>
    %99 = vector.multi_reduction <add>, %98, %cst_42 [2] : vector<2x16x32xf32> to vector<2x16xf32>
    %100 = vector.shape_cast %99 : vector<2x16xf32> to vector<2x16x1xf32>
    %cst_43 = arith.constant 3.200000e+01 : f32
    %101 = vector.broadcast %cst_43 : f32 to vector<2x16x1xf32>
    %102 = arith.divf %100, %101 : vector<2x16x1xf32>
    %cst_44 = arith.constant 9.99999997E-7 : f32
    %103 = vector.broadcast %cst_44 : f32 to vector<2x16x1xf32>
    %104 = arith.addf %102, %103 : vector<2x16x1xf32>
    %105 = math.rsqrt %104 : vector<2x16x1xf32>
    %106 = vector.broadcast %105 : vector<2x16x1xf32> to vector<2x16x32xf32>
    %107 = arith.mulf %95, %106 : vector<2x16x32xf32>
    %108 = vector.shape_cast %97 : vector<1x32xf32> to vector<1x1x32xf32>
    %109 = vector.broadcast %108 : vector<1x1x32xf32> to vector<2x16x32xf32>
    %110 = arith.mulf %107, %109 : vector<2x16x32xf32>
    %111 = vector.shape_cast %110 : vector<2x16x32xf32> to vector<2x1x16x32xf32>
    %112 = vector.shape_cast %111 : vector<2x1x16x32xf32> to vector<2x1x16x32xf32>
    %113 = vector.broadcast %112 : vector<2x1x16x32xf32> to vector<2x4x16x32xf32>
    %114 = vector.shape_cast %113 : vector<2x4x16x32xf32> to vector<8x16x32xf32>
    %115 = arith.truncf %114 : vector<8x16x32xf32> to vector<8x16x32xbf16>
    %c1_45 = arith.constant 1 : index
    %c0_46 = arith.constant 0 : index
    %c0_47 = arith.constant 0 : index
    %c0_48 = arith.constant 0 : index
    %116 = vector.load %arg3[%c1_45, %c0_46, %c0_47, %c0_48] : memref<2x4x32x24xf32, #tpu.memory_space<vmem>>, vector<1x4x32x24xf32>
    %117 = vector.shape_cast %116 : vector<1x4x32x24xf32> to vector<4x32x24xf32>
    %118 = vector.shape_cast %117 : vector<4x32x24xf32> to vector<1x4x32x24xf32>
    %119 = vector.shape_cast %118 : vector<1x4x32x24xf32> to vector<1x4x32x24xf32>
    %120 = vector.broadcast %119 : vector<1x4x32x24xf32> to vector<2x4x32x24xf32>
    %121 = vector.shape_cast %120 : vector<2x4x32x24xf32> to vector<8x32x24xf32>
    %122 = arith.truncf %121 : vector<8x32x24xf32> to vector<8x32x24xbf16>
    "tpu.trace_start"() <{level = 10 : i32, message = "gtd,gde->gte"}> : () -> ()
    %cst_49 = arith.constant dense<0.000000e+00> : vector<8x16x24xf32>
    %123 = tpu.matmul %115, %122, %cst_49 {dimension_numbers = #tpu.dot_dimension_numbers<[2], [1], [1], [2], [0, 0, 0, 1, 1, 2], [0], [0]>} : vector<8x16x32xbf16>, vector<8x32x24xbf16>, vector<8x16x24xf32> -> vector<8x16x24xf32>
    "tpu.trace_stop"() : () -> ()
    %124 = vector.extract_strided_slice %123 {offsets = [0, 0, 0], sizes = [8, 16, 8], strides = [1, 1, 1]} : vector<8x16x24xf32> to vector<8x16x8xf32>
    %125 = arith.truncf %124 : vector<8x16x8xf32> to vector<8x16x8xbf16>
    %126 = vector.extract_strided_slice %123 {offsets = [0, 0, 8], sizes = [8, 16, 8], strides = [1, 1, 1]} : vector<8x16x24xf32> to vector<8x16x8xf32>
    %127 = arith.truncf %126 : vector<8x16x8xf32> to vector<8x16x8xbf16>
    %128 = vector.extract_strided_slice %123 {offsets = [0, 0, 16], sizes = [8, 16, 8], strides = [1, 1, 1]} : vector<8x16x24xf32> to vector<8x16x8xf32>
    %129 = arith.truncf %128 : vector<8x16x8xf32> to vector<8x16x8xbf16>
    "tpu.trace_start"() <{level = 10 : i32, message = "gtd,gsd->gts"}> : () -> ()
    %cst_50 = arith.constant dense<0.000000e+00> : vector<8x16x16xf32>
    %130 = tpu.matmul %125, %127, %cst_50 {dimension_numbers = #tpu.dot_dimension_numbers<[2], [2], [1], [1], [0, 0, 0, 1, 1, 1], [0], [0]>} : vector<8x16x8xbf16>, vector<8x16x8xbf16>, vector<8x16x16xf32> -> vector<8x16x16xf32>
    "tpu.trace_stop"() : () -> ()
    %131 = arith.addf %130, %5 : vector<8x16x16xf32>
    %cst_51 = arith.constant dense<0xFF800000> : vector<8x16xf32>
    %132 = vector.multi_reduction <maximumf>, %131, %cst_51 [2] : vector<8x16x16xf32> to vector<8x16xf32>
    %133 = vector.shape_cast %132 : vector<8x16xf32> to vector<8x16x1xf32>
    %134 = vector.broadcast %133 : vector<8x16x1xf32> to vector<8x16x16xf32>
    %135 = arith.subf %131, %134 : vector<8x16x16xf32>
    %136 = math.exp %135 : vector<8x16x16xf32>
    %cst_52 = arith.constant dense<0.000000e+00> : vector<8x16xf32>
    %137 = vector.multi_reduction <add>, %136, %cst_52 [2] : vector<8x16x16xf32> to vector<8x16xf32>
    %138 = vector.shape_cast %137 : vector<8x16xf32> to vector<8x16x1xf32>
    %139 = tpu.reciprocal %138 {approx = true} : vector<8x16x1xf32> -> vector<8x16x1xf32>
    %140 = vector.broadcast %139 : vector<8x16x1xf32> to vector<8x16x16xf32>
    %141 = arith.mulf %136, %140 : vector<8x16x16xf32>
    %142 = arith.truncf %141 : vector<8x16x16xf32> to vector<8x16x16xbf16>
    "tpu.trace_start"() <{level = 10 : i32, message = "gts,gsd->gtd"}> : () -> ()
    %cst_53 = arith.constant dense<0.000000e+00> : vector<8x16x8xf32>
    %143 = tpu.matmul %142, %129, %cst_53 {dimension_numbers = #tpu.dot_dimension_numbers<[2], [1], [1], [2], [0, 0, 0, 1, 1, 2], [0], [0]>} : vector<8x16x16xbf16>, vector<8x16x8xbf16>, vector<8x16x8xf32> -> vector<8x16x8xf32>
    "tpu.trace_stop"() : () -> ()
    %c1_54 = arith.constant 1 : index
    %c0_55 = arith.constant 0 : index
    %c0_56 = arith.constant 0 : index
    %c0_57 = arith.constant 0 : index
    %144 = vector.load %arg4[%c1_54, %c0_55, %c0_56, %c0_57] : memref<2x4x8x32xf32, #tpu.memory_space<vmem>>, vector<1x4x8x32xf32>
    %145 = vector.shape_cast %144 : vector<1x4x8x32xf32> to vector<4x8x32xf32>
    %146 = vector.shape_cast %145 : vector<4x8x32xf32> to vector<1x4x8x32xf32>
    %147 = vector.shape_cast %146 : vector<1x4x8x32xf32> to vector<1x4x8x32xf32>
    %148 = vector.broadcast %147 : vector<1x4x8x32xf32> to vector<2x4x8x32xf32>
    %149 = vector.shape_cast %148 : vector<2x4x8x32xf32> to vector<8x8x32xf32>
    %150 = arith.truncf %149 : vector<8x8x32xf32> to vector<8x8x32xbf16>
    %151 = arith.truncf %143 : vector<8x16x8xf32> to vector<8x16x8xbf16>
    "tpu.trace_start"() <{level = 10 : i32, message = "gtd,gde->gte"}> : () -> ()
    %cst_58 = arith.constant dense<0.000000e+00> : vector<8x16x32xf32>
    %152 = tpu.matmul %151, %150, %cst_58 {dimension_numbers = #tpu.dot_dimension_numbers<[2], [1], [1], [2], [0, 0, 0, 1, 1, 2], [0], [0]>} : vector<8x16x8xbf16>, vector<8x8x32xbf16>, vector<8x16x32xf32> -> vector<8x16x32xf32>
    "tpu.trace_stop"() : () -> ()
    %153 = vector.shape_cast %152 : vector<8x16x32xf32> to vector<2x4x16x32xf32>
    %cst_59 = arith.constant dense<0.000000e+00> : vector<2x16x32xf32>
    %154 = vector.multi_reduction <add>, %153, %cst_59 [1] : vector<2x4x16x32xf32> to vector<2x16x32xf32>
    %155 = arith.addf %95, %154 : vector<2x16x32xf32>
    %c1_60 = arith.constant 1 : index
    %c0_61 = arith.constant 0 : index
    %c0_62 = arith.constant 0 : index
    %156 = vector.load %arg5[%c1_60, %c0_61, %c0_62] : memref<2x1x32xf32, #tpu.memory_space<vmem>>, vector<1x1x32xf32>
    %157 = vector.shape_cast %156 : vector<1x1x32xf32> to vector<1x32xf32>
    %158 = arith.mulf %155, %155 : vector<2x16x32xf32>
    %cst_63 = arith.constant dense<0.000000e+00> : vector<2x16xf32>
    %159 = vector.multi_reduction <add>, %158, %cst_63 [2] : vector<2x16x32xf32> to vector<2x16xf32>
    %160 = vector.shape_cast %159 : vector<2x16xf32> to vector<2x16x1xf32>
    %cst_64 = arith.constant 3.200000e+01 : f32
    %161 = vector.broadcast %cst_64 : f32 to vector<2x16x1xf32>
    %162 = arith.divf %160, %161 : vector<2x16x1xf32>
    %cst_65 = arith.constant 9.99999997E-7 : f32
    %163 = vector.broadcast %cst_65 : f32 to vector<2x16x1xf32>
    %164 = arith.addf %162, %163 : vector<2x16x1xf32>
    %165 = math.rsqrt %164 : vector<2x16x1xf32>
    %166 = vector.broadcast %165 : vector<2x16x1xf32> to vector<2x16x32xf32>
    %167 = arith.mulf %155, %166 : vector<2x16x32xf32>
    %168 = vector.shape_cast %157 : vector<1x32xf32> to vector<1x1x32xf32>
    %169 = vector.broadcast %168 : vector<1x1x32xf32> to vector<2x16x32xf32>
    %170 = arith.mulf %167, %169 : vector<2x16x32xf32>
    %171 = vector.shape_cast %170 : vector<2x16x32xf32> to vector<32x32xf32>
    %172 = arith.truncf %171 : vector<32x32xf32> to vector<32x32xbf16>
    %c1_66 = arith.constant 1 : index
    %c0_67 = arith.constant 0 : index
    %c0_68 = arith.constant 0 : index
    %173 = vector.load %arg6[%c1_66, %c0_67, %c0_68] : memref<2x32x64xf32, #tpu.memory_space<vmem>>, vector<1x32x64xf32>
    %174 = vector.shape_cast %173 : vector<1x32x64xf32> to vector<32x64xf32>
    %175 = arith.truncf %174 : vector<32x64xf32> to vector<32x64xbf16>
    %cst_69 = arith.constant dense<0.000000e+00> : vector<32x64xf32>
    %176 = tpu.matmul %172, %175, %cst_69 {dimension_numbers = #tpu.dot_dimension_numbers<[1], [0], [0], [1], [0, 0, 1, 1], [], []>} : vector<32x32xbf16>, vector<32x64xbf16>, vector<32x64xf32> -> vector<32x64xf32>
    %cst_70 = arith.constant 0.000000e+00 : f32
    %177 = vector.broadcast %cst_70 : f32 to vector<32x64xf32>
    %178 = arith.maximumf %176, %177 : vector<32x64xf32>
    %179 = arith.truncf %178 : vector<32x64xf32> to vector<32x64xbf16>
    %c1_71 = arith.constant 1 : index
    %c0_72 = arith.constant 0 : index
    %c0_73 = arith.constant 0 : index
    %180 = vector.load %arg7[%c1_71, %c0_72, %c0_73] : memref<2x64x32xf32, #tpu.memory_space<vmem>>, vector<1x64x32xf32>
    %181 = vector.shape_cast %180 : vector<1x64x32xf32> to vector<64x32xf32>
    %182 = arith.truncf %181 : vector<64x32xf32> to vector<64x32xbf16>
    %cst_74 = arith.constant dense<0.000000e+00> : vector<32x32xf32>
    %183 = tpu.matmul %179, %182, %cst_74 {dimension_numbers = #tpu.dot_dimension_numbers<[1], [0], [0], [1], [0, 0, 1, 1], [], []>} : vector<32x64xbf16>, vector<64x32xbf16>, vector<32x32xf32> -> vector<32x32xf32>
    %184 = vector.shape_cast %183 : vector<32x32xf32> to vector<2x16x32xf32>
    %185 = arith.addf %155, %184 : vector<2x16x32xf32>
    %c0_75 = arith.constant 0 : index
    %c0_76 = arith.constant 0 : index
    %186 = vector.load %arg8[%c0_75, %c0_76] : memref<1x32xf32, #tpu.memory_space<vmem>>, vector<1x32xf32>
    %187 = arith.mulf %185, %185 : vector<2x16x32xf32>
    %cst_77 = arith.constant dense<0.000000e+00> : vector<2x16xf32>
    %188 = vector.multi_reduction <add>, %187, %cst_77 [2] : vector<2x16x32xf32> to vector<2x16xf32>
    %189 = vector.shape_cast %188 : vector<2x16xf32> to vector<2x16x1xf32>
    %cst_78 = arith.constant 3.200000e+01 : f32
    %190 = vector.broadcast %cst_78 : f32 to vector<2x16x1xf32>
    %191 = arith.divf %189, %190 : vector<2x16x1xf32>
    %cst_79 = arith.constant 9.99999997E-7 : f32
    %192 = vector.broadcast %cst_79 : f32 to vector<2x16x1xf32>
    %193 = arith.addf %191, %192 : vector<2x16x1xf32>
    %194 = math.rsqrt %193 : vector<2x16x1xf32>
    %195 = vector.broadcast %194 : vector<2x16x1xf32> to vector<2x16x32xf32>
    %196 = arith.mulf %185, %195 : vector<2x16x32xf32>
    %197 = vector.shape_cast %186 : vector<1x32xf32> to vector<1x1x32xf32>
    %198 = vector.broadcast %197 : vector<1x1x32xf32> to vector<2x16x32xf32>
    %199 = arith.mulf %196, %198 : vector<2x16x32xf32>
    %c0_80 = arith.constant 0 : index
    %c0_81 = arith.constant 0 : index
    %c0_82 = arith.constant 0 : index
    %200 = vector.load %arg9[%c0_80, %c0_81, %c0_82] : memref<2x16x32xf32, #tpu.memory_space<vmem>>, vector<2x16x32xf32>
    tpu.vector_store %arg9[%c0_80, %c0_81, %c0_82], %199 {strides = array<i32>} : memref<2x16x32xf32, #tpu.memory_space<vmem>>, vector<2x16x32xf32>,
    return
  }
}

</mosaic_0001>

<llo_original>
// kernel: prost_t5_forward.1
$region0: #{prost_t5_forward.1}
  #allocation0 [shape = 'u32[]', space=smem, size = 0x4, offset = 0x4, fixed_abs, tag = 'smem constant byte address 0x4 - core index']
  #allocation1 [shape = 'u32[144,128]{1,0:T(1,128)}', space=vmem, size = 0x12000, scoped, tag = 'internal scratch']
  %s0 = inlined_call_operand.vmem [shape: f32[2,16,32], index: 0, kind: input, shape index: {}]
  %s1 = inlined_call_operand.vmem [shape: f32[4,16,16], index: 1, kind: input, shape index: {}]
  %s2 = inlined_call_operand.vmem [shape: f32[2,1,32], index: 2, kind: input, shape index: {}]
  %s3 = inlined_call_operand.vmem [shape: f32[2,4,32,24], index: 3, kind: input, shape index: {}]
  %s4 = inlined_call_operand.vmem [shape: f32[2,4,8,32], index: 4, kind: input, shape index: {}]
  %s5 = inlined_call_operand.vmem [shape: f32[2,1,32], index: 5, kind: input, shape index: {}]
  %s6 = inlined_call_operand.vmem [shape: f32[2,32,64], index: 6, kind: input, shape index: {}]
  %s7 = inlined_call_operand.vmem [shape: f32[2,64,32], index: 7, kind: input, shape index: {}]
  %s8 = inlined_call_operand.vmem [shape: f32[1,32], index: 8, kind: input, shape index: {}]
  %s9 = inlined_call_operand.vmem [shape: f32[2,16,32], index: 9, kind: output, shape index: {}]
  %s10 = sld [smem:[#allocation0]]
  $region46: #{prost_t5_forward.1} parent=0
    _
  %s12 = ssub.s32 1, %s10
  %s13 = scalar_select 0, %s12, %s10
  // Predicated region
  $region2: #{prost_t5_forward.1} parent=0 // pred_check
    _
  $region3: #{prost_t5_forward.1} parent=0 // pred_check_branch
    %15 = sbr.rel (0) target = $region5
  $region4: #{prost_t5_forward.1} parent=0 // pred_region
    _
  $region5: #{prost_t5_forward.1} parent=0 // pred_fallthru
    _
  // Predicated region
  $region6: #{prost_t5_forward.1} parent=0 // pred_check
    _
  $region7: #{prost_t5_forward.1} parent=0 // pred_check_branch
    %17 = sbr.rel (0) target = $region9
  $region8: #{prost_t5_forward.1} parent=0 // pred_region
    _
  $region9: #{prost_t5_forward.1} parent=0 // pred_fallthru
    _
  // Predicated region
  $region10: #{prost_t5_forward.1} parent=0 // pred_check
    _
  $region11: #{prost_t5_forward.1} parent=0 // pred_check_branch
    %19 = sbr.rel (0) target = $region13
  $region12: #{prost_t5_forward.1} parent=0 // pred_region
    _
  $region13: #{prost_t5_forward.1} parent=0 // pred_fallthru
    _
  // Predicated region
  $region14: #{prost_t5_forward.1} parent=0 // pred_check
    _
  $region15: #{prost_t5_forward.1} parent=0 // pred_check_branch
    %21 = sbr.rel (0) target = $region17
  $region16: #{prost_t5_forward.1} parent=0 // pred_region
    _
  $region17: #{prost_t5_forward.1} parent=0 // pred_fallthru
    _
  // Predicated region
  $region18: #{prost_t5_forward.1} parent=0 // pred_check
    _
  $region19: #{prost_t5_forward.1} parent=0 // pred_check_branch
    %23 = sbr.rel (0) target = $region21
  $region20: #{prost_t5_forward.1} parent=0 // pred_region
    _
  $region21: #{prost_t5_forward.1} parent=0 // pred_fallthru
    _
  // Predicated region
  $region22: #{prost_t5_forward.1} parent=0 // pred_check
    _
  $region23: #{prost_t5_forward.1} parent=0 // pred_check_branch
    %25 = sbr.rel (0) target = $region25
  $region24: #{prost_t5_forward.1} parent=0 // pred_region
    _
  $region25: #{prost_t5_forward.1} parent=0 // pred_fallthru
    _
  // Predicated region
  $region26: #{prost_t5_forward.1} parent=0 // pred_check
    _
  $region27: #{prost_t5_forward.1} parent=0 // pred_check_branch
    %27 = sbr.rel (0) target = $region29
  $region28: #{prost_t5_forward.1} parent=0 // pred_region
    _
  $region29: #{prost_t5_forward.1} parent=0 // pred_fallthru
    _
  // Predicated region
  $region30: #{prost_t5_forward.1} parent=0 // pred_check
    _
  $region31: #{prost_t5_forward.1} parent=0 // pred_check_branch
    %29 = sbr.rel (0) target = $region33
  $region32: #{prost_t5_forward.1} parent=0 // pred_region
    _
  $region33: #{prost_t5_forward.1} parent=0 // pred_fallthru
    _
  // Predicated region
  $region34: #{prost_t5_forward.1} parent=0 // pred_check
    _
  $region35: #{prost_t5_forward.1} parent=0 // pred_check_branch
    %31 = sbr.rel (0) target = $region37
  $region36: #{prost_t5_forward.1} parent=0 // pred_region
    _
  $region37: #{prost_t5_forward.1} parent=0 // pred_fallthru
    _
  %v33 = vld [vmem:[%s0] sm:$0xff]
  %v34 = vld [vmem:[%s0 + $0x8] sm:$0xff]
  %v35 = vld [vmem:[%s0 + $0x10] sm:$0xff]
  %v36 = vld [vmem:[%s0 + $0x18] sm:$0xff]
  %v37 = vld [vmem:[%s1] sm:$0xff]
  %v38 = vld [vmem:[%s1 + $0x8] sm:$0xff]
  %v39 = vld [vmem:[%s1 + $0x10] sm:$0xff]
  %v40 = vld [vmem:[%s1 + $0x18] sm:$0xff]
  %v41 = vld [vmem:[%s1 + $0x20] sm:$0xff]
  %v42 = vld [vmem:[%s1 + $0x28] sm:$0xff]
  %v43 = vld [vmem:[%s1 + $0x30] sm:$0xff]
  %v44 = vld [vmem:[%s1 + $0x38] sm:$0xff]
  %v45 = vld [vmem:[%s2] sm:$0x1]
  %v46 = vmul.f32 %v33, %v33
  %v47 = vmul.f32 %v34, %v34
  %v48 = vmul.f32 %v35, %v35
  %v49 = vmul.f32 %v36, %v36
  %vm50 = vcmask 261120
  %v51 = vsel %vm50, %v46, 0.0
  %52 = vadd.xlane.f32.xlu0 %v51
  %v53 = vpop.xlane.xlu0 %52
  %v54 = vsel %vm50, %v47, 0.0
  %55 = vadd.xlane.f32.xlu0 %v54
  %v56 = vpop.xlane.xlu0 %55
  %v57 = vsel %vm50, %v48, 0.0
  %58 = vadd.xlane.f32.xlu0 %v57
  %v59 = vpop.xlane.xlu0 %58
  %v60 = vsel %vm50, %v49, 0.0
  %61 = vadd.xlane.f32.xlu0 %v60
  %v62 = vpop.xlane.xlu0 %61
  %v63 = vrcp.pop 32.0
  %v64 = vmul.f32 %v53, %v63
  %v65 = vmul.f32 %v56, %v63
  %v66 = vmul.f32 %v59, %v63
  %v67 = vmul.f32 %v62, %v63
  %v68 = vadd.f32 %v64, 1e-06
  %v69 = vadd.f32 %v65, 1e-06
  %v70 = vadd.f32 %v66, 1e-06
  %v71 = vadd.f32 %v67, 1e-06
  %v72 = vrsqrt.pop %v68
  %v73 = vrsqrt.pop %v69
  %v74 = vrsqrt.pop %v70
  %v75 = vrsqrt.pop %v71
  %v76 = vmul.f32 %v33, %v72
  %v77 = vmul.f32 %v34, %v73
  %v78 = vmul.f32 %v35, %v74
  %v79 = vmul.f32 %v36, %v75
  %v81 = vlaneseq
  %v82 = vshrl.u32 %v81, 7
  %v83 = vsub.s32 0, %v82
  %v84 = vrot.slane %v45, %v83
  %v86 = vmul.f32 %v76, %v84
  %v87 = vmul.f32 %v77, %v84
  %v88 = vmul.f32 %v78, %v84
  %v89 = vmul.f32 %v79, %v84
  %v90 = vpack.c.bf16 %v87, %v86
  %v91 = vpack.c.bf16 %v89, %v88
  %v92 = vld [vmem:[%s3] sm:$0xff]
  %v93 = vld [vmem:[%s3 + $0x8] sm:$0xff]
  %v94 = vld [vmem:[%s3 + $0x10] sm:$0xff]
  %v95 = vld [vmem:[%s3 + $0x18] sm:$0xff]
  %v96 = vld [vmem:[%s3 + $0x20] sm:$0xff]
  %v97 = vld [vmem:[%s3 + $0x28] sm:$0xff]
  %v98 = vld [vmem:[%s3 + $0x30] sm:$0xff]
  %v99 = vld [vmem:[%s3 + $0x38] sm:$0xff]
  %v100 = vld [vmem:[%s3 + $0x40] sm:$0xff]
  %v101 = vld [vmem:[%s3 + $0x48] sm:$0xff]
  %v102 = vld [vmem:[%s3 + $0x50] sm:$0xff]
  %v103 = vld [vmem:[%s3 + $0x58] sm:$0xff]
  %v104 = vld [vmem:[%s3 + $0x60] sm:$0xff]
  %v105 = vld [vmem:[%s3 + $0x68] sm:$0xff]
  %v106 = vld [vmem:[%s3 + $0x70] sm:$0xff]
  %v107 = vld [vmem:[%s3 + $0x78] sm:$0xff]
  %v108 = vpack.c.bf16 %v93, %v92
  %v109 = vpack.c.bf16 %v95, %v94
  %v110 = vpack.c.bf16 %v97, %v96
  %v111 = vpack.c.bf16 %v99, %v98
  %v112 = vpack.c.bf16 %v101, %v100
  %v113 = vpack.c.bf16 %v103, %v102
  %v114 = vpack.c.bf16 %v105, %v104
  %v115 = vpack.c.bf16 %v107, %v106
  %v117 = vsel %vm50, %v90, 0
  %119 = vmatprep.subr.bf16.mxu0 0
  %120 = vmatpush1.bf16.msra.mxu0 %v108
  %121 = vmatprep.subr.bf16.mxu0 0
  %122 = vmatpush1.bf16.msra.mxu0 %v109
  %123 = vmatprep.subr.bf16.mxu0 0
  %124 = vmatpush1.bf16.msra.mxu0 0
  %125 = vmatprep.subr.bf16.mxu0 0
  %126 = vmatpush1.bf16.msra.mxu0 0
  %127 = vmatprep.subr.bf16.mxu0 0
  %128 = vmatpush1.bf16.msra.mxu0 0
  %129 = vmatprep.subr.bf16.mxu0 0
  %130 = vmatpush1.bf16.msra.mxu0 0
  %131 = vmatprep.subr.bf16.mxu0 0
  %132 = vmatpush1.bf16.msra.mxu0 0
  %133 = vmatprep.subr.bf16.mxu0 0
  %134 = vmatpush1.bf16.msra.mxu0 0
  %135 = vmatprep.subr.bf16.mxu0 0
  %136 = vmatpush1.bf16.msra.mxu0 0
  %137 = vmatprep.subr.bf16.mxu0 0
  %138 = vmatpush1.bf16.msra.mxu0 0
  %139 = vmatprep.subr.bf16.mxu0 0
  %140 = vmatpush1.bf16.msra.mxu0 0
  %141 = vmatprep.subr.bf16.mxu0 0
  %142 = vmatpush1.bf16.msra.mxu0 0
  %143 = vmatprep.subr.bf16.mxu0 0
  %144 = vmatpush1.bf16.msra.mxu0 0
  %145 = vmatprep.subr.bf16.mxu0 0
  %146 = vmatpush1.bf16.msra.mxu0 0
  %147 = vmatprep.subr.bf16.mxu0 0
  %148 = vmatpush1.bf16.msra.mxu0 0
  %149 = vmatprep.subr.bf16.mxu0 0
  %150 = vmatpush1.bf16.msra.mxu0 0
  %151 = vmatprep.mubr.bf16.mxu0 0
  %152 = vmatmul.mubr.bf16.gmra.mrb[0].mxu0 %v117
  %v153 = vpop.f32.mrb[0].mxu0
  %v154 = vadd.f32 0.0, %v153
  %v155 = vpop.f32.mrb[0].mxu0
  %v156 = vpop.f32.mrb[0].mxu0
  %v157 = vadd.f32 0.0, %v156
  %v158 = vpop.f32.mrb[0].mxu0
  %159 = vdwg.mxu0
  %160 = vmatprep.subr.bf16.mxu0 0
  %161 = vmatpush1.bf16.msra.mxu0 %v110
  %162 = vmatprep.subr.bf16.mxu0 0
  %163 = vmatpush1.bf16.msra.mxu0 %v111
  %164 = vmatprep.subr.bf16.mxu0 0
  %165 = vmatpush1.bf16.msra.mxu0 0
  %166 = vmatprep.subr.bf16.mxu0 0
  %167 = vmatpush1.bf16.msra.mxu0 0
  %168 = vmatprep.subr.bf16.mxu0 0
  %169 = vmatpush1.bf16.msra.mxu0 0
  %170 = vmatprep.subr.bf16.mxu0 0
  %171 = vmatpush1.bf16.msra.mxu0 0
  %172 = vmatprep.subr.bf16.mxu0 0
  %173 = vmatpush1.bf16.msra.mxu0 0
  %174 = vmatprep.subr.bf16.mxu0 0
  %175 = vmatpush1.bf16.msra.mxu0 0
  %176 = vmatprep.subr.bf16.mxu0 0
  %177 = vmatpush1.bf16.msra.mxu0 0
  %178 = vmatprep.subr.bf16.mxu0 0
  %179 = vmatpush1.bf16.msra.mxu0 0
  %180 = vmatprep.subr.bf16.mxu0 0
  %181 = vmatpush1.bf16.msra.mxu0 0
  %182 = vmatprep.subr.bf16.mxu0 0
  %183 = vmatpush1.bf16.msra.mxu0 0
  %184 = vmatprep.subr.bf16.mxu0 0
  %185 = vmatpush1.bf16.msra.mxu0 0
  %186 = vmatprep.subr.bf16.mxu0 0
  %187 = vmatpush1.bf16.msra.mxu0 0
  %188 = vmatprep.subr.bf16.mxu0 0
  %189 = vmatpush1.bf16.msra.mxu0 0
  %190 = vmatprep.subr.bf16.mxu0 0
  %191 = vmatpush1.bf16.msra.mxu0 0
  %192 = vmatprep.mubr.bf16.mxu0 0
  %193 = vmatmul.mubr.bf16.gmra.mrb[0].mxu0 %v117
  %v194 = vpop.f32.mrb[0].mxu0
  %v195 = vadd.f32 0.0, %v194
  %v196 = vpop.f32.mrb[0].mxu0
  %v197 = vpop.f32.mrb[0].mxu0
  %v198 = vadd.f32 0.0, %v197
  %v199 = vpop.f32.mrb[0].mxu0
  %200 = vdwg.mxu0
  %201 = vmatprep.subr.bf16.mxu0 0
  %202 = vmatpush1.bf16.msra.mxu0 %v112
  %203 = vmatprep.subr.bf16.mxu0 0
  %204 = vmatpush1.bf16.msra.mxu0 %v113
  %205 = vmatprep.subr.bf16.mxu0 0
  %206 = vmatpush1.bf16.msra.mxu0 0
  %207 = vmatprep.subr.bf16.mxu0 0
  %208 = vmatpush1.bf16.msra.mxu0 0
  %209 = vmatprep.subr.bf16.mxu0 0
  %210 = vmatpush1.bf16.msra.mxu0 0
  %211 = vmatprep.subr.bf16.mxu0 0
  %212 = vmatpush1.bf16.msra.mxu0 0
  %213 = vmatprep.subr.bf16.mxu0 0
  %214 = vmatpush1.bf16.msra.mxu0 0
  %215 = vmatprep.subr.bf16.mxu0 0
  %216 = vmatpush1.bf16.msra.mxu0 0
  %217 = vmatprep.subr.bf16.mxu0 0
  %218 = vmatpush1.bf16.msra.mxu0 0
  %219 = vmatprep.subr.bf16.mxu0 0
  %220 = vmatpush1.bf16.msra.mxu0 0
  %221 = vmatprep.subr.bf16.mxu0 0
  %222 = vmatpush1.bf16.msra.mxu0 0
  %223 = vmatprep.subr.bf16.mxu0 0
  %224 = vmatpush1.bf16.msra.mxu0 0
  %225 = vmatprep.subr.bf16.mxu0 0
  %226 = vmatpush1.bf16.msra.mxu0 0
  %227 = vmatprep.subr.bf16.mxu0 0
  %228 = vmatpush1.bf16.msra.mxu0 0
  %229 = vmatprep.subr.bf16.mxu0 0
  %230 = vmatpush1.bf16.msra.mxu0 0
  %231 = vmatprep.subr.bf16.mxu0 0
  %232 = vmatpush1.bf16.msra.mxu0 0
  %233 = vmatprep.mubr.bf16.mxu0 0
  %234 = vmatmul.mubr.bf16.gmra.mrb[0].mxu0 %v117
  %v235 = vpop.f32.mrb[0].mxu0
  %v236 = vadd.f32 0.0, %v235
  %v237 = vpop.f32.mrb[0].mxu0
  %v238 = vpop.f32.mrb[0].mxu0
  %v239 = vadd.f32 0.0, %v238
  %v240 = vpop.f32.mrb[0].mxu0
  %241 = vdwg.mxu0
  %242 = vmatprep.subr.bf16.mxu0 0
  %243 = vmatpush1.bf16.msra.mxu0 %v114
  %244 = vmatprep.subr.bf16.mxu0 0
  %245 = vmatpush1.bf16.msra.mxu0 %v115
  %246 = vmatprep.subr.bf16.mxu0 0
  %247 = vmatpush1.bf16.msra.mxu0 0
  %248 = vmatprep.subr.bf16.mxu0 0
  %249 = vmatpush1.bf16.msra.mxu0 0
  %250 = vmatprep.subr.bf16.mxu0 0
  %251 = vmatpush1.bf16.msra.mxu0 0
  %252 = vmatprep.subr.bf16.mxu0 0
  %253 = vmatpush1.bf16.msra.mxu0 0
  %254 = vmatprep.subr.bf16.mxu0 0
  %255 = vmatpush1.bf16.msra.mxu0 0
  %256 = vmatprep.subr.bf16.mxu0 0
  %257 = vmatpush1.bf16.msra.mxu0 0
  %258 = vmatprep.subr.bf16.mxu0 0
  %259 = vmatpush1.bf16.msra.mxu0 0
  %260 = vmatprep.subr.bf16.mxu0 0
  %261 = vmatpush1.bf16.msra.mxu0 0
  %262 = vmatprep.subr.bf16.mxu0 0
  %263 = vmatpush1.bf16.msra.mxu0 0
  %264 = vmatprep.subr.bf16.mxu0 0
  %265 = vmatpush1.bf16.msra.mxu0 0
  %266 = vmatprep.subr.bf16.mxu0 0
  %267 = vmatpush1.bf16.msra.mxu0 0
  %268 = vmatprep.subr.bf16.mxu0 0
  %269 = vmatpush1.bf16.msra.mxu0 0
  %270 = vmatprep.subr.bf16.mxu0 0
  %271 = vmatpush1.bf16.msra.mxu0 0
  %272 = vmatprep.subr.bf16.mxu0 0
  %273 = vmatpush1.bf16.msra.mxu0 0
  %274 = vmatprep.mubr.bf16.mxu0 0
  %275 = vmatmul.mubr.bf16.gmra.mrb[0].mxu0 %v117
  %v276 = vpop.f32.mrb[0].mxu0
  %v277 = vadd.f32 0.0, %v276
  %v278 = vpop.f32.mrb[0].mxu0
  %v279 = vpop.f32.mrb[0].mxu0
  %v280 = vadd.f32 0.0, %v279
  %v281 = vpop.f32.mrb[0].mxu0
  %282 = vdwg.mxu0
  %v284 = vsel %vm50, %v91, 0
  %286 = vmatprep.subr.bf16.mxu0 0
  %287 = vmatpush1.bf16.msra.mxu0 %v108
  %288 = vmatprep.subr.bf16.mxu0 0
  %289 = vmatpush1.bf16.msra.mxu0 %v109
  %290 = vmatprep.subr.bf16.mxu0 0
  %291 = vmatpush1.bf16.msra.mxu0 0
  %292 = vmatprep.subr.bf16.mxu0 0
  %293 = vmatpush1.bf16.msra.mxu0 0
  %294 = vmatprep.subr.bf16.mxu0 0
  %295 = vmatpush1.bf16.msra.mxu0 0
  %296 = vmatprep.subr.bf16.mxu0 0
  %297 = vmatpush1.bf16.msra.mxu0 0
  %298 = vmatprep.subr.bf16.mxu0 0
  %299 = vmatpush1.bf16.msra.mxu0 0
  %300 = vmatprep.subr.bf16.mxu0 0
  %301 = vmatpush1.bf16.msra.mxu0 0
  %302 = vmatprep.subr.bf16.mxu0 0
  %303 = vmatpush1.bf16.msra.mxu0 0
  %304 = vmatprep.subr.bf16.mxu0 0
  %305 = vmatpush1.bf16.msra.mxu0 0
  %306 = vmatprep.subr.bf16.mxu0 0
  %307 = vmatpush1.bf16.msra.mxu0 0
  %308 = vmatprep.subr.bf16.mxu0 0
  %309 = vmatpush1.bf16.msra.mxu0 0
  %310 = vmatprep.subr.bf16.mxu0 0
  %311 = vmatpush1.bf16.msra.mxu0 0
  %312 = vmatprep.subr.bf16.mxu0 0
  %313 = vmatpush1.bf16.msra.mxu0 0
  %314 = vmatprep.subr.bf16.mxu0 0
  %315 = vmatpush1.bf16.msra.mxu0 0
  %316 = vmatprep.subr.bf16.mxu0 0
  %317 = vmatpush1.bf16.msra.mxu0 0
  %318 = vmatprep.mubr.bf16.mxu0 0
  %319 = vmatmul.mubr.bf16.gmra.mrb[0].mxu0 %v284
  %v320 = vpop.f32.mrb[0].mxu0
  %v321 = vadd.f32 0.0, %v320
  %v322 = vpop.f32.mrb[0].mxu0
  %v323 = vpop.f32.mrb[0].mxu0
  %v324 = vadd.f32 0.0, %v323
  %v325 = vpop.f32.mrb[0].mxu0
  %326 = vdwg.mxu0
  %327 = vmatprep.subr.bf16.mxu0 0
  %328 = vmatpush1.bf16.msra.mxu0 %v110
  %329 = vmatprep.subr.bf16.mxu0 0
  %330 = vmatpush1.bf16.msra.mxu0 %v111
  %331 = vmatprep.subr.bf16.mxu0 0
  %332 = vmatpush1.bf16.msra.mxu0 0
  %333 = vmatprep.subr.bf16.mxu0 0
  %334 = vmatpush1.bf16.msra.mxu0 0
  %335 = vmatprep.subr.bf16.mxu0 0
  %336 = vmatpush1.bf16.msra.mxu0 0
  %337 = vmatprep.subr.bf16.mxu0 0
  %338 = vmatpush1.bf16.msra.mxu0 0
  %339 = vmatprep.subr.bf16.mxu0 0
  %340 = vmatpush1.bf16.msra.mxu0 0
  %341 = vmatprep.subr.bf16.mxu0 0
  %342 = vmatpush1.bf16.msra.mxu0 0
  %343 = vmatprep.subr.bf16.mxu0 0
  %344 = vmatpush1.bf16.msra.mxu0 0
  %345 = vmatprep.subr.bf16.mxu0 0
  %346 = vmatpush1.bf16.msra.mxu0 0
  %347 = vmatprep.subr.bf16.mxu0 0
  %348 = vmatpush1.bf16.msra.mxu0 0
  %349 = vmatprep.subr.bf16.mxu0 0
  %350 = vmatpush1.bf16.msra.mxu0 0
  %351 = vmatprep.subr.bf16.mxu0 0
  %352 = vmatpush1.bf16.msra.mxu0 0
  %353 = vmatprep.subr.bf16.mxu0 0
  %354 = vmatpush1.bf16.msra.mxu0 0
  %355 = vmatprep.subr.bf16.mxu0 0
  %356 = vmatpush1.bf16.msra.mxu0 0
  %357 = vmatprep.subr.bf16.mxu0 0
  %358 = vmatpush1.bf16.msra.mxu0 0
  %359 = vmatprep.mubr.bf16.mxu0 0
  %360 = vmatmul.mubr.bf16.gmra.mrb[0].mxu0 %v284
  %v361 = vpop.f32.mrb[0].mxu0
  %v362 = vadd.f32 0.0, %v361
  %v363 = vpop.f32.mrb[0].mxu0
  %v364 = vpop.f32.mrb[0].mxu0
  %v365 = vadd.f32 0.0, %v364
  %v366 = vpop.f32.mrb[0].mxu0
  %367 = vdwg.mxu0
  %368 = vmatprep.subr.bf16.mxu0 0
  %369 = vmatpush1.bf16.msra.mxu0 %v112
  %370 = vmatprep.subr.bf16.mxu0 0
  %371 = vmatpush1.bf16.msra.mxu0 %v113
  %372 = vmatprep.subr.bf16.mxu0 0
  %373 = vmatpush1.bf16.msra.mxu0 0
  %374 = vmatprep.subr.bf16.mxu0 0
  %375 = vmatpush1.bf16.msra.mxu0 0
  %376 = vmatprep.subr.bf16.mxu0 0
  %377 = vmatpush1.bf16.msra.mxu0 0
  %378 = vmatprep.subr.bf16.mxu0 0
  %379 = vmatpush1.bf16.msra.mxu0 0
  %380 = vmatprep.subr.bf16.mxu0 0
  %381 = vmatpush1.bf16.msra.mxu0 0
  %382 = vmatprep.subr.bf16.mxu0 0
  %383 = vmatpush1.bf16.msra.mxu0 0
  %384 = vmatprep.subr.bf16.mxu0 0
  %385 = vmatpush1.bf16.msra.mxu0 0
  %386 = vmatprep.subr.bf16.mxu0 0
  %387 = vmatpush1.bf16.msra.mxu0 0
  %388 = vmatprep.subr.bf16.mxu0 0
  %389 = vmatpush1.bf16.msra.mxu0 0
  %390 = vmatprep.subr.bf16.mxu0 0
  %391 = vmatpush1.bf16.msra.mxu0 0
  %392 = vmatprep.subr.bf16.mxu0 0
  %393 = vmatpush1.bf16.msra.mxu0 0
  %394 = vmatprep.subr.bf16.mxu0 0
  %395 = vmatpush1.bf16.msra.mxu0 0
  %396 = vmatprep.subr.bf16.mxu0 0
  %397 = vmatpush1.bf16.msra.mxu0 0
  %398 = vmatprep.subr.bf16.mxu0 0
  %399 = vmatpush1.bf16.msra.mxu0 0
  %400 = vmatprep.mubr.bf16.mxu0 0
  %401 = vmatmul.mubr.bf16.gmra.mrb[0].mxu0 %v284
  %v402 = vpop.f32.mrb[0].mxu0
  %v403 = vadd.f32 0.0, %v402
  %v404 = vpop.f32.mrb[0].mxu0
  %v405 = vpop.f32.mrb[0].mxu0
  %v406 = vadd.f32 0.0, %v405
  %v407 = vpop.f32.mrb[0].mxu0
  %408 = vdwg.mxu0
  %409 = vmatprep.subr.bf16.mxu0 0
  %410 = vmatpush1.bf16.msra.mxu0 %v114
  %411 = vmatprep.subr.bf16.mxu0 0
  %412 = vmatpush1.bf16.msra.mxu0 %v115
  %413 = vmatprep.subr.bf16.mxu0 0
  %414 = vmatpush1.bf16.msra.mxu0 0
  %415 = vmatprep.subr.bf16.mxu0 0
  %416 = vmatpush1.bf16.msra.mxu0 0
  %417 = vmatprep.subr.bf16.mxu0 0
  %418 = vmatpush1.bf16.msra.mxu0 0
  %419 = vmatprep.subr.bf16.mxu0 0
  %420 = vmatpush1.bf16.msra.mxu0 0
  %421 = vmatprep.subr.bf16.mxu0 0
  %422 = vmatpush1.bf16.msra.mxu0 0
  %423 = vmatprep.subr.bf16.mxu0 0
  %424 = vmatpush1.bf16.msra.mxu0 0
  %425 = vmatprep.subr.bf16.mxu0 0
  %426 = vmatpush1.bf16.msra.mxu0 0
  %427 = vmatprep.subr.bf16.mxu0 0
  %428 = vmatpush1.bf16.msra.mxu0 0
  %429 = vmatprep.subr.bf16.mxu0 0
  %430 = vmatpush1.bf16.msra.mxu0 0
  %431 = vmatprep.subr.bf16.mxu0 0
  %432 = vmatpush1.bf16.msra.mxu0 0
  %433 = vmatprep.subr.bf16.mxu0 0
  %434 = vmatpush1.bf16.msra.mxu0 0
  %435 = vmatprep.subr.bf16.mxu0 0
  %436 = vmatpush1.bf16.msra.mxu0 0
  %437 = vmatprep.subr.bf16.mxu0 0
  %438 = vmatpush1.bf16.msra.mxu0 0
  %439 = vmatprep.subr.bf16.mxu0 0
  %440 = vmatpush1.bf16.msra.mxu0 0
  %441 = vmatprep.mubr.bf16.mxu0 0
  %442 = vmatmul.mubr.bf16.gmra.mrb[0].mxu0 %v284
  %v443 = vpop.f32.mrb[0].mxu0
  %v444 = vadd.f32 0.0, %v443
  %v445 = vpop.f32.mrb[0].mxu0
  %v446 = vpop.f32.mrb[0].mxu0
  %v447 = vadd.f32 0.0, %v446
  %v448 = vpop.f32.mrb[0].mxu0
  %449 = vdwg.mxu0
  %v450 = vpack.c.bf16 %v157, %v154
  %v451 = vpack.c.bf16 %v198, %v195
  %v452 = vpack.c.bf16 %v239, %v236
  %v453 = vpack.c.bf16 %v280, %v277
  %v454 = vpack.c.bf16 %v324, %v321
  %v455 = vpack.c.bf16 %v365, %v362
  %v456 = vpack.c.bf16 %v406, %v403
  %v457 = vpack.c.bf16 %v447, %v444
  %459 = vrot.lane.b32.xlu0 %v450, 120
  %v460 = vpop.permute.xlu0 %459
  %vm461 = vcmask 64512
  %v463 = vsel %vm461, %v450, 0
  %v466 = vsel %vm461, %v460, 0
  %468 = vmatprep.subr.bf16.mxu0 0
  %469 = vmatpush1.bf16.xpose.msra.mxu0 %v466
  %470 = vmatprep.subr.bf16.mxu0 0
  %471 = vmatpush1.bf16.xpose.msra.mxu0 0
  %472 = vmatprep.subr.bf16.mxu0 0
  %473 = vmatpush1.bf16.xpose.msra.mxu0 0
  %474 = vmatprep.subr.bf16.mxu0 0
  %475 = vmatpush1.bf16.xpose.msra.mxu0 0
  %476 = vmatprep.subr.bf16.mxu0 0
  %477 = vmatpush1.bf16.xpose.msra.mxu0 0
  %478 = vmatprep.subr.bf16.mxu0 0
  %479 = vmatpush1.bf16.xpose.msra.mxu0 0
  %480 = vmatprep.subr.bf16.mxu0 0
  %481 = vmatpush1.bf16.xpose.msra.mxu0 0
  %482 = vmatprep.subr.bf16.mxu0 0
  %483 = vmatpush1.bf16.xpose.msra.mxu0 0
  %484 = vmatprep.subr.bf16.mxu0 0
  %485 = vmatpush1.bf16.xpose.msra.mxu0 0
  %486 = vmatprep.subr.bf16.mxu0 0
  %487 = vmatpush1.bf16.xpose.msra.mxu0 0
  %488 = vmatprep.subr.bf16.mxu0 0
  %489 = vmatpush1.bf16.xpose.msra.mxu0 0
  %490 = vmatprep.subr.bf16.mxu0 0
  %491 = vmatpush1.bf16.xpose.msra.mxu0 0
  %492 = vmatprep.subr.bf16.mxu0 0
  %493 = vmatpush1.bf16.xpose.msra.mxu0 0
  %494 = vmatprep.subr.bf16.mxu0 0
  %495 = vmatpush1.bf16.xpose.msra.mxu0 0
  %496 = vmatprep.subr.bf16.mxu0 0
  %497 = vmatpush1.bf16.xpose.msra.mxu0 0
  %498 = vmatprep.subr.bf16.mxu0 0
  %499 = vmatpush1.bf16.xpose.msra.mxu0 0
  %500 = vmatprep.mubr.bf16.mxu0 0
  %501 = vmatmul.mubr.bf16.gmra.mrb[0].mxu0 %v463
  %v502 = vpop.f32.mrb[0].mxu0
  %v503 = vadd.f32 %v37, %v502
  %v504 = vpop.f32.mrb[0].mxu0
  %v505 = vpop.f32.mrb[0].mxu0
  %v506 = vadd.f32 %v38, %v505
  %v507 = vpop.f32.mrb[0].mxu0
  %508 = vdwg.mxu0
  %510 = vrot.lane.b32.xlu0 %v451, 120
  %v511 = vpop.permute.xlu0 %510
  %v513 = vsel %vm461, %v451, 0
  %v516 = vsel %vm461, %v511, 0
  %518 = vmatprep.subr.bf16.mxu0 0
  %519 = vmatpush1.bf16.xpose.msra.mxu0 %v516
  %520 = vmatprep.subr.bf16.mxu0 0
  %521 = vmatpush1.bf16.xpose.msra.mxu0 0
  %522 = vmatprep.subr.bf16.mxu0 0
  %523 = vmatpush1.bf16.xpose.msra.mxu0 0
  %524 = vmatprep.subr.bf16.mxu0 0
  %525 = vmatpush1.bf16.xpose.msra.mxu0 0
  %526 = vmatprep.subr.bf16.mxu0 0
  %527 = vmatpush1.bf16.xpose.msra.mxu0 0
  %528 = vmatprep.subr.bf16.mxu0 0
  %529 = vmatpush1.bf16.xpose.msra.mxu0 0
  %530 = vmatprep.subr.bf16.mxu0 0
  %531 = vmatpush1.bf16.xpose.msra.mxu0 0
  %532 = vmatprep.subr.bf16.mxu0 0
  %533 = vmatpush1.bf16.xpose.msra.mxu0 0
  %534 = vmatprep.subr.bf16.mxu0 0
  %535 = vmatpush1.bf16.xpose.msra.mxu0 0
  %536 = vmatprep.subr.bf16.mxu0 0
  %537 = vmatpush1.bf16.xpose.msra.mxu0 0
  %538 = vmatprep.subr.bf16.mxu0 0
  %539 = vmatpush1.bf16.xpose.msra.mxu0 0
  %540 = vmatprep.subr.bf16.mxu0 0
  %541 = vmatpush1.bf16.xpose.msra.mxu0 0
  %542 = vmatprep.subr.bf16.mxu0 0
  %543 = vmatpush1.bf16.xpose.msra.mxu0 0
  %544 = vmatprep.subr.bf16.mxu0 0
  %545 = vmatpush1.bf16.xpose.msra.mxu0 0
  %546 = vmatprep.subr.bf16.mxu0 0
  %547 = vmatpush1.bf16.xpose.msra.mxu0 0
  %548 = vmatprep.subr.bf16.mxu0 0
  %549 = vmatpush1.bf16.xpose.msra.mxu0 0
  %550 = vmatprep.mubr.bf16.mxu0 0
  %551 = vmatmul.mubr.bf16.gmra.mrb[0].mxu0 %v513
  %v552 = vpop.f32.mrb[0].mxu0
  %v553 = vadd.f32 %v39, %v552
  %v554 = vpop.f32.mrb[0].mxu0
  %v555 = vpop.f32.mrb[0].mxu0
  %v556 = vadd.f32 %v40, %v555
  %v557 = vpop.f32.mrb[0].mxu0
  %558 = vdwg.mxu0
  %560 = vrot.lane.b32.xlu0 %v452, 120
  %v561 = vpop.permute.xlu0 %560
  %v563 = vsel %vm461, %v452, 0
  %v566 = vsel %vm461, %v561, 0
  %568 = vmatprep.subr.bf16.mxu0 0
  %569 = vmatpush1.bf16.xpose.msra.mxu0 %v566
  %570 = vmatprep.subr.bf16.mxu0 0
  %571 = vmatpush1.bf16.xpose.msra.mxu0 0
  %572 = vmatprep.subr.bf16.mxu0 0
  %573 = vmatpush1.bf16.xpose.msra.mxu0 0
  %574 = vmatprep.subr.bf16.mxu0 0
  %575 = vmatpush1.bf16.xpose.msra.mxu0 0
  %576 = vmatprep.subr.bf16.mxu0 0
  %577 = vmatpush1.bf16.xpose.msra.mxu0 0
  %578 = vmatprep.subr.bf16.mxu0 0
  %579 = vmatpush1.bf16.xpose.msra.mxu0 0
  %580 = vmatprep.subr.bf16.mxu0 0
  %581 = vmatpush1.bf16.xpose.msra.mxu0 0
  %582 = vmatprep.subr.bf16.mxu0 0
  %583 = vmatpush1.bf16.xpose.msra.mxu0 0
  %584 = vmatprep.subr.bf16.mxu0 0
  %585 = vmatpush1.bf16.xpose.msra.mxu0 0
  %586 = vmatprep.subr.bf16.mxu0 0
  %587 = vmatpush1.bf16.xpose.msra.mxu0 0
  %588 = vmatprep.subr.bf16.mxu0 0
  %589 = vmatpush1.bf16.xpose.msra.mxu0 0
  %590 = vmatprep.subr.bf16.mxu0 0
  %591 = vmatpush1.bf16.xpose.msra.mxu0 0
  %592 = vmatprep.subr.bf16.mxu0 0
  %593 = vmatpush1.bf16.xpose.msra.mxu0 0
  %594 = vmatprep.subr.bf16.mxu0 0
  %595 = vmatpush1.bf16.xpose.msra.mxu0 0
  %596 = vmatprep.subr.bf16.mxu0 0
  %597 = vmatpush1.bf16.xpose.msra.mxu0 0
  %598 = vmatprep.subr.bf16.mxu0 0
  %599 = vmatpush1.bf16.xpose.msra.mxu0 0
  %600 = vmatprep.mubr.bf16.mxu0 0
  %601 = vmatmul.mubr.bf16.gmra.mrb[0].mxu0 %v563
  %v602 = vpop.f32.mrb[0].mxu0
  %v603 = vadd.f32 %v41, %v602
  %v604 = vpop.f32.mrb[0].mxu0
  %v605 = vpop.f32.mrb[0].mxu0
  %v606 = vadd.f32 %v42, %v605
  %v607 = vpop.f32.mrb[0].mxu0
  %608 = vdwg.mxu0
  %610 = vrot.lane.b32.xlu0 %v453, 120
  %v611 = vpop.permute.xlu0 %610
  %v613 = vsel %vm461, %v453, 0
  %v616 = vsel %vm461, %v611, 0
  %618 = vmatprep.subr.bf16.mxu0 0
  %619 = vmatpush1.bf16.xpose.msra.mxu0 %v616
  %620 = vmatprep.subr.bf16.mxu0 0
  %621 = vmatpush1.bf16.xpose.msra.mxu0 0
  %622 = vmatprep.subr.bf16.mxu0 0
  %623 = vmatpush1.bf16.xpose.msra.mxu0 0
  %624 = vmatprep.subr.bf16.mxu0 0
  %625 = vmatpush1.bf16.xpose.msra.mxu0 0
  %626 = vmatprep.subr.bf16.mxu0 0
  %627 = vmatpush1.bf16.xpose.msra.mxu0 0
  %628 = vmatprep.subr.bf16.mxu0 0
  %629 = vmatpush1.bf16.xpose.msra.mxu0 0
  %630 = vmatprep.subr.bf16.mxu0 0
  %631 = vmatpush1.bf16.xpose.msra.mxu0 0
  %632 = vmatprep.subr.bf16.mxu0 0
  %633 = vmatpush1.bf16.xpose.msra.mxu0 0
  %634 = vmatprep.subr.bf16.mxu0 0
  %635 = vmatpush1.bf16.xpose.msra.mxu0 0
  %636 = vmatprep.subr.bf16.mxu0 0
  %637 = vmatpush1.bf16.xpose.msra.mxu0 0
  %638 = vmatprep.subr.bf16.mxu0 0
  %639 = vmatpush1.bf16.xpose.msra.mxu0 0
  %640 = vmatprep.subr.bf16.mxu0 0
  %641 = vmatpush1.bf16.xpose.msra.mxu0 0
  %642 = vmatprep.subr.bf16.mxu0 0
  %643 = vmatpush1.bf16.xpose.msra.mxu0 0
  %644 = vmatprep.subr.bf16.mxu0 0
  %645 = vmatpush1.bf16.xpose.msra.mxu0 0
  %646 = vmatprep.subr.bf16.mxu0 0
  %647 = vmatpush1.bf16.xpose.msra.mxu0 0
  %648 = vmatprep.subr.bf16.mxu0 0
  %649 = vmatpush1.bf16.xpose.msra.mxu0 0
  %650 = vmatprep.mubr.bf16.mxu0 0
  %651 = vmatmul.mubr.bf16.gmra.mrb[0].mxu0 %v613
  %v652 = vpop.f32.mrb[0].mxu0
  %v653 = vadd.f32 %v43, %v652
  %v654 = vpop.f32.mrb[0].mxu0
  %v655 = vpop.f32.mrb[0].mxu0
  %v656 = vadd.f32 %v44, %v655
  %v657 = vpop.f32.mrb[0].mxu0
  %658 = vdwg.mxu0
  %660 = vrot.lane.b32.xlu0 %v454, 120
  %v661 = vpop.permute.xlu0 %660
  %v663 = vsel %vm461, %v454, 0
  %v666 = vsel %vm461, %v661, 0
  %668 = vmatprep.subr.bf16.mxu0 0
  %669 = vmatpush1.bf16.xpose.msra.mxu0 %v666
  %670 = vmatprep.subr.bf16.mxu0 0
  %671 = vmatpush1.bf16.xpose.msra.mxu0 0
  %672 = vmatprep.subr.bf16.mxu0 0
  %673 = vmatpush1.bf16.xpose.msra.mxu0 0
  %674 = vmatprep.subr.bf16.mxu0 0
  %675 = vmatpush1.bf16.xpose.msra.mxu0 0
  %676 = vmatprep.subr.bf16.mxu0 0
  %677 = vmatpush1.bf16.xpose.msra.mxu0 0
  %678 = vmatprep.subr.bf16.mxu0 0
  %679 = vmatpush1.bf16.xpose.msra.mxu0 0
  %680 = vmatprep.subr.bf16.mxu0 0
  %681 = vmatpush1.bf16.xpose.msra.mxu0 0
  %682 = vmatprep.subr.bf16.mxu0 0
  %683 = vmatpush1.bf16.xpose.msra.mxu0 0
  %684 = vmatprep.subr.bf16.mxu0 0
  %685 = vmatpush1.bf16.xpose.msra.mxu0 0
  %686 = vmatprep.subr.bf16.mxu0 0
  %687 = vmatpush1.bf16.xpose.msra.mxu0 0
  %688 = vmatprep.subr.bf16.mxu0 0
  %689 = vmatpush1.bf16.xpose.msra.mxu0 0
  %690 = vmatprep.subr.bf16.mxu0 0
  %691 = vmatpush1.bf16.xpose.msra.mxu0 0
  %692 = vmatprep.subr.bf16.mxu0 0
  %693 = vmatpush1.bf16.xpose.msra.mxu0 0
  %694 = vmatprep.subr.bf16.mxu0 0
  %695 = vmatpush1.bf16.xpose.msra.mxu0 0
  %696 = vmatprep.subr.bf16.mxu0 0
  %697 = vmatpush1.bf16.xpose.msra.mxu0 0
  %698 = vmatprep.subr.bf16.mxu0 0
  %699 = vmatpush1.bf16.xpose.msra.mxu0 0
  %700 = vmatprep.mubr.bf16.mxu0 0
  %701 = vmatmul.mubr.bf16.gmra.mrb[0].mxu0 %v663
  %v702 = vpop.f32.mrb[0].mxu0
  %v703 = vadd.f32 %v37, %v702
  %v704 = vpop.f32.mrb[0].mxu0
  %v705 = vpop.f32.mrb[0].mxu0
  %v706 = vadd.f32 %v38, %v705
  %v707 = vpop.f32.mrb[0].mxu0
  %708 = vdwg.mxu0
  %710 = vrot.lane.b32.xlu0 %v455, 120
  %v711 = vpop.permute.xlu0 %710
  %v713 = vsel %vm461, %v455, 0
  %v716 = vsel %vm461, %v711, 0
  %718 = vmatprep.subr.bf16.mxu0 0
  %719 = vmatpush1.bf16.xpose.msra.mxu0 %v716
  %720 = vmatprep.subr.bf16.mxu0 0
  %721 = vmatpush1.bf16.xpose.msra.mxu0 0
  %722 = vmatprep.subr.bf16.mxu0 0
  %723 = vmatpush1.bf16.xpose.msra.mxu0 0
  %724 = vmatprep.subr.bf16.mxu0 0
  %725 = vmatpush1.bf16.xpose.msra.mxu0 0
  %726 = vmatprep.subr.bf16.mxu0 0
  %727 = vmatpush1.bf16.xpose.msra.mxu0 0
  %728 = vmatprep.subr.bf16.mxu0 0
  %729 = vmatpush1.bf16.xpose.msra.mxu0 0
  %730 = vmatprep.subr.bf16.mxu0 0
  %731 = vmatpush1.bf16.xpose.msra.mxu0 0
  %732 = vmatprep.subr.bf16.mxu0 0
  %733 = vmatpush1.bf16.xpose.msra.mxu0 0
  %734 = vmatprep.subr.bf16.mxu0 0
  %735 = vmatpush1.bf16.xpose.msra.mxu0 0
  %736 = vmatprep.subr.bf16.mxu0 0
  %737 = vmatpush1.bf16.xpose.msra.mxu0 0
  %738 = vmatprep.subr.bf16.mxu0 0
  %739 = vmatpush1.bf16.xpose.msra.mxu0 0
  %740 = vmatprep.subr.bf16.mxu0 0
  %741 = vmatpush1.bf16.xpose.msra.mxu0 0
  %742 = vmatprep.subr.bf16.mxu0 0
  %743 = vmatpush1.bf16.xpose.msra.mxu0 0
  %744 = vmatprep.subr.bf16.mxu0 0
  %745 = vmatpush1.bf16.xpose.msra.mxu0 0
  %746 = vmatprep.subr.bf16.mxu0 0
  %747 = vmatpush1.bf16.xpose.msra.mxu0 0
  %748 = vmatprep.subr.bf16.mxu0 0
  %749 = vmatpush1.bf16.xpose.msra.mxu0 0
  %750 = vmatprep.mubr.bf16.mxu0 0
  %751 = vmatmul.mubr.bf16.gmra.mrb[0].mxu0 %v713
  %v752 = vpop.f32.mrb[0].mxu0
  %v753 = vadd.f32 %v39, %v752
  %v754 = vpop.f32.mrb[0].mxu0
  %v755 = vpop.f32.mrb[0].mxu0
  %v756 = vadd.f32 %v40, %v755
  %v757 = vpop.f32.mrb[0].mxu0
  %758 = vdwg.mxu0
  %760 = vrot.lane.b32.xlu0 %v456, 120
  %v761 = vpop.permute.xlu0 %760
  %v763 = vsel %vm461, %v456, 0
  %v766 = vsel %vm461, %v761, 0
  %768 = vmatprep.subr.bf16.mxu0 0
  %769 = vmatpush1.bf16.xpose.msra.mxu0 %v766
  %770 = vmatprep.subr.bf16.mxu0 0
  %771 = vmatpush1.bf16.xpose.msra.mxu0 0
  %772 = vmatprep.subr.bf16.mxu0 0
  %773 = vmatpush1.bf16.xpose.msra.mxu0 0
  %774 = vmatprep.subr.bf16.mxu0 0
  %775 = vmatpush1.bf16.xpose.msra.mxu0 0
  %776 = vmatprep.subr.bf16.mxu0 0
  %777 = vmatpush1.bf16.xpose.msra.mxu0 0
  %778 = vmatprep.subr.bf16.mxu0 0
  %779 = vmatpush1.bf16.xpose.msra.mxu0 0
  %780 = vmatprep.subr.bf16.mxu0 0
  %781 = vmatpush1.bf16.xpose.msra.mxu0 0
  %782 = vmatprep.subr.bf16.mxu0 0
  %783 = vmatpush1.bf16.xpose.msra.mxu0 0
  %784 = vmatprep.subr.bf16.mxu0 0
  %785 = vmatpush1.bf16.xpose.msra.mxu0 0
  %786 = vmatprep.subr.bf16.mxu0 0
  %787 = vmatpush1.bf16.xpose.msra.mxu0 0
  %788 = vmatprep.subr.bf16.mxu0 0
  %789 = vmatpush1.bf16.xpose.msra.mxu0 0
  %790 = vmatprep.subr.bf16.mxu0 0
  %791 = vmatpush1.bf16.xpose.msra.mxu0 0
  %792 = vmatprep.subr.bf16.mxu0 0
  %793 = vmatpush1.bf16.xpose.msra.mxu0 0
  %794 = vmatprep.subr.bf16.mxu0 0
  %795 = vmatpush1.bf16.xpose.msra.mxu0 0
  %796 = vmatprep.subr.bf16.mxu0 0
  %797 = vmatpush1.bf16.xpose.msra.mxu0 0
  %798 = vmatprep.subr.bf16.mxu0 0
  %799 = vmatpush1.bf16.xpose.msra.mxu0 0
  %800 = vmatprep.mubr.bf16.mxu0 0
  %801 = vmatmul.mubr.bf16.gmra.mrb[0].mxu0 %v763
  %v802 = vpop.f32.mrb[0].mxu0
  %v803 = vadd.f32 %v41, %v802
  %v804 = vpop.f32.mrb[0].mxu0
  %v805 = vpop.f32.mrb[0].mxu0
  %v806 = vadd.f32 %v42, %v805
  %v807 = vpop.f32.mrb[0].mxu0
  %808 = vdwg.mxu0
  %810 = vrot.lane.b32.xlu0 %v457, 120
  %v811 = vpop.permute.xlu0 %810
  %v813 = vsel %vm461, %v457, 0
  %v816 = vsel %vm461, %v811, 0
  %818 = vmatprep.subr.bf16.mxu0 0
  %819 = vmatpush1.bf16.xpose.msra.mxu0 %v816
  %820 = vmatprep.subr.bf16.mxu0 0
  %821 = vmatpush1.bf16.xpose.msra.mxu0 0
  %822 = vmatprep.subr.bf16.mxu0 0
  %823 = vmatpush1.bf16.xpose.msra.mxu0 0
  %824 = vmatprep.subr.bf16.mxu0 0
  %825 = vmatpush1.bf16.xpose.msra.mxu0 0
  %826 = vmatprep.subr.bf16.mxu0 0
  %827 = vmatpush1.bf16.xpose.msra.mxu0 0
  %828 = vmatprep.subr.bf16.mxu0 0
  %829 = vmatpush1.bf16.xpose.msra.mxu0 0
  %830 = vmatprep.subr.bf16.mxu0 0
  %831 = vmatpush1.bf16.xpose.msra.mxu0 0
  %832 = vmatprep.subr.bf16.mxu0 0
  %833 = vmatpush1.bf16.xpose.msra.mxu0 0
  %834 = vmatprep.subr.bf16.mxu0 0
  %835 = vmatpush1.bf16.xpose.msra.mxu0 0
  %836 = vmatprep.subr.bf16.mxu0 0
  %837 = vmatpush1.bf16.xpose.msra.mxu0 0
  %838 = vmatprep.subr.bf16.mxu0 0
  %839 = vmatpush1.bf16.xpose.msra.mxu0 0
  %840 = vmatprep.subr.bf16.mxu0 0
  %841 = vmatpush1.bf16.xpose.msra.mxu0 0
  %842 = vmatprep.subr.bf16.mxu0 0
  %843 = vmatpush1.bf16.xpose.msra.mxu0 0
  %844 = vmatprep.subr.bf16.mxu0 0
  %845 = vmatpush1.bf16.xpose.msra.mxu0 0
  %846 = vmatprep.subr.bf16.mxu0 0
  %847 = vmatpush1.bf16.xpose.msra.mxu0 0
  %848 = vmatprep.subr.bf16.mxu0 0
  %849 = vmatpush1.bf16.xpose.msra.mxu0 0
  %850 = vmatprep.mubr.bf16.mxu0 0
  %851 = vmatmul.mubr.bf16.gmra.mrb[0].mxu0 %v813
  %v852 = vpop.f32.mrb[0].mxu0
  %v853 = vadd.f32 %v43, %v852
  %v854 = vpop.f32.mrb[0].mxu0
  %v855 = vpop.f32.mrb[0].mxu0
  %v856 = vadd.f32 %v44, %v855
  %v857 = vpop.f32.mrb[0].mxu0
  %858 = vdwg.mxu0
  %vm859 = vcmask 130048
  %v860 = vsel %vm859, %v503, -inf
  %861 = vmax.xlane.f32.xlu0 %v860
  %v862 = vpop.xlane.xlu0 %861
  %v863 = vsel %vm859, %v506, -inf
  %864 = vmax.xlane.f32.xlu0 %v863
  %v865 = vpop.xlane.xlu0 %864
  %v866 = vsel %vm859, %v553, -inf
  %867 = vmax.xlane.f32.xlu0 %v866
  %v868 = vpop.xlane.xlu0 %867
  %v869 = vsel %vm859, %v556, -inf
  %870 = vmax.xlane.f32.xlu0 %v869
  %v871 = vpop.xlane.xlu0 %870
  %v872 = vsel %vm859, %v603, -inf
  %873 = vmax.xlane.f32.xlu0 %v872
  %v874 = vpop.xlane.xlu0 %873
  %v875 = vsel %vm859, %v606, -inf
  %876 = vmax.xlane.f32.xlu0 %v875
  %v877 = vpop.xlane.xlu0 %876
  %v878 = vsel %vm859, %v653, -inf
  %879 = vmax.xlane.f32.xlu0 %v878
  %v880 = vpop.xlane.xlu0 %879
  %v881 = vsel %vm859, %v656, -inf
  %882 = vmax.xlane.f32.xlu0 %v881
  %v883 = vpop.xlane.xlu0 %882
  %v884 = vsel %vm859, %v703, -inf
  %885 = vmax.xlane.f32.xlu0 %v884
  %v886 = vpop.xlane.xlu0 %885
  %v887 = vsel %vm859, %v706, -inf
  %888 = vmax.xlane.f32.xlu0 %v887
  %v889 = vpop.xlane.xlu0 %888
  %v890 = vsel %vm859, %v753, -inf
  %891 = vmax.xlane.f32.xlu0 %v890
  %v892 = vpop.xlane.xlu0 %891
  %v893 = vsel %vm859, %v756, -inf
  %894 = vmax.xlane.f32.xlu0 %v893
  %v895 = vpop.xlane.xlu0 %894
  %v896 = vsel %vm859, %v803, -inf
  %897 = vmax.xlane.f32.xlu0 %v896
  %v898 = vpop.xlane.xlu0 %897
  %v899 = vsel %vm859, %v806, -inf
  %900 = vmax.xlane.f32.xlu0 %v899
  %v901 = vpop.xlane.xlu0 %900
  %v902 = vsel %vm859, %v853, -inf
  %903 = vmax.xlane.f32.xlu0 %v902
  %v904 = vpop.xlane.xlu0 %903
  %v905 = vsel %vm859, %v856, -inf
  %906 = vmax.xlane.f32.xlu0 %v905
  %v907 = vpop.xlane.xlu0 %906
  %v908 = vsub.f32 %v503, %v862
  %v909 = vsub.f32 %v506, %v865
  %v910 = vsub.f32 %v553, %v868
  %v911 = vsub.f32 %v556, %v871
  %v912 = vsub.f32 %v603, %v874
  %v913 = vsub.f32 %v606, %v877
  %v914 = vsub.f32 %v653, %v880
  %v915 = vsub.f32 %v656, %v883
  %v916 = vsub.f32 %v703, %v886
  %v917 = vsub.f32 %v706, %v889
  %v918 = vsub.f32 %v753, %v892
  %v919 = vsub.f32 %v756, %v895
  %v920 = vsub.f32 %v803, %v898
  %v921 = vsub.f32 %v806, %v901
  %v922 = vsub.f32 %v853, %v904
  %v923 = vsub.f32 %v856, %v907
  %v924 = vmul.f32 %v908, 1.442695
  %v925 = vpow.pop %v924
  %v926 = vmul.f32 %v909, 1.442695
  %v927 = vpow.pop %v926
  %v928 = vmul.f32 %v910, 1.442695
  %v929 = vpow.pop %v928
  %v930 = vmul.f32 %v911, 1.442695
  %v931 = vpow.pop %v930
  %v932 = vmul.f32 %v912, 1.442695
  %v933 = vpow.pop %v932
  %v934 = vmul.f32 %v913, 1.442695
  %v935 = vpow.pop %v934
  %v936 = vmul.f32 %v914, 1.442695
  %v937 = vpow.pop %v936
  %v938 = vmul.f32 %v915, 1.442695
  %v939 = vpow.pop %v938
  %v940 = vmul.f32 %v916, 1.442695
  %v941 = vpow.pop %v940
  %v942 = vmul.f32 %v917, 1.442695
  %v943 = vpow.pop %v942
  %v944 = vmul.f32 %v918, 1.442695
  %v945 = vpow.pop %v944
  %v946 = vmul.f32 %v919, 1.442695
  %v947 = vpow.pop %v946
  %v948 = vmul.f32 %v920, 1.442695
  %v949 = vpow.pop %v948
  %v950 = vmul.f32 %v921, 1.442695
  %v951 = vpow.pop %v950
  %v952 = vmul.f32 %v922, 1.442695
  %v953 = vpow.pop %v952
  %v954 = vmul.f32 %v923, 1.442695
  %v955 = vpow.pop %v954
  %v956 = vsel %vm859, %v925, 0.0
  %957 = vadd.xlane.f32.xlu0 %v956
  %v958 = vpop.xlane.xlu0 %957
  %v959 = vsel %vm859, %v927, 0.0
  %960 = vadd.xlane.f32.xlu0 %v959
  %v961 = vpop.xlane.xlu0 %960
  %v962 = vsel %vm859, %v929, 0.0
  %963 = vadd.xlane.f32.xlu0 %v962
  %v964 = vpop.xlane.xlu0 %963
  %v965 = vsel %vm859, %v931, 0.0
  %966 = vadd.xlane.f32.xlu0 %v965
  %v967 = vpop.xlane.xlu0 %966
  %v968 = vsel %vm859, %v933, 0.0
  %969 = vadd.xlane.f32.xlu0 %v968
  %v970 = vpop.xlane.xlu0 %969
  %v971 = vsel %vm859, %v935, 0.0
  %972 = vadd.xlane.f32.xlu0 %v971
  %v973 = vpop.xlane.xlu0 %972
  %v974 = vsel %vm859, %v937, 0.0
  %975 = vadd.xlane.f32.xlu0 %v974
  %v976 = vpop.xlane.xlu0 %975
  %v977 = vsel %vm859, %v939, 0.0
  %978 = vadd.xlane.f32.xlu0 %v977
  %v979 = vpop.xlane.xlu0 %978
  %v980 = vsel %vm859, %v941, 0.0
  %981 = vadd.xlane.f32.xlu0 %v980
  %v982 = vpop.xlane.xlu0 %981
  %v983 = vsel %vm859, %v943, 0.0
  %984 = vadd.xlane.f32.xlu0 %v983
  %v985 = vpop.xlane.xlu0 %984
  %v986 = vsel %vm859, %v945, 0.0
  %987 = vadd.xlane.f32.xlu0 %v986
  %v988 = vpop.xlane.xlu0 %987
  %v989 = vsel %vm859, %v947, 0.0
  %990 = vadd.xlane.f32.xlu0 %v989
  %v991 = vpop.xlane.xlu0 %990
  %v992 = vsel %vm859, %v949, 0.0
  %993 = vadd.xlane.f32.xlu0 %v992
  %v994 = vpop.xlane.xlu0 %993
  %v995 = vsel %vm859, %v951, 0.0
  %996 = vadd.xlane.f32.xlu0 %v995
  %v997 = vpop.xlane.xlu0 %996
  %v998 = vsel %vm859, %v953, 0.0
  %999 = vadd.xlane.f32.xlu0 %v998
  %v1000 = vpop.xlane.xlu0 %999
  %v1001 = vsel %vm859, %v955, 0.0
  %1002 = vadd.xlane.f32.xlu0 %v1001
  %v1003 = vpop.xlane.xlu0 %1002
  %v1004 = vrcp.pop %v958
  %v1005 = vrcp.pop %v961
  %v1006 = vrcp.pop %v964
  %v1007 = vrcp.pop %v967
  %v1008 = vrcp.pop %v970
  %v1009 = vrcp.pop %v973
  %v1010 = vrcp.pop %v976
  %v1011 = vrcp.pop %v979
  %v1012 = vrcp.pop %v982
  %v1013 = vrcp.pop %v985
  %v1014 = vrcp.pop %v988
  %v1015 = vrcp.pop %v991
  %v1016 = vrcp.pop %v994
  %v1017 = vrcp.pop %v997
  %v1018 = vrcp.pop %v1000
  %v1019 = vrcp.pop %v1003
  %v1020 = vmul.f32 %v925, %v1004
  %v1021 = vmul.f32 %v927, %v1005
  %v1022 = vmul.f32 %v929, %v1006
  %v1023 = vmul.f32 %v931, %v1007
  %v1024 = vmul.f32 %v933, %v1008
  %v1025 = vmul.f32 %v935, %v1009
  %v1026 = vmul.f32 %v937, %v1010
  %v1027 = vmul.f32 %v939, %v1011
  %v1028 = vmul.f32 %v941, %v1012
  %v1029 = vmul.f32 %v943, %v1013
  %v1030 = vmul.f32 %v945, %v1014
  %v1031 = vmul.f32 %v947, %v1015
  %v1032 = vmul.f32 %v949, %v1016
  %v1033 = vmul.f32 %v951, %v1017
  %v1034 = vmul.f32 %v953, %v1018
  %v1035 = vmul.f32 %v955, %v1019
  %v1036 = vpack.c.bf16 %v1021, %v1020
  %v1037 = vpack.c.bf16 %v1023, %v1022
  %v1038 = vpack.c.bf16 %v1025, %v1024
  %v1039 = vpack.c.bf16 %v1027, %v1026
  %v1040 = vpack.c.bf16 %v1029, %v1028
  %v1041 = vpack.c.bf16 %v1031, %v1030
  %v1042 = vpack.c.bf16 %v1033, %v1032
  %v1043 = vpack.c.bf16 %v1035, %v1034
  %1044 = vrot.lane.b32.xlu0 %v450, 112
  %v1045 = vpop.permute.xlu0 %1044
  %v1048 = vsel %vm859, %v1036, 0
  %1050 = vmatprep.subr.bf16.mxu0 0
  %1051 = vmatpush1.bf16.msra.mxu0 %v1045
  %1052 = vmatprep.subr.bf16.mxu0 0
  %1053 = vmatpush1.bf16.msra.mxu0 0
  %1054 = vmatprep.subr.bf16.mxu0 0
  %1055 = vmatpush1.bf16.msra.mxu0 0
  %1056 = vmatprep.subr.bf16.mxu0 0
  %1057 = vmatpush1.bf16.msra.mxu0 0
  %1058 = vmatprep.subr.bf16.mxu0 0
  %1059 = vmatpush1.bf16.msra.mxu0 0
  %1060 = vmatprep.subr.bf16.mxu0 0
  %1061 = vmatpush1.bf16.msra.mxu0 0
  %1062 = vmatprep.subr.bf16.mxu0 0
  %1063 = vmatpush1.bf16.msra.mxu0 0
  %1064 = vmatprep.subr.bf16.mxu0 0
  %1065 = vmatpush1.bf16.msra.mxu0 0
  %1066 = vmatprep.subr.bf16.mxu0 0
  %1067 = vmatpush1.bf16.msra.mxu0 0
  %1068 = vmatprep.subr.bf16.mxu0 0
  %1069 = vmatpush1.bf16.msra.mxu0 0
  %1070 = vmatprep.subr.bf16.mxu0 0
  %1071 = vmatpush1.bf16.msra.mxu0 0
  %1072 = vmatprep.subr.bf16.mxu0 0
  %1073 = vmatpush1.bf16.msra.mxu0 0
  %1074 = vmatprep.subr.bf16.mxu0 0
  %1075 = vmatpush1.bf16.msra.mxu0 0
  %1076 = vmatprep.subr.bf16.mxu0 0
  %1077 = vmatpush1.bf16.msra.mxu0 0
  %1078 = vmatprep.subr.bf16.mxu0 0
  %1079 = vmatpush1.bf16.msra.mxu0 0
  %1080 = vmatprep.subr.bf16.mxu0 0
  %1081 = vmatpush1.bf16.msra.mxu0 0
  %1082 = vmatprep.mubr.bf16.mxu0 0
  %1083 = vmatmul.mubr.bf16.gmra.mrb[0].mxu0 %v1048
  %v1084 = vpop.f32.mrb[0].mxu0
  %v1085 = vadd.f32 0.0, %v1084
  %v1086 = vpop.f32.mrb[0].mxu0
  %v1087 = vpop.f32.mrb[0].mxu0
  %v1088 = vadd.f32 0.0, %v1087
  %v1089 = vpop.f32.mrb[0].mxu0
  %1090 = vdwg.mxu0
  %1091 = vrot.lane.b32.xlu0 %v451, 112
  %v1092 = vpop.permute.xlu0 %1091
  %v1095 = vsel %vm859, %v1037, 0
  %1097 = vmatprep.subr.bf16.mxu0 0
  %1098 = vmatpush1.bf16.msra.mxu0 %v1092
  %1099 = vmatprep.subr.bf16.mxu0 0
  %1100 = vmatpush1.bf16.msra.mxu0 0
  %1101 = vmatprep.subr.bf16.mxu0 0
  %1102 = vmatpush1.bf16.msra.mxu0 0
  %1103 = vmatprep.subr.bf16.mxu0 0
  %1104 = vmatpush1.bf16.msra.mxu0 0
  %1105 = vmatprep.subr.bf16.mxu0 0
  %1106 = vmatpush1.bf16.msra.mxu0 0
  %1107 = vmatprep.subr.bf16.mxu0 0
  %1108 = vmatpush1.bf16.msra.mxu0 0
  %1109 = vmatprep.subr.bf16.mxu0 0
  %1110 = vmatpush1.bf16.msra.mxu0 0
  %1111 = vmatprep.subr.bf16.mxu0 0
  %1112 = vmatpush1.bf16.msra.mxu0 0
  %1113 = vmatprep.subr.bf16.mxu0 0
  %1114 = vmatpush1.bf16.msra.mxu0 0
  %1115 = vmatprep.subr.bf16.mxu0 0
  %1116 = vmatpush1.bf16.msra.mxu0 0
  %1117 = vmatprep.subr.bf16.mxu0 0
  %1118 = vmatpush1.bf16.msra.mxu0 0
  %1119 = vmatprep.subr.bf16.mxu0 0
  %1120 = vmatpush1.bf16.msra.mxu0 0
  %1121 = vmatprep.subr.bf16.mxu0 0
  %1122 = vmatpush1.bf16.msra.mxu0 0
  %1123 = vmatprep.subr.bf16.mxu0 0
  %1124 = vmatpush1.bf16.msra.mxu0 0
  %1125 = vmatprep.subr.bf16.mxu0 0
  %1126 = vmatpush1.bf16.msra.mxu0 0
  %1127 = vmatprep.subr.bf16.mxu0 0
  %1128 = vmatpush1.bf16.msra.mxu0 0
  %1129 = vmatprep.mubr.bf16.mxu0 0
  %1130 = vmatmul.mubr.bf16.gmra.mrb[0].mxu0 %v1095
  %v1131 = vpop.f32.mrb[0].mxu0
  %v1132 = vadd.f32 0.0, %v1131
  %v1133 = vpop.f32.mrb[0].mxu0
  %v1134 = vpop.f32.mrb[0].mxu0
  %v1135 = vadd.f32 0.0, %v1134
  %v1136 = vpop.f32.mrb[0].mxu0
  %1137 = vdwg.mxu0
  %1138 = vrot.lane.b32.xlu0 %v452, 112
  %v1139 = vpop.permute.xlu0 %1138
  %v1142 = vsel %vm859, %v1038, 0
  %1144 = vmatprep.subr.bf16.mxu0 0
  %1145 = vmatpush1.bf16.msra.mxu0 %v1139
  %1146 = vmatprep.subr.bf16.mxu0 0
  %1147 = vmatpush1.bf16.msra.mxu0 0
  %1148 = vmatprep.subr.bf16.mxu0 0
  %1149 = vmatpush1.bf16.msra.mxu0 0
  %1150 = vmatprep.subr.bf16.mxu0 0
  %1151 = vmatpush1.bf16.msra.mxu0 0
  %1152 = vmatprep.subr.bf16.mxu0 0
  %1153 = vmatpush1.bf16.msra.mxu0 0
  %1154 = vmatprep.subr.bf16.mxu0 0
  %1155 = vmatpush1.bf16.msra.mxu0 0
  %1156 = vmatprep.subr.bf16.mxu0 0
  %1157 = vmatpush1.bf16.msra.mxu0 0
  %1158 = vmatprep.subr.bf16.mxu0 0
  %1159 = vmatpush1.bf16.msra.mxu0 0
  %1160 = vmatprep.subr.bf16.mxu0 0
  %1161 = vmatpush1.bf16.msra.mxu0 0
  %1162 = vmatprep.subr.bf16.mxu0 0
  %1163 = vmatpush1.bf16.msra.mxu0 0
  %1164 = vmatprep.subr.bf16.mxu0 0
  %1165 = vmatpush1.bf16.msra.mxu0 0
  %1166 = vmatprep.subr.bf16.mxu0 0
  %1167 = vmatpush1.bf16.msra.mxu0 0
  %1168 = vmatprep.subr.bf16.mxu0 0
  %1169 = vmatpush1.bf16.msra.mxu0 0
  %1170 = vmatprep.subr.bf16.mxu0 0
  %1171 = vmatpush1.bf16.msra.mxu0 0
  %1172 = vmatprep.subr.bf16.mxu0 0
  %1173 = vmatpush1.bf16.msra.mxu0 0
  %1174 = vmatprep.subr.bf16.mxu0 0
  %1175 = vmatpush1.bf16.msra.mxu0 0
  %1176 = vmatprep.mubr.bf16.mxu0 0
  %1177 = vmatmul.mubr.bf16.gmra.mrb[0].mxu0 %v1142
  %v1178 = vpop.f32.mrb[0].mxu0
  %v1179 = vadd.f32 0.0, %v1178
  %v1180 = vpop.f32.mrb[0].mxu0
  %v1181 = vpop.f32.mrb[0].mxu0
  %v1182 = vadd.f32 0.0, %v1181
  %v1183 = vpop.f32.mrb[0].mxu0
  %1184 = vdwg.mxu0
  %1185 = vrot.lane.b32.xlu0 %v453, 112
  %v1186 = vpop.permute.xlu0 %1185
  %v1189 = vsel %vm859, %v1039, 0
  %1191 = vmatprep.subr.bf16.mxu0 0
  %1192 = vmatpush1.bf16.msra.mxu0 %v1186
  %1193 = vmatprep.subr.bf16.mxu0 0
  %1194 = vmatpush1.bf16.msra.mxu0 0
  %1195 = vmatprep.subr.bf16.mxu0 0
  %1196 = vmatpush1.bf16.msra.mxu0 0
  %1197 = vmatprep.subr.bf16.mxu0 0
  %1198 = vmatpush1.bf16.msra.mxu0 0
  %1199 = vmatprep.subr.bf16.mxu0 0
  %1200 = vmatpush1.bf16.msra.mxu0 0
  %1201 = vmatprep.subr.bf16.mxu0 0
  %1202 = vmatpush1.bf16.msra.mxu0 0
  %1203 = vmatprep.subr.bf16.mxu0 0
  %1204 = vmatpush1.bf16.msra.mxu0 0
  %1205 = vmatprep.subr.bf16.mxu0 0
  %1206 = vmatpush1.bf16.msra.mxu0 0
  %1207 = vmatprep.subr.bf16.mxu0 0
  %1208 = vmatpush1.bf16.msra.mxu0 0
  %1209 = vmatprep.subr.bf16.mxu0 0
  %1210 = vmatpush1.bf16.msra.mxu0 0
  %1211 = vmatprep.subr.bf16.mxu0 0
  %1212 = vmatpush1.bf16.msra.mxu0 0
  %1213 = vmatprep.subr.bf16.mxu0 0
  %1214 = vmatpush1.bf16.msra.mxu0 0
  %1215 = vmatprep.subr.bf16.mxu0 0
  %1216 = vmatpush1.bf16.msra.mxu0 0
  %1217 = vmatprep.subr.bf16.mxu0 0
  %1218 = vmatpush1.bf16.msra.mxu0 0
  %1219 = vmatprep.subr.bf16.mxu0 0
  %1220 = vmatpush1.bf16.msra.mxu0 0
  %1221 = vmatprep.subr.bf16.mxu0 0
  %1222 = vmatpush1.bf16.msra.mxu0 0
  %1223 = vmatprep.mubr.bf16.mxu0 0
  %1224 = vmatmul.mubr.bf16.gmra.mrb[0].mxu0 %v1189
  %v1225 = vpop.f32.mrb[0].mxu0
  %v1226 = vadd.f32 0.0, %v1225
  %v1227 = vpop.f32.mrb[0].mxu0
  %v1228 = vpop.f32.mrb[0].mxu0
  %v1229 = vadd.f32 0.0, %v1228
  %v1230 = vpop.f32.mrb[0].mxu0
  %1231 = vdwg.mxu0
  %1232 = vrot.lane.b32.xlu0 %v454, 112
  %v1233 = vpop.permute.xlu0 %1232
  %v1236 = vsel %vm859, %v1040, 0
  %1238 = vmatprep.subr.bf16.mxu0 0
  %1239 = vmatpush1.bf16.msra.mxu0 %v1233
  %1240 = vmatprep.subr.bf16.mxu0 0
  %1241 = vmatpush1.bf16.msra.mxu0 0
  %1242 = vmatprep.subr.bf16.mxu0 0
  %1243 = vmatpush1.bf16.msra.mxu0 0
  %1244 = vmatprep.subr.bf16.mxu0 0
  %1245 = vmatpush1.bf16.msra.mxu0 0
  %1246 = vmatprep.subr.bf16.mxu0 0
  %1247 = vmatpush1.bf16.msra.mxu0 0
  %1248 = vmatprep.subr.bf16.mxu0 0
  %1249 = vmatpush1.bf16.msra.mxu0 0
  %1250 = vmatprep.subr.bf16.mxu0 0
  %1251 = vmatpush1.bf16.msra.mxu0 0
  %1252 = vmatprep.subr.bf16.mxu0 0
  %1253 = vmatpush1.bf16.msra.mxu0 0
  %1254 = vmatprep.subr.bf16.mxu0 0
  %1255 = vmatpush1.bf16.msra.mxu0 0
  %1256 = vmatprep.subr.bf16.mxu0 0
  %1257 = vmatpush1.bf16.msra.mxu0 0
  %1258 = vmatprep.subr.bf16.mxu0 0
  %1259 = vmatpush1.bf16.msra.mxu0 0
  %1260 = vmatprep.subr.bf16.mxu0 0
  %1261 = vmatpush1.bf16.msra.mxu0 0
  %1262 = vmatprep.subr.bf16.mxu0 0
  %1263 = vmatpush1.bf16.msra.mxu0 0
  %1264 = vmatprep.subr.bf16.mxu0 0
  %1265 = vmatpush1.bf16.msra.mxu0 0
  %1266 = vmatprep.subr.bf16.mxu0 0
  %1267 = vmatpush1.bf16.msra.mxu0 0
  %1268 = vmatprep.subr.bf16.mxu0 0
  %1269 = vmatpush1.bf16.msra.mxu0 0
  %1270 = vmatprep.mubr.bf16.mxu0 0
  %1271 = vmatmul.mubr.bf16.gmra.mrb[0].mxu0 %v1236
  %v1272 = vpop.f32.mrb[0].mxu0
  %v1273 = vadd.f32 0.0, %v1272
  %v1274 = vpop.f32.mrb[0].mxu0
  %v1275 = vpop.f32.mrb[0].mxu0
  %v1276 = vadd.f32 0.0, %v1275
  %v1277 = vpop.f32.mrb[0].mxu0
  %1278 = vdwg.mxu0
  %1279 = vrot.lane.b32.xlu0 %v455, 112
  %v1280 = vpop.permute.xlu0 %1279
  %v1283 = vsel %vm859, %v1041, 0
  %1285 = vmatprep.subr.bf16.mxu0 0
  %1286 = vmatpush1.bf16.msra.mxu0 %v1280
  %1287 = vmatprep.subr.bf16.mxu0 0
  %1288 = vmatpush1.bf16.msra.mxu0 0
  %1289 = vmatprep.subr.bf16.mxu0 0
  %1290 = vmatpush1.bf16.msra.mxu0 0
  %1291 = vmatprep.subr.bf16.mxu0 0
  %1292 = vmatpush1.bf16.msra.mxu0 0
  %1293 = vmatprep.subr.bf16.mxu0 0
  %1294 = vmatpush1.bf16.msra.mxu0 0
  %1295 = vmatprep.subr.bf16.mxu0 0
  %1296 = vmatpush1.bf16.msra.mxu0 0
  %1297 = vmatprep.subr.bf16.mxu0 0
  %1298 = vmatpush1.bf16.msra.mxu0 0
  %1299 = vmatprep.subr.bf16.mxu0 0
  %1300 = vmatpush1.bf16.msra.mxu0 0
  %1301 = vmatprep.subr.bf16.mxu0 0
  %1302 = vmatpush1.bf16.msra.mxu0 0
  %1303 = vmatprep.subr.bf16.mxu0 0
  %1304 = vmatpush1.bf16.msra.mxu0 0
  %1305 = vmatprep.subr.bf16.mxu0 0
  %1306 = vmatpush1.bf16.msra.mxu0 0
  %1307 = vmatprep.subr.bf16.mxu0 0
  %1308 = vmatpush1.bf16.msra.mxu0 0
  %1309 = vmatprep.subr.bf16.mxu0 0
  %1310 = vmatpush1.bf16.msra.mxu0 0
  %1311 = vmatprep.subr.bf16.mxu0 0
  %1312 = vmatpush1.bf16.msra.mxu0 0
  %1313 = vmatprep.subr.bf16.mxu0 0
  %1314 = vmatpush1.bf16.msra.mxu0 0
  %1315 = vmatprep.subr.bf16.mxu0 0
  %1316 = vmatpush1.bf16.msra.mxu0 0
  %1317 = vmatprep.mubr.bf16.mxu0 0
  %1318 = vmatmul.mubr.bf16.gmra.mrb[0].mxu0 %v1283
  %v1319 = vpop.f32.mrb[0].mxu0
  %v1320 = vadd.f32 0.0, %v1319
  %v1321 = vpop.f32.mrb[0].mxu0
  %v1322 = vpop.f32.mrb[0].mxu0
  %v1323 = vadd.f32 0.0, %v1322
  %v1324 = vpop.f32.mrb[0].mxu0
  %1325 = vdwg.mxu0
  %1326 = vrot.lane.b32.xlu0 %v456, 112
  %v1327 = vpop.permute.xlu0 %1326
  %v1330 = vsel %vm859, %v1042, 0
  %1332 = vmatprep.subr.bf16.mxu0 0
  %1333 = vmatpush1.bf16.msra.mxu0 %v1327
  %1334 = vmatprep.subr.bf16.mxu0 0
  %1335 = vmatpush1.bf16.msra.mxu0 0
  %1336 = vmatprep.subr.bf16.mxu0 0
  %1337 = vmatpush1.bf16.msra.mxu0 0
  %1338 = vmatprep.subr.bf16.mxu0 0
  %1339 = vmatpush1.bf16.msra.mxu0 0
  %1340 = vmatprep.subr.bf16.mxu0 0
  %1341 = vmatpush1.bf16.msra.mxu0 0
  %1342 = vmatprep.subr.bf16.mxu0 0
  %1343 = vmatpush1.bf16.msra.mxu0 0
  %1344 = vmatprep.subr.bf16.mxu0 0
  %1345 = vmatpush1.bf16.msra.mxu0 0
  %1346 = vmatprep.subr.bf16.mxu0 0
  %1347 = vmatpush1.bf16.msra.mxu0 0
  %1348 = vmatprep.subr.bf16.mxu0 0
  %1349 = vmatpush1.bf16.msra.mxu0 0
  %1350 = vmatprep.subr.bf16.mxu0 0
  %1351 = vmatpush1.bf16.msra.mxu0 0
  %1352 = vmatprep.subr.bf16.mxu0 0
  %1353 = vmatpush1.bf16.msra.mxu0 0
  %1354 = vmatprep.subr.bf16.mxu0 0
  %1355 = vmatpush1.bf16.msra.mxu0 0
  %1356 = vmatprep.subr.bf16.mxu0 0
  %1357 = vmatpush1.bf16.msra.mxu0 0
  %1358 = vmatprep.subr.bf16.mxu0 0
  %1359 = vmatpush1.bf16.msra.mxu0 0
  %1360 = vmatprep.subr.bf16.mxu0 0
  %1361 = vmatpush1.bf16.msra.mxu0 0
  %1362 = vmatprep.subr.bf16.mxu0 0
  %1363 = vmatpush1.bf16.msra.mxu0 0
  %1364 = vmatprep.mubr.bf16.mxu0 0
  %1365 = vmatmul.mubr.bf16.gmra.mrb[0].mxu0 %v1330
  %v1366 = vpop.f32.mrb[0].mxu0
  %v1367 = vadd.f32 0.0, %v1366
  %v1368 = vpop.f32.mrb[0].mxu0
  %v1369 = vpop.f32.mrb[0].mxu0
  %v1370 = vadd.f32 0.0, %v1369
  %v1371 = vpop.f32.mrb[0].mxu0
  %1372 = vdwg.mxu0
  %1373 = vrot.lane.b32.xlu0 %v457, 112
  %v1374 = vpop.permute.xlu0 %1373
  %v1377 = vsel %vm859, %v1043, 0
  %1379 = vmatprep.subr.bf16.mxu0 0
  %1380 = vmatpush1.bf16.msra.mxu0 %v1374
  %1381 = vmatprep.subr.bf16.mxu0 0
  %1382 = vmatpush1.bf16.msra.mxu0 0
  %1383 = vmatprep.subr.bf16.mxu0 0
  %1384 = vmatpush1.bf16.msra.mxu0 0
  %1385 = vmatprep.subr.bf16.mxu0 0
  %1386 = vmatpush1.bf16.msra.mxu0 0
  %1387 = vmatprep.subr.bf16.mxu0 0
  %1388 = vmatpush1.bf16.msra.mxu0 0
  %1389 = vmatprep.subr.bf16.mxu0 0
  %1390 = vmatpush1.bf16.msra.mxu0 0
  %1391 = vmatprep.subr.bf16.mxu0 0
  %1392 = vmatpush1.bf16.msra.mxu0 0
  %1393 = vmatprep.subr.bf16.mxu0 0
  %1394 = vmatpush1.bf16.msra.mxu0 0
  %1395 = vmatprep.subr.bf16.mxu0 0
  %1396 = vmatpush1.bf16.msra.mxu0 0
  %1397 = vmatprep.subr.bf16.mxu0 0
  %1398 = vmatpush1.bf16.msra.mxu0 0
  %1399 = vmatprep.subr.bf16.mxu0 0
  %1400 = vmatpush1.bf16.msra.mxu0 0
  %1401 = vmatprep.subr.bf16.mxu0 0
  %1402 = vmatpush1.bf16.msra.mxu0 0
  %1403 = vmatprep.subr.bf16.mxu0 0
  %1404 = vmatpush1.bf16.msra.mxu0 0
  %1405 = vmatprep.subr.bf16.mxu0 0
  %1406 = vmatpush1.bf16.msra.mxu0 0
  %1407 = vmatprep.subr.bf16.mxu0 0
  %1408 = vmatpush1.bf16.msra.mxu0 0
  %1409 = vmatprep.subr.bf16.mxu0 0
  %1410 = vmatpush1.bf16.msra.mxu0 0
  %1411 = vmatprep.mubr.bf16.mxu0 0
  %1412 = vmatmul.mubr.bf16.gmra.mrb[0].mxu0 %v1377
  %v1413 = vpop.f32.mrb[0].mxu0
  %v1414 = vadd.f32 0.0, %v1413
  %v1415 = vpop.f32.mrb[0].mxu0
  %v1416 = vpop.f32.mrb[0].mxu0
  %v1417 = vadd.f32 0.0, %v1416
  %v1418 = vpop.f32.mrb[0].mxu0
  %1419 = vdwg.mxu0
  %v1420 = vld [vmem:[%s4] sm:$0xff]
  %v1421 = vld [vmem:[%s4 + $0x8] sm:$0xff]
  %v1422 = vld [vmem:[%s4 + $0x10] sm:$0xff]
  %v1423 = vld [vmem:[%s4 + $0x18] sm:$0xff]
  %v1424 = vpack.c.bf16 %v1420, %v1420
  %v1425 = vpack.c.bf16 %v1421, %v1421
  %v1426 = vpack.c.bf16 %v1422, %v1422
  %v1427 = vpack.c.bf16 %v1423, %v1423
  %v1428 = vpack.c.bf16 %v1088, %v1085
  %v1429 = vpack.c.bf16 %v1135, %v1132
  %v1430 = vpack.c.bf16 %v1182, %v1179
  %v1431 = vpack.c.bf16 %v1229, %v1226
  %v1432 = vpack.c.bf16 %v1276, %v1273
  %v1433 = vpack.c.bf16 %v1323, %v1320
  %v1434 = vpack.c.bf16 %v1370, %v1367
  %v1435 = vpack.c.bf16 %v1417, %v1414
  %v1437 = vsel %vm461, %v1428, 0
  %vm1439 = vcmask 1043456
  %v1441 = vsel %vm1439, %v1424, 0
  %1443 = vmatprep.subr.bf16.mxu0 0
  %1444 = vmatpush1.bf16.msra.mxu0 %v1441
  %1445 = vmatprep.subr.bf16.mxu0 0
  %1446 = vmatpush1.bf16.msra.mxu0 0
  %1447 = vmatprep.subr.bf16.mxu0 0
  %1448 = vmatpush1.bf16.msra.mxu0 0
  %1449 = vmatprep.subr.bf16.mxu0 0
  %1450 = vmatpush1.bf16.msra.mxu0 0
  %1451 = vmatprep.subr.bf16.mxu0 0
  %1452 = vmatpush1.bf16.msra.mxu0 0
  %1453 = vmatprep.subr.bf16.mxu0 0
  %1454 = vmatpush1.bf16.msra.mxu0 0
  %1455 = vmatprep.subr.bf16.mxu0 0
  %1456 = vmatpush1.bf16.msra.mxu0 0
  %1457 = vmatprep.subr.bf16.mxu0 0
  %1458 = vmatpush1.bf16.msra.mxu0 0
  %1459 = vmatprep.subr.bf16.mxu0 0
  %1460 = vmatpush1.bf16.msra.mxu0 0
  %1461 = vmatprep.subr.bf16.mxu0 0
  %1462 = vmatpush1.bf16.msra.mxu0 0
  %1463 = vmatprep.subr.bf16.mxu0 0
  %1464 = vmatpush1.bf16.msra.mxu0 0
  %1465 = vmatprep.subr.bf16.mxu0 0
  %1466 = vmatpush1.bf16.msra.mxu0 0
  %1467 = vmatprep.subr.bf16.mxu0 0
  %1468 = vmatpush1.bf16.msra.mxu0 0
  %1469 = vmatprep.subr.bf16.mxu0 0
  %1470 = vmatpush1.bf16.msra.mxu0 0
  %1471 = vmatprep.subr.bf16.mxu0 0
  %1472 = vmatpush1.bf16.msra.mxu0 0
  %1473 = vmatprep.subr.bf16.mxu0 0
  %1474 = vmatpush1.bf16.msra.mxu0 0
  %1475 = vmatprep.mubr.bf16.mxu0 0
  %1476 = vmatmul.mubr.bf16.gmra.mrb[0].mxu0 %v1437
  %v1477 = vpop.f32.mrb[0].mxu0
  %v1478 = vadd.f32 0.0, %v1477
  %v1479 = vpop.f32.mrb[0].mxu0
  %v1480 = vpop.f32.mrb[0].mxu0
  %v1481 = vadd.f32 0.0, %v1480
  %v1482 = vpop.f32.mrb[0].mxu0
  %1483 = vdwg.mxu0
  %v1485 = vsel %vm461, %v1429, 0
  %v1488 = vsel %vm1439, %v1425, 0
  %1490 = vmatprep.subr.bf16.mxu0 0
  %1491 = vmatpush1.bf16.msra.mxu0 %v1488
  %1492 = vmatprep.subr.bf16.mxu0 0
  %1493 = vmatpush1.bf16.msra.mxu0 0
  %1494 = vmatprep.subr.bf16.mxu0 0
  %1495 = vmatpush1.bf16.msra.mxu0 0
  %1496 = vmatprep.subr.bf16.mxu0 0
  %1497 = vmatpush1.bf16.msra.mxu0 0
  %1498 = vmatprep.subr.bf16.mxu0 0
  %1499 = vmatpush1.bf16.msra.mxu0 0
  %1500 = vmatprep.subr.bf16.mxu0 0
  %1501 = vmatpush1.bf16.msra.mxu0 0
  %1502 = vmatprep.subr.bf16.mxu0 0
  %1503 = vmatpush1.bf16.msra.mxu0 0
  %1504 = vmatprep.subr.bf16.mxu0 0
  %1505 = vmatpush1.bf16.msra.mxu0 0
  %1506 = vmatprep.subr.bf16.mxu0 0
  %1507 = vmatpush1.bf16.msra.mxu0 0
  %1508 = vmatprep.subr.bf16.mxu0 0
  %1509 = vmatpush1.bf16.msra.mxu0 0
  %1510 = vmatprep.subr.bf16.mxu0 0
  %1511 = vmatpush1.bf16.msra.mxu0 0
  %1512 = vmatprep.subr.bf16.mxu0 0
  %1513 = vmatpush1.bf16.msra.mxu0 0
  %1514 = vmatprep.subr.bf16.mxu0 0
  %1515 = vmatpush1.bf16.msra.mxu0 0
  %1516 = vmatprep.subr.bf16.mxu0 0
  %1517 = vmatpush1.bf16.msra.mxu0 0
  %1518 = vmatprep.subr.bf16.mxu0 0
  %1519 = vmatpush1.bf16.msra.mxu0 0
  %1520 = vmatprep.subr.bf16.mxu0 0
  %1521 = vmatpush1.bf16.msra.mxu0 0
  %1522 = vmatprep.mubr.bf16.mxu0 0
  %1523 = vmatmul.mubr.bf16.gmra.mrb[0].mxu0 %v1485
  %v1524 = vpop.f32.mrb[0].mxu0
  %v1525 = vadd.f32 0.0, %v1524
  %v1526 = vpop.f32.mrb[0].mxu0
  %v1527 = vpop.f32.mrb[0].mxu0
  %v1528 = vadd.f32 0.0, %v1527
  %v1529 = vpop.f32.mrb[0].mxu0
  %1530 = vdwg.mxu0
  %v1532 = vsel %vm461, %v1430, 0
  %v1535 = vsel %vm1439, %v1426, 0
  %1537 = vmatprep.subr.bf16.mxu0 0
  %1538 = vmatpush1.bf16.msra.mxu0 %v1535
  %1539 = vmatprep.subr.bf16.mxu0 0
  %1540 = vmatpush1.bf16.msra.mxu0 0
  %1541 = vmatprep.subr.bf16.mxu0 0
  %1542 = vmatpush1.bf16.msra.mxu0 0
  %1543 = vmatprep.subr.bf16.mxu0 0
  %1544 = vmatpush1.bf16.msra.mxu0 0
  %1545 = vmatprep.subr.bf16.mxu0 0
  %1546 = vmatpush1.bf16.msra.mxu0 0
  %1547 = vmatprep.subr.bf16.mxu0 0
  %1548 = vmatpush1.bf16.msra.mxu0 0
  %1549 = vmatprep.subr.bf16.mxu0 0
  %1550 = vmatpush1.bf16.msra.mxu0 0
  %1551 = vmatprep.subr.bf16.mxu0 0
  %1552 = vmatpush1.bf16.msra.mxu0 0
  %1553 = vmatprep.subr.bf16.mxu0 0
  %1554 = vmatpush1.bf16.msra.mxu0 0
  %1555 = vmatprep.subr.bf16.mxu0 0
  %1556 = vmatpush1.bf16.msra.mxu0 0
  %1557 = vmatprep.subr.bf16.mxu0 0
  %1558 = vmatpush1.bf16.msra.mxu0 0
  %1559 = vmatprep.subr.bf16.mxu0 0
  %1560 = vmatpush1.bf16.msra.mxu0 0
  %1561 = vmatprep.subr.bf16.mxu0 0
  %1562 = vmatpush1.bf16.msra.mxu0 0
  %1563 = vmatprep.subr.bf16.mxu0 0
  %1564 = vmatpush1.bf16.msra.mxu0 0
  %1565 = vmatprep.subr.bf16.mxu0 0
  %1566 = vmatpush1.bf16.msra.mxu0 0
  %1567 = vmatprep.subr.bf16.mxu0 0
  %1568 = vmatpush1.bf16.msra.mxu0 0
  %1569 = vmatprep.mubr.bf16.mxu0 0
  %1570 = vmatmul.mubr.bf16.gmra.mrb[0].mxu0 %v1532
  %v1571 = vpop.f32.mrb[0].mxu0
  %v1572 = vadd.f32 0.0, %v1571
  %v1573 = vpop.f32.mrb[0].mxu0
  %v1574 = vpop.f32.mrb[0].mxu0
  %v1575 = vadd.f32 0.0, %v1574
  %v1576 = vpop.f32.mrb[0].mxu0
  %1577 = vdwg.mxu0
  %v1579 = vsel %vm461, %v1431, 0
  %v1582 = vsel %vm1439, %v1427, 0
  %1584 = vmatprep.subr.bf16.mxu0 0
  %1585 = vmatpush1.bf16.msra.mxu0 %v1582
  %1586 = vmatprep.subr.bf16.mxu0 0
  %1587 = vmatpush1.bf16.msra.mxu0 0
  %1588 = vmatprep.subr.bf16.mxu0 0
  %1589 = vmatpush1.bf16.msra.mxu0 0
  %1590 = vmatprep.subr.bf16.mxu0 0
  %1591 = vmatpush1.bf16.msra.mxu0 0
  %1592 = vmatprep.subr.bf16.mxu0 0
  %1593 = vmatpush1.bf16.msra.mxu0 0
  %1594 = vmatprep.subr.bf16.mxu0 0
  %1595 = vmatpush1.bf16.msra.mxu0 0
  %1596 = vmatprep.subr.bf16.mxu0 0
  %1597 = vmatpush1.bf16.msra.mxu0 0
  %1598 = vmatprep.subr.bf16.mxu0 0
  %1599 = vmatpush1.bf16.msra.mxu0 0
  %1600 = vmatprep.subr.bf16.mxu0 0
  %1601 = vmatpush1.bf16.msra.mxu0 0
  %1602 = vmatprep.subr.bf16.mxu0 0
  %1603 = vmatpush1.bf16.msra.mxu0 0
  %1604 = vmatprep.subr.bf16.mxu0 0
  %1605 = vmatpush1.bf16.msra.mxu0 0
  %1606 = vmatprep.subr.bf16.mxu0 0
  %1607 = vmatpush1.bf16.msra.mxu0 0
  %1608 = vmatprep.subr.bf16.mxu0 0
  %1609 = vmatpush1.bf16.msra.mxu0 0
  %1610 = vmatprep.subr.bf16.mxu0 0
  %1611 = vmatpush1.bf16.msra.mxu0 0
  %1612 = vmatprep.subr.bf16.mxu0 0
  %1613 = vmatpush1.bf16.msra.mxu0 0
  %1614 = vmatprep.subr.bf16.mxu0 0
  %1615 = vmatpush1.bf16.msra.mxu0 0
  %1616 = vmatprep.mubr.bf16.mxu0 0
  %1617 = vmatmul.mubr.bf16.gmra.mrb[0].mxu0 %v1579
  %v1618 = vpop.f32.mrb[0].mxu0
  %v1619 = vadd.f32 0.0, %v1618
  %v1620 = vpop.f32.mrb[0].mxu0
  %v1621 = vpop.f32.mrb[0].mxu0
  %v1622 = vadd.f32 0.0, %v1621
  %v1623 = vpop.f32.mrb[0].mxu0
  %1624 = vdwg.mxu0
  %v1626 = vsel %vm461, %v1432, 0
  %1628 = vmatprep.subr.bf16.mxu0 0
  %1629 = vmatpush1.bf16.msra.mxu0 %v1441
  %1630 = vmatprep.subr.bf16.mxu0 0
  %1631 = vmatpush1.bf16.msra.mxu0 0
  %1632 = vmatprep.subr.bf16.mxu0 0
  %1633 = vmatpush1.bf16.msra.mxu0 0
  %1634 = vmatprep.subr.bf16.mxu0 0
  %1635 = vmatpush1.bf16.msra.mxu0 0
  %1636 = vmatprep.subr.bf16.mxu0 0
  %1637 = vmatpush1.bf16.msra.mxu0 0
  %1638 = vmatprep.subr.bf16.mxu0 0
  %1639 = vmatpush1.bf16.msra.mxu0 0
  %1640 = vmatprep.subr.bf16.mxu0 0
  %1641 = vmatpush1.bf16.msra.mxu0 0
  %1642 = vmatprep.subr.bf16.mxu0 0
  %1643 = vmatpush1.bf16.msra.mxu0 0
  %1644 = vmatprep.subr.bf16.mxu0 0
  %1645 = vmatpush1.bf16.msra.mxu0 0
  %1646 = vmatprep.subr.bf16.mxu0 0
  %1647 = vmatpush1.bf16.msra.mxu0 0
  %1648 = vmatprep.subr.bf16.mxu0 0
  %1649 = vmatpush1.bf16.msra.mxu0 0
  %1650 = vmatprep.subr.bf16.mxu0 0
  %1651 = vmatpush1.bf16.msra.mxu0 0
  %1652 = vmatprep.subr.bf16.mxu0 0
  %1653 = vmatpush1.bf16.msra.mxu0 0
  %1654 = vmatprep.subr.bf16.mxu0 0
  %1655 = vmatpush1.bf16.msra.mxu0 0
  %1656 = vmatprep.subr.bf16.mxu0 0
  %1657 = vmatpush1.bf16.msra.mxu0 0
  %1658 = vmatprep.subr.bf16.mxu0 0
  %1659 = vmatpush1.bf16.msra.mxu0 0
  %1660 = vmatprep.mubr.bf16.mxu0 0
  %1661 = vmatmul.mubr.bf16.gmra.mrb[0].mxu0 %v1626
  %v1662 = vpop.f32.mrb[0].mxu0
  %v1663 = vadd.f32 0.0, %v1662
  %v1664 = vpop.f32.mrb[0].mxu0
  %v1665 = vpop.f32.mrb[0].mxu0
  %v1666 = vadd.f32 0.0, %v1665
  %v1667 = vpop.f32.mrb[0].mxu0
  %1668 = vdwg.mxu0
  %v1670 = vsel %vm461, %v1433, 0
  %1672 = vmatprep.subr.bf16.mxu0 0
  %1673 = vmatpush1.bf16.msra.mxu0 %v1488
  %1674 = vmatprep.subr.bf16.mxu0 0
  %1675 = vmatpush1.bf16.msra.mxu0 0
  %1676 = vmatprep.subr.bf16.mxu0 0
  %1677 = vmatpush1.bf16.msra.mxu0 0
  %1678 = vmatprep.subr.bf16.mxu0 0
  %1679 = vmatpush1.bf16.msra.mxu0 0
  %1680 = vmatprep.subr.bf16.mxu0 0
  %1681 = vmatpush1.bf16.msra.mxu0 0
  %1682 = vmatprep.subr.bf16.mxu0 0
  %1683 = vmatpush1.bf16.msra.mxu0 0
  %1684 = vmatprep.subr.bf16.mxu0 0
  %1685 = vmatpush1.bf16.msra.mxu0 0
  %1686 = vmatprep.subr.bf16.mxu0 0
  %1687 = vmatpush1.bf16.msra.mxu0 0
  %1688 = vmatprep.subr.bf16.mxu0 0
  %1689 = vmatpush1.bf16.msra.mxu0 0
  %1690 = vmatprep.subr.bf16.mxu0 0
  %1691 = vmatpush1.bf16.msra.mxu0 0
  %1692 = vmatprep.subr.bf16.mxu0 0
  %1693 = vmatpush1.bf16.msra.mxu0 0
  %1694 = vmatprep.subr.bf16.mxu0 0
  %1695 = vmatpush1.bf16.msra.mxu0 0
  %1696 = vmatprep.subr.bf16.mxu0 0
  %1697 = vmatpush1.bf16.msra.mxu0 0
  %1698 = vmatprep.subr.bf16.mxu0 0
  %1699 = vmatpush1.bf16.msra.mxu0 0
  %1700 = vmatprep.subr.bf16.mxu0 0
  %1701 = vmatpush1.bf16.msra.mxu0 0
  %1702 = vmatprep.subr.bf16.mxu0 0
  %1703 = vmatpush1.bf16.msra.mxu0 0
  %1704 = vmatprep.mubr.bf16.mxu0 0
  %1705 = vmatmul.mubr.bf16.gmra.mrb[0].mxu0 %v1670
  %v1706 = vpop.f32.mrb[0].mxu0
  %v1707 = vadd.f32 0.0, %v1706
  %v1708 = vpop.f32.mrb[0].mxu0
  %v1709 = vpop.f32.mrb[0].mxu0
  %v1710 = vadd.f32 0.0, %v1709
  %v1711 = vpop.f32.mrb[0].mxu0
  %1712 = vdwg.mxu0
  %v1714 = vsel %vm461, %v1434, 0
  %1716 = vmatprep.subr.bf16.mxu0 0
  %1717 = vmatpush1.bf16.msra.mxu0 %v1535
  %1718 = vmatprep.subr.bf16.mxu0 0
  %1719 = vmatpush1.bf16.msra.mxu0 0
  %1720 = vmatprep.subr.bf16.mxu0 0
  %1721 = vmatpush1.bf16.msra.mxu0 0
  %1722 = vmatprep.subr.bf16.mxu0 0
  %1723 = vmatpush1.bf16.msra.mxu0 0
  %1724 = vmatprep.subr.bf16.mxu0 0
  %1725 = vmatpush1.bf16.msra.mxu0 0
  %1726 = vmatprep.subr.bf16.mxu0 0
  %1727 = vmatpush1.bf16.msra.mxu0 0
  %1728 = vmatprep.subr.bf16.mxu0 0
  %1729 = vmatpush1.bf16.msra.mxu0 0
  %1730 = vmatprep.subr.bf16.mxu0 0
  %1731 = vmatpush1.bf16.msra.mxu0 0
  %1732 = vmatprep.subr.bf16.mxu0 0
  %1733 = vmatpush1.bf16.msra.mxu0 0
  %1734 = vmatprep.subr.bf16.mxu0 0
  %1735 = vmatpush1.bf16.msra.mxu0 0
  %1736 = vmatprep.subr.bf16.mxu0 0
  %1737 = vmatpush1.bf16.msra.mxu0 0
  %1738 = vmatprep.subr.bf16.mxu0 0
  %1739 = vmatpush1.bf16.msra.mxu0 0
  %1740 = vmatprep.subr.bf16.mxu0 0
  %1741 = vmatpush1.bf16.msra.mxu0 0
  %1742 = vmatprep.subr.bf16.mxu0 0
  %1743 = vmatpush1.bf16.msra.mxu0 0
  %1744 = vmatprep.subr.bf16.mxu0 0
  %1745 = vmatpush1.bf16.msra.mxu0 0
  %1746 = vmatprep.subr.bf16.mxu0 0
  %1747 = vmatpush1.bf16.msra.mxu0 0
  %1748 = vmatprep.mubr.bf16.mxu0 0
  %1749 = vmatmul.mubr.bf16.gmra.mrb[0].mxu0 %v1714
  %v1750 = vpop.f32.mrb[0].mxu0
  %v1751 = vadd.f32 0.0, %v1750
  %v1752 = vpop.f32.mrb[0].mxu0
  %v1753 = vpop.f32.mrb[0].mxu0
  %v1754 = vadd.f32 0.0, %v1753
  %v1755 = vpop.f32.mrb[0].mxu0
  %1756 = vdwg.mxu0
  %v1758 = vsel %vm461, %v1435, 0
  %1760 = vmatprep.subr.bf16.mxu0 0
  %1761 = vmatpush1.bf16.msra.mxu0 %v1582
  %1762 = vmatprep.subr.bf16.mxu0 0
  %1763 = vmatpush1.bf16.msra.mxu0 0
  %1764 = vmatprep.subr.bf16.mxu0 0
  %1765 = vmatpush1.bf16.msra.mxu0 0
  %1766 = vmatprep.subr.bf16.mxu0 0
  %1767 = vmatpush1.bf16.msra.mxu0 0
  %1768 = vmatprep.subr.bf16.mxu0 0
  %1769 = vmatpush1.bf16.msra.mxu0 0
  %1770 = vmatprep.subr.bf16.mxu0 0
  %1771 = vmatpush1.bf16.msra.mxu0 0
  %1772 = vmatprep.subr.bf16.mxu0 0
  %1773 = vmatpush1.bf16.msra.mxu0 0
  %1774 = vmatprep.subr.bf16.mxu0 0
  %1775 = vmatpush1.bf16.msra.mxu0 0
  %1776 = vmatprep.subr.bf16.mxu0 0
  %1777 = vmatpush1.bf16.msra.mxu0 0
  %1778 = vmatprep.subr.bf16.mxu0 0
  %1779 = vmatpush1.bf16.msra.mxu0 0
  %1780 = vmatprep.subr.bf16.mxu0 0
  %1781 = vmatpush1.bf16.msra.mxu0 0
  %1782 = vmatprep.subr.bf16.mxu0 0
  %1783 = vmatpush1.bf16.msra.mxu0 0
  %1784 = vmatprep.subr.bf16.mxu0 0
  %1785 = vmatpush1.bf16.msra.mxu0 0
  %1786 = vmatprep.subr.bf16.mxu0 0
  %1787 = vmatpush1.bf16.msra.mxu0 0
  %1788 = vmatprep.subr.bf16.mxu0 0
  %1789 = vmatpush1.bf16.msra.mxu0 0
  %1790 = vmatprep.subr.bf16.mxu0 0
  %1791 = vmatpush1.bf16.msra.mxu0 0
  %1792 = vmatprep.mubr.bf16.mxu0 0
  %1793 = vmatmul.mubr.bf16.gmra.mrb[0].mxu0 %v1758
  %v1794 = vpop.f32.mrb[0].mxu0
  %v1795 = vadd.f32 0.0, %v1794
  %v1796 = vpop.f32.mrb[0].mxu0
  %v1797 = vpop.f32.mrb[0].mxu0
  %v1798 = vadd.f32 0.0, %v1797
  %v1799 = vpop.f32.mrb[0].mxu0
  %1800 = vdwg.mxu0
  %v1801 = vsel %vm50, %v1478, 0.0
  %v1802 = vsel %vm50, %v1525, 0.0
  %v1803 = vadd.f32 %v1801, %v1802
  %v1804 = vsel %vm50, %v1572, 0.0
  %v1805 = vadd.f32 %v1803, %v1804
  %v1806 = vsel %vm50, %v1619, 0.0
  %v1807 = vadd.f32 %v1805, %v1806
  %v1808 = vsel %vm50, %v1481, 0.0
  %v1809 = vsel %vm50, %v1528, 0.0
  %v1810 = vadd.f32 %v1808, %v1809
  %v1811 = vsel %vm50, %v1575, 0.0
  %v1812 = vadd.f32 %v1810, %v1811
  %v1813 = vsel %vm50, %v1622, 0.0
  %v1814 = vadd.f32 %v1812, %v1813
  %v1815 = vsel %vm50, %v1663, 0.0
  %v1816 = vsel %vm50, %v1707, 0.0
  %v1817 = vadd.f32 %v1815, %v1816
  %v1818 = vsel %vm50, %v1751, 0.0
  %v1819 = vadd.f32 %v1817, %v1818
  %v1820 = vsel %vm50, %v1795, 0.0
  %v1821 = vadd.f32 %v1819, %v1820
  %v1822 = vsel %vm50, %v1666, 0.0
  %v1823 = vsel %vm50, %v1710, 0.0
  %v1824 = vadd.f32 %v1822, %v1823
  %v1825 = vsel %vm50, %v1754, 0.0
  %v1826 = vadd.f32 %v1824, %v1825
  %v1827 = vsel %vm50, %v1798, 0.0
  %v1828 = vadd.f32 %v1826, %v1827
  %v1829 = vadd.f32 %v33, %v1807
  %v1830 = vadd.f32 %v34, %v1814
  %v1831 = vadd.f32 %v35, %v1821
  %v1832 = vadd.f32 %v36, %v1828
  %v1833 = vld [vmem:[%s5] sm:$0x1]
  %v1834 = vmul.f32 %v1829, %v1829
  %v1835 = vmul.f32 %v1830, %v1830
  %v1836 = vmul.f32 %v1831, %v1831
  %v1837 = vmul.f32 %v1832, %v1832
  %v1838 = vsel %vm50, %v1834, 0.0
  %1839 = vadd.xlane.f32.xlu0 %v1838
  %v1840 = vpop.xlane.xlu0 %1839
  %v1841 = vsel %vm50, %v1835, 0.0
  %1842 = vadd.xlane.f32.xlu0 %v1841
  %v1843 = vpop.xlane.xlu0 %1842
  %v1844 = vsel %vm50, %v1836, 0.0
  %1845 = vadd.xlane.f32.xlu0 %v1844
  %v1846 = vpop.xlane.xlu0 %1845
  %v1847 = vsel %vm50, %v1837, 0.0
  %1848 = vadd.xlane.f32.xlu0 %v1847
  %v1849 = vpop.xlane.xlu0 %1848
  %v1850 = vmul.f32 %v1840, %v63
  %v1851 = vmul.f32 %v1843, %v63
  %v1852 = vmul.f32 %v1846, %v63
  %v1853 = vmul.f32 %v1849, %v63
  %v1854 = vadd.f32 %v1850, 1e-06
  %v1855 = vadd.f32 %v1851, 1e-06
  %v1856 = vadd.f32 %v1852, 1e-06
  %v1857 = vadd.f32 %v1853, 1e-06
  %v1858 = vrsqrt.pop %v1854
  %v1859 = vrsqrt.pop %v1855
  %v1860 = vrsqrt.pop %v1856
  %v1861 = vrsqrt.pop %v1857
  %v1862 = vmul.f32 %v1829, %v1858
  %v1863 = vmul.f32 %v1830, %v1859
  %v1864 = vmul.f32 %v1831, %v1860
  %v1865 = vmul.f32 %v1832, %v1861
  %v1867 = vlaneseq
  %v1868 = vshrl.u32 %v1867, 7
  %v1869 = vsub.s32 0, %v1868
  %v1870 = vrot.slane %v1833, %v1869
  %v1872 = vmul.f32 %v1862, %v1870
  %v1873 = vmul.f32 %v1863, %v1870
  %v1874 = vmul.f32 %v1864, %v1870
  %v1875 = vmul.f32 %v1865, %v1870
  %v1876 = vpack.c.bf16 %v1873, %v1872
  %v1877 = vpack.c.bf16 %v1875, %v1874
  %v1878 = vld [vmem:[%s6] sm:$0xff]
  %v1879 = vld [vmem:[%s6 + $0x8] sm:$0xff]
  %v1880 = vld [vmem:[%s6 + $0x10] sm:$0xff]
  %v1881 = vld [vmem:[%s6 + $0x18] sm:$0xff]
  %v1882 = vpack.c.bf16 %v1879, %v1878
  %v1883 = vpack.c.bf16 %v1881, %v1880
  %v1885 = vsel %vm50, %v1876, 0
  %v1888 = vsel %vm50, %v1877, 0
  %1890 = vmatprep.subr.bf16.mxu0 0
  %1891 = vmatpush1.bf16.msra.mxu0 %v1882
  %1892 = vmatprep.subr.bf16.mxu0 0
  %1893 = vmatpush1.bf16.msra.mxu0 %v1883
  %1894 = vmatprep.subr.bf16.mxu0 0
  %1895 = vmatpush1.bf16.msra.mxu0 0
  %1896 = vmatprep.subr.bf16.mxu0 0
  %1897 = vmatpush1.bf16.msra.mxu0 0
  %1898 = vmatprep.subr.bf16.mxu0 0
  %1899 = vmatpush1.bf16.msra.mxu0 0
  %1900 = vmatprep.subr.bf16.mxu0 0
  %1901 = vmatpush1.bf16.msra.mxu0 0
  %1902 = vmatprep.subr.bf16.mxu0 0
  %1903 = vmatpush1.bf16.msra.mxu0 0
  %1904 = vmatprep.subr.bf16.mxu0 0
  %1905 = vmatpush1.bf16.msra.mxu0 0
  %1906 = vmatprep.subr.bf16.mxu0 0
  %1907 = vmatpush1.bf16.msra.mxu0 0
  %1908 = vmatprep.subr.bf16.mxu0 0
  %1909 = vmatpush1.bf16.msra.mxu0 0
  %1910 = vmatprep.subr.bf16.mxu0 0
  %1911 = vmatpush1.bf16.msra.mxu0 0
  %1912 = vmatprep.subr.bf16.mxu0 0
  %1913 = vmatpush1.bf16.msra.mxu0 0
  %1914 = vmatprep.subr.bf16.mxu0 0
  %1915 = vmatpush1.bf16.msra.mxu0 0
  %1916 = vmatprep.subr.bf16.mxu0 0
  %1917 = vmatpush1.bf16.msra.mxu0 0
  %1918 = vmatprep.subr.bf16.mxu0 0
  %1919 = vmatpush1.bf16.msra.mxu0 0
  %1920 = vmatprep.subr.bf16.mxu0 0
  %1921 = vmatpush1.bf16.msra.mxu0 0
  %1922 = vmatprep.mubr.bf16.mxu0 0
  %1923 = vmatmul.mubr.bf16.gmra.mrb[0].mxu0 %v1885
  %v1924 = vpop.f32.mrb[0].mxu0
  %v1925 = vadd.f32 0.0, %v1924
  %v1926 = vpop.f32.mrb[0].mxu0
  %v1927 = vpop.f32.mrb[0].mxu0
  %v1928 = vadd.f32 0.0, %v1927
  %v1929 = vpop.f32.mrb[0].mxu0
  %1930 = vmatprep.mubr.bf16.mxu0 0
  %1931 = vmatmul.mubr.bf16.gmra.mrb[0].mxu0 %v1888
  %v1932 = vpop.f32.mrb[0].mxu0
  %v1933 = vadd.f32 0.0, %v1932
  %v1934 = vpop.f32.mrb[0].mxu0
  %v1935 = vpop.f32.mrb[0].mxu0
  %v1936 = vadd.f32 0.0, %v1935
  %v1937 = vpop.f32.mrb[0].mxu0
  %1938 = vdwg.mxu0
  %v1939 = vmax.f32 %v1925, 0.0
  %v1940 = vmax.f32 %v1928, 0.0
  %v1941 = vmax.f32 %v1933, 0.0
  %v1942 = vmax.f32 %v1936, 0.0
  %v1943 = vpack.c.bf16 %v1940, %v1939
  %v1944 = vpack.c.bf16 %v1942, %v1941
  %v1945 = vld [vmem:[%s7] sm:$0xff]
  %v1946 = vld [vmem:[%s7 + $0x8] sm:$0xff]
  %v1947 = vld [vmem:[%s7 + $0x10] sm:$0xff]
  %v1948 = vld [vmem:[%s7 + $0x18] sm:$0xff]
  %v1949 = vld [vmem:[%s7 + $0x20] sm:$0xff]
  %v1950 = vld [vmem:[%s7 + $0x28] sm:$0xff]
  %v1951 = vld [vmem:[%s7 + $0x30] sm:$0xff]
  %v1952 = vld [vmem:[%s7 + $0x38] sm:$0xff]
  %v1953 = vpack.c.bf16 %v1946, %v1945
  %v1954 = vpack.c.bf16 %v1948, %v1947
  %v1955 = vpack.c.bf16 %v1950, %v1949
  %v1956 = vpack.c.bf16 %v1952, %v1951
  %vm1957 = vcmask 523264
  %v1959 = vsel %vm1957, %v1943, 0
  %v1962 = vsel %vm1957, %v1944, 0
  %1964 = vmatprep.subr.bf16.mxu0 0
  %1965 = vmatpush1.bf16.msra.mxu0 %v1953
  %1966 = vmatprep.subr.bf16.mxu0 0
  %1967 = vmatpush1.bf16.msra.mxu0 %v1954
  %1968 = vmatprep.subr.bf16.mxu0 0
  %1969 = vmatpush1.bf16.msra.mxu0 %v1955
  %1970 = vmatprep.subr.bf16.mxu0 0
  %1971 = vmatpush1.bf16.msra.mxu0 %v1956
  %1972 = vmatprep.subr.bf16.mxu0 0
  %1973 = vmatpush1.bf16.msra.mxu0 0
  %1974 = vmatprep.subr.bf16.mxu0 0
  %1975 = vmatpush1.bf16.msra.mxu0 0
  %1976 = vmatprep.subr.bf16.mxu0 0
  %1977 = vmatpush1.bf16.msra.mxu0 0
  %1978 = vmatprep.subr.bf16.mxu0 0
  %1979 = vmatpush1.bf16.msra.mxu0 0
  %1980 = vmatprep.subr.bf16.mxu0 0
  %1981 = vmatpush1.bf16.msra.mxu0 0
  %1982 = vmatprep.subr.bf16.mxu0 0
  %1983 = vmatpush1.bf16.msra.mxu0 0
  %1984 = vmatprep.subr.bf16.mxu0 0
  %1985 = vmatpush1.bf16.msra.mxu0 0
  %1986 = vmatprep.subr.bf16.mxu0 0
  %1987 = vmatpush1.bf16.msra.mxu0 0
  %1988 = vmatprep.subr.bf16.mxu0 0
  %1989 = vmatpush1.bf16.msra.mxu0 0
  %1990 = vmatprep.subr.bf16.mxu0 0
  %1991 = vmatpush1.bf16.msra.mxu0 0
  %1992 = vmatprep.subr.bf16.mxu0 0
  %1993 = vmatpush1.bf16.msra.mxu0 0
  %1994 = vmatprep.subr.bf16.mxu0 0
  %1995 = vmatpush1.bf16.msra.mxu0 0
  %1996 = vmatprep.mubr.bf16.mxu0 0
  %1997 = vmatmul.mubr.bf16.gmra.mrb[0].mxu0 %v1959
  %v1998 = vpop.f32.mrb[0].mxu0
  %v1999 = vadd.f32 0.0, %v1998
  %v2000 = vpop.f32.mrb[0].mxu0
  %v2001 = vpop.f32.mrb[0].mxu0
  %v2002 = vadd.f32 0.0, %v2001
  %v2003 = vpop.f32.mrb[0].mxu0
  %2004 = vmatprep.mubr.bf16.mxu0 0
  %2005 = vmatmul.mubr.bf16.gmra.mrb[0].mxu0 %v1962
  %v2006 = vpop.f32.mrb[0].mxu0
  %v2007 = vadd.f32 0.0, %v2006
  %v2008 = vpop.f32.mrb[0].mxu0
  %v2009 = vpop.f32.mrb[0].mxu0
  %v2010 = vadd.f32 0.0, %v2009
  %v2011 = vpop.f32.mrb[0].mxu0
  %2012 = vdwg.mxu0
  %v2013 = vadd.f32 %v1829, %v1999
  %v2014 = vadd.f32 %v1830, %v2002
  %v2015 = vadd.f32 %v1831, %v2007
  %v2016 = vadd.f32 %v1832, %v2010
  %s2017 = scalar_lea.vmem %s2, 1
  %v2018 = vld [vmem:[%s2017] sm:$0x1]
  %v2019 = vmul.f32 %v2013, %v2013
  %v2020 = vmul.f32 %v2014, %v2014
  %v2021 = vmul.f32 %v2015, %v2015
  %v2022 = vmul.f32 %v2016, %v2016
  %v2023 = vsel %vm50, %v2019, 0.0
  %2024 = vadd.xlane.f32.xlu0 %v2023
  %v2025 = vpop.xlane.xlu0 %2024
  %v2026 = vsel %vm50, %v2020, 0.0
  %2027 = vadd.xlane.f32.xlu0 %v2026
  %v2028 = vpop.xlane.xlu0 %2027
  %v2029 = vsel %vm50, %v2021, 0.0
  %2030 = vadd.xlane.f32.xlu0 %v2029
  %v2031 = vpop.xlane.xlu0 %2030
  %v2032 = vsel %vm50, %v2022, 0.0
  %2033 = vadd.xlane.f32.xlu0 %v2032
  %v2034 = vpop.xlane.xlu0 %2033
  %v2035 = vmul.f32 %v2025, %v63
  %v2036 = vmul.f32 %v2028, %v63
  %v2037 = vmul.f32 %v2031, %v63
  %v2038 = vmul.f32 %v2034, %v63
  %v2039 = vadd.f32 %v2035, 1e-06
  %v2040 = vadd.f32 %v2036, 1e-06
  %v2041 = vadd.f32 %v2037, 1e-06
  %v2042 = vadd.f32 %v2038, 1e-06
  %v2043 = vrsqrt.pop %v2039
  %v2044 = vrsqrt.pop %v2040
  %v2045 = vrsqrt.pop %v2041
  %v2046 = vrsqrt.pop %v2042
  %v2047 = vmul.f32 %v2013, %v2043
  %v2048 = vmul.f32 %v2014, %v2044
  %v2049 = vmul.f32 %v2015, %v2045
  %v2050 = vmul.f32 %v2016, %v2046
  %v2052 = vlaneseq
  %v2053 = vshrl.u32 %v2052, 7
  %v2054 = vsub.s32 0, %v2053
  %v2055 = vrot.slane %v2018, %v2054
  %v2057 = vmul.f32 %v2047, %v2055
  %v2058 = vmul.f32 %v2048, %v2055
  %v2059 = vmul.f32 %v2049, %v2055
  %v2060 = vmul.f32 %v2050, %v2055
  %v2061 = vpack.c.bf16 %v2058, %v2057
  %v2062 = vpack.c.bf16 %v2060, %v2059
  %s2063 = scalar_lea.vmem %s3, 128
  %v2064 = vld [vmem:[%s2063] sm:$0xff]
  %v2065 = vld [vmem:[%s2063 + $0x8] sm:$0xff]
  %v2066 = vld [vmem:[%s2063 + $0x10] sm:$0xff]
  %v2067 = vld [vmem:[%s2063 + $0x18] sm:$0xff]
  %v2068 = vld [vmem:[%s2063 + $0x20] sm:$0xff]
  %v2069 = vld [vmem:[%s2063 + $0x28] sm:$0xff]
  %v2070 = vld [vmem:[%s2063 + $0x30] sm:$0xff]
  %v2071 = vld [vmem:[%s2063 + $0x38] sm:$0xff]
  %v2072 = vld [vmem:[%s2063 + $0x40] sm:$0xff]
  %v2073 = vld [vmem:[%s2063 + $0x48] sm:$0xff]
  %v2074 = vld [vmem:[%s2063 + $0x50] sm:$0xff]
  %v2075 = vld [vmem:[%s2063 + $0x58] sm:$0xff]
  %v2076 = vld [vmem:[%s2063 + $0x60] sm:$0xff]
  %v2077 = vld [vmem:[%s2063 + $0x68] sm:$0xff]
  %v2078 = vld [vmem:[%s2063 + $0x70] sm:$0xff]
  %v2079 = vld [vmem:[%s2063 + $0x78] sm:$0xff]
  %v2080 = vpack.c.bf16 %v2065, %v2064
  %v2081 = vpack.c.bf16 %v2067, %v2066
  %v2082 = vpack.c.bf16 %v2069, %v2068
  %v2083 = vpack.c.bf16 %v2071, %v2070
  %v2084 = vpack.c.bf16 %v2073, %v2072
  %v2085 = vpack.c.bf16 %v2075, %v2074
  %v2086 = vpack.c.bf16 %v2077, %v2076
  %v2087 = vpack.c.bf16 %v2079, %v2078
  %v2089 = vsel %vm50, %v2061, 0
  %2091 = vmatprep.subr.bf16.mxu0 0
  %2092 = vmatpush1.bf16.msra.mxu0 %v2080
  %2093 = vmatprep.subr.bf16.mxu0 0
  %2094 = vmatpush1.bf16.msra.mxu0 %v2081
  %2095 = vmatprep.subr.bf16.mxu0 0
  %2096 = vmatpush1.bf16.msra.mxu0 0
  %2097 = vmatprep.subr.bf16.mxu0 0
  %2098 = vmatpush1.bf16.msra.mxu0 0
  %2099 = vmatprep.subr.bf16.mxu0 0
  %2100 = vmatpush1.bf16.msra.mxu0 0
  %2101 = vmatprep.subr.bf16.mxu0 0
  %2102 = vmatpush1.bf16.msra.mxu0 0
  %2103 = vmatprep.subr.bf16.mxu0 0
  %2104 = vmatpush1.bf16.msra.mxu0 0
  %2105 = vmatprep.subr.bf16.mxu0 0
  %2106 = vmatpush1.bf16.msra.mxu0 0
  %2107 = vmatprep.subr.bf16.mxu0 0
  %2108 = vmatpush1.bf16.msra.mxu0 0
  %2109 = vmatprep.subr.bf16.mxu0 0
  %2110 = vmatpush1.bf16.msra.mxu0 0
  %2111 = vmatprep.subr.bf16.mxu0 0
  %2112 = vmatpush1.bf16.msra.mxu0 0
  %2113 = vmatprep.subr.bf16.mxu0 0
  %2114 = vmatpush1.bf16.msra.mxu0 0
  %2115 = vmatprep.subr.bf16.mxu0 0
  %2116 = vmatpush1.bf16.msra.mxu0 0
  %2117 = vmatprep.subr.bf16.mxu0 0
  %2118 = vmatpush1.bf16.msra.mxu0 0
  %2119 = vmatprep.subr.bf16.mxu0 0
  %2120 = vmatpush1.bf16.msra.mxu0 0
  %2121 = vmatprep.subr.bf16.mxu0 0
  %2122 = vmatpush1.bf16.msra.mxu0 0
  %2123 = vmatprep.mubr.bf16.mxu0 0
  %2124 = vmatmul.mubr.bf16.gmra.mrb[0].mxu0 %v2089
  %v2125 = vpop.f32.mrb[0].mxu0
  %v2126 = vadd.f32 0.0, %v2125
  %v2127 = vpop.f32.mrb[0].mxu0
  %v2128 = vpop.f32.mrb[0].mxu0
  %v2129 = vadd.f32 0.0, %v2128
  %v2130 = vpop.f32.mrb[0].mxu0
  %2131 = vdwg.mxu0
  %2132 = vmatprep.subr.bf16.mxu0 0
  %2133 = vmatpush1.bf16.msra.mxu0 %v2082
  %2134 = vmatprep.subr.bf16.mxu0 0
  %2135 = vmatpush1.bf16.msra.mxu0 %v2083
  %2136 = vmatprep.subr.bf16.mxu0 0
  %2137 = vmatpush1.bf16.msra.mxu0 0
  %2138 = vmatprep.subr.bf16.mxu0 0
  %2139 = vmatpush1.bf16.msra.mxu0 0
  %2140 = vmatprep.subr.bf16.mxu0 0
  %2141 = vmatpush1.bf16.msra.mxu0 0
  %2142 = vmatprep.subr.bf16.mxu0 0
  %2143 = vmatpush1.bf16.msra.mxu0 0
  %2144 = vmatprep.subr.bf16.mxu0 0
  %2145 = vmatpush1.bf16.msra.mxu0 0
  %2146 = vmatprep.subr.bf16.mxu0 0
  %2147 = vmatpush1.bf16.msra.mxu0 0
  %2148 = vmatprep.subr.bf16.mxu0 0
  %2149 = vmatpush1.bf16.msra.mxu0 0
  %2150 = vmatprep.subr.bf16.mxu0 0
  %2151 = vmatpush1.bf16.msra.mxu0 0
  %2152 = vmatprep.subr.bf16.mxu0 0
  %2153 = vmatpush1.bf16.msra.mxu0 0
  %2154 = vmatprep.subr.bf16.mxu0 0
  %2155 = vmatpush1.bf16.msra.mxu0 0
  %2156 = vmatprep.subr.bf16.mxu0 0
  %2157 = vmatpush1.bf16.msra.mxu0 0
  %2158 = vmatprep.subr.bf16.mxu0 0
  %2159 = vmatpush1.bf16.msra.mxu0 0
  %2160 = vmatprep.subr.bf16.mxu0 0
  %2161 = vmatpush1.bf16.msra.mxu0 0
  %2162 = vmatprep.subr.bf16.mxu0 0
  %2163 = vmatpush1.bf16.msra.mxu0 0
  %2164 = vmatprep.mubr.bf16.mxu0 0
  %2165 = vmatmul.mubr.bf16.gmra.mrb[0].mxu0 %v2089
  %v2166 = vpop.f32.mrb[0].mxu0
  %v2167 = vadd.f32 0.0, %v2166
  %v2168 = vpop.f32.mrb[0].mxu0
  %v2169 = vpop.f32.mrb[0].mxu0
  %v2170 = vadd.f32 0.0, %v2169
  %v2171 = vpop.f32.mrb[0].mxu0
  %2172 = vdwg.mxu0
  %2173 = vmatprep.subr.bf16.mxu0 0
  %2174 = vmatpush1.bf16.msra.mxu0 %v2084
  %2175 = vmatprep.subr.bf16.mxu0 0
  %2176 = vmatpush1.bf16.msra.mxu0 %v2085
  %2177 = vmatprep.subr.bf16.mxu0 0
  %2178 = vmatpush1.bf16.msra.mxu0 0
  %2179 = vmatprep.subr.bf16.mxu0 0
  %2180 = vmatpush1.bf16.msra.mxu0 0
  %2181 = vmatprep.subr.bf16.mxu0 0
  %2182 = vmatpush1.bf16.msra.mxu0 0
  %2183 = vmatprep.subr.bf16.mxu0 0
  %2184 = vmatpush1.bf16.msra.mxu0 0
  %2185 = vmatprep.subr.bf16.mxu0 0
  %2186 = vmatpush1.bf16.msra.mxu0 0
  %2187 = vmatprep.subr.bf16.mxu0 0
  %2188 = vmatpush1.bf16.msra.mxu0 0
  %2189 = vmatprep.subr.bf16.mxu0 0
  %2190 = vmatpush1.bf16.msra.mxu0 0
  %2191 = vmatprep.subr.bf16.mxu0 0
  %2192 = vmatpush1.bf16.msra.mxu0 0
  %2193 = vmatprep.subr.bf16.mxu0 0
  %2194 = vmatpush1.bf16.msra.mxu0 0
  %2195 = vmatprep.subr.bf16.mxu0 0
  %2196 = vmatpush1.bf16.msra.mxu0 0
  %2197 = vmatprep.subr.bf16.mxu0 0
  %2198 = vmatpush1.bf16.msra.mxu0 0
  %2199 = vmatprep.subr.bf16.mxu0 0
  %2200 = vmatpush1.bf16.msra.mxu0 0
  %2201 = vmatprep.subr.bf16.mxu0 0
  %2202 = vmatpush1.bf16.msra.mxu0 0
  %2203 = vmatprep.subr.bf16.mxu0 0
  %2204 = vmatpush1.bf16.msra.mxu0 0
  %2205 = vmatprep.mubr.bf16.mxu0 0
  %2206 = vmatmul.mubr.bf16.gmra.mrb[0].mxu0 %v2089
  %v2207 = vpop.f32.mrb[0].mxu0
  %v2208 = vadd.f32 0.0, %v2207
  %v2209 = vpop.f32.mrb[0].mxu0
  %v2210 = vpop.f32.mrb[0].mxu0
  %v2211 = vadd.f32 0.0, %v2210
  %v2212 = vpop.f32.mrb[0].mxu0
  %2213 = vdwg.mxu0
  %2214 = vmatprep.subr.bf16.mxu0 0
  %2215 = vmatpush1.bf16.msra.mxu0 %v2086
  %2216 = vmatprep.subr.bf16.mxu0 0
  %2217 = vmatpush1.bf16.msra.mxu0 %v2087
  %2218 = vmatprep.subr.bf16.mxu0 0
  %2219 = vmatpush1.bf16.msra.mxu0 0
  %2220 = vmatprep.subr.bf16.mxu0 0
  %2221 = vmatpush1.bf16.msra.mxu0 0
  %2222 = vmatprep.subr.bf16.mxu0 0
  %2223 = vmatpush1.bf16.msra.mxu0 0
  %2224 = vmatprep.subr.bf16.mxu0 0
  %2225 = vmatpush1.bf16.msra.mxu0 0
  %2226 = vmatprep.subr.bf16.mxu0 0
  %2227 = vmatpush1.bf16.msra.mxu0 0
  %2228 = vmatprep.subr.bf16.mxu0 0
  %2229 = vmatpush1.bf16.msra.mxu0 0
  %2230 = vmatprep.subr.bf16.mxu0 0
  %2231 = vmatpush1.bf16.msra.mxu0 0
  %2232 = vmatprep.subr.bf16.mxu0 0
  %2233 = vmatpush1.bf16.msra.mxu0 0
  %2234 = vmatprep.subr.bf16.mxu0 0
  %2235 = vmatpush1.bf16.msra.mxu0 0
  %2236 = vmatprep.subr.bf16.mxu0 0
  %2237 = vmatpush1.bf16.msra.mxu0 0
  %2238 = vmatprep.subr.bf16.mxu0 0
  %2239 = vmatpush1.bf16.msra.mxu0 0
  %2240 = vmatprep.subr.bf16.mxu0 0
  %2241 = vmatpush1.bf16.msra.mxu0 0
  %2242 = vmatprep.subr.bf16.mxu0 0
  %2243 = vmatpush1.bf16.msra.mxu0 0
  %2244 = vmatprep.subr.bf16.mxu0 0
  %2245 = vmatpush1.bf16.msra.mxu0 0
  %2246 = vmatprep.mubr.bf16.mxu0 0
  %2247 = vmatmul.mubr.bf16.gmra.mrb[0].mxu0 %v2089
  %v2248 = vpop.f32.mrb[0].mxu0
  %v2249 = vadd.f32 0.0, %v2248
  %v2250 = vpop.f32.mrb[0].mxu0
  %v2251 = vpop.f32.mrb[0].mxu0
  %v2252 = vadd.f32 0.0, %v2251
  %v2253 = vpop.f32.mrb[0].mxu0
  %2254 = vdwg.mxu0
  %v2256 = vsel %vm50, %v2062, 0
  %2258 = vmatprep.subr.bf16.mxu0 0
  %2259 = vmatpush1.bf16.msra.mxu0 %v2080
  %2260 = vmatprep.subr.bf16.mxu0 0
  %2261 = vmatpush1.bf16.msra.mxu0 %v2081
  %2262 = vmatprep.subr.bf16.mxu0 0
  %2263 = vmatpush1.bf16.msra.mxu0 0
  %2264 = vmatprep.subr.bf16.mxu0 0
  %2265 = vmatpush1.bf16.msra.mxu0 0
  %2266 = vmatprep.subr.bf16.mxu0 0
  %2267 = vmatpush1.bf16.msra.mxu0 0
  %2268 = vmatprep.subr.bf16.mxu0 0
  %2269 = vmatpush1.bf16.msra.mxu0 0
  %2270 = vmatprep.subr.bf16.mxu0 0
  %2271 = vmatpush1.bf16.msra.mxu0 0
  %2272 = vmatprep.subr.bf16.mxu0 0
  %2273 = vmatpush1.bf16.msra.mxu0 0
  %2274 = vmatprep.subr.bf16.mxu0 0
  %2275 = vmatpush1.bf16.msra.mxu0 0
  %2276 = vmatprep.subr.bf16.mxu0 0
  %2277 = vmatpush1.bf16.msra.mxu0 0
  %2278 = vmatprep.subr.bf16.mxu0 0
  %2279 = vmatpush1.bf16.msra.mxu0 0
  %2280 = vmatprep.subr.bf16.mxu0 0
  %2281 = vmatpush1.bf16.msra.mxu0 0
  %2282 = vmatprep.subr.bf16.mxu0 0
  %2283 = vmatpush1.bf16.msra.mxu0 0
  %2284 = vmatprep.subr.bf16.mxu0 0
  %2285 = vmatpush1.bf16.msra.mxu0 0
  %2286 = vmatprep.subr.bf16.mxu0 0
  %2287 = vmatpush1.bf16.msra.mxu0 0
  %2288 = vmatprep.subr.bf16.mxu0 0
  %2289 = vmatpush1.bf16.msra.mxu0 0
  %2290 = vmatprep.mubr.bf16.mxu0 0
  %2291 = vmatmul.mubr.bf16.gmra.mrb[0].mxu0 %v2256
  %v2292 = vpop.f32.mrb[0].mxu0
  %v2293 = vadd.f32 0.0, %v2292
  %v2294 = vpop.f32.mrb[0].mxu0
  %v2295 = vpop.f32.mrb[0].mxu0
  %v2296 = vadd.f32 0.0, %v2295
  %v2297 = vpop.f32.mrb[0].mxu0
  %2298 = vdwg.mxu0
  %2299 = vmatprep.subr.bf16.mxu0 0
  %2300 = vmatpush1.bf16.msra.mxu0 %v2082
  %2301 = vmatprep.subr.bf16.mxu0 0
  %2302 = vmatpush1.bf16.msra.mxu0 %v2083
  %2303 = vmatprep.subr.bf16.mxu0 0
  %2304 = vmatpush1.bf16.msra.mxu0 0
  %2305 = vmatprep.subr.bf16.mxu0 0
  %2306 = vmatpush1.bf16.msra.mxu0 0
  %2307 = vmatprep.subr.bf16.mxu0 0
  %2308 = vmatpush1.bf16.msra.mxu0 0
  %2309 = vmatprep.subr.bf16.mxu0 0
  %2310 = vmatpush1.bf16.msra.mxu0 0
  %2311 = vmatprep.subr.bf16.mxu0 0
  %2312 = vmatpush1.bf16.msra.mxu0 0
  %2313 = vmatprep.subr.bf16.mxu0 0
  %2314 = vmatpush1.bf16.msra.mxu0 0
  %2315 = vmatprep.subr.bf16.mxu0 0
  %2316 = vmatpush1.bf16.msra.mxu0 0
  %2317 = vmatprep.subr.bf16.mxu0 0
  %2318 = vmatpush1.bf16.msra.mxu0 0
  %2319 = vmatprep.subr.bf16.mxu0 0
  %2320 = vmatpush1.bf16.msra.mxu0 0
  %2321 = vmatprep.subr.bf16.mxu0 0
  %2322 = vmatpush1.bf16.msra.mxu0 0
  %2323 = vmatprep.subr.bf16.mxu0 0
  %2324 = vmatpush1.bf16.msra.mxu0 0
  %2325 = vmatprep.subr.bf16.mxu0 0
  %2326 = vmatpush1.bf16.msra.mxu0 0
  %2327 = vmatprep.subr.bf16.mxu0 0
  %2328 = vmatpush1.bf16.msra.mxu0 0
  %2329 = vmatprep.subr.bf16.mxu0 0
  %2330 = vmatpush1.bf16.msra.mxu0 0
  %2331 = vmatprep.mubr.bf16.mxu0 0
  %2332 = vmatmul.mubr.bf16.gmra.mrb[0].mxu0 %v2256
  %v2333 = vpop.f32.mrb[0].mxu0
  %v2334 = vadd.f32 0.0, %v2333
  %v2335 = vpop.f32.mrb[0].mxu0
  %v2336 = vpop.f32.mrb[0].mxu0
  %v2337 = vadd.f32 0.0, %v2336
  %v2338 = vpop.f32.mrb[0].mxu0
  %2339 = vdwg.mxu0
  %2340 = vmatprep.subr.bf16.mxu0 0
  %2341 = vmatpush1.bf16.msra.mxu0 %v2084
  %2342 = vmatprep.subr.bf16.mxu0 0
  %2343 = vmatpush1.bf16.msra.mxu0 %v2085
  %2344 = vmatprep.subr.bf16.mxu0 0
  %2345 = vmatpush1.bf16.msra.mxu0 0
  %2346 = vmatprep.subr.bf16.mxu0 0
  %2347 = vmatpush1.bf16.msra.mxu0 0
  %2348 = vmatprep.subr.bf16.mxu0 0
  %2349 = vmatpush1.bf16.msra.mxu0 0
  %2350 = vmatprep.subr.bf16.mxu0 0
  %2351 = vmatpush1.bf16.msra.mxu0 0
  %2352 = vmatprep.subr.bf16.mxu0 0
  %2353 = vmatpush1.bf16.msra.mxu0 0
  %2354 = vmatprep.subr.bf16.mxu0 0
  %2355 = vmatpush1.bf16.msra.mxu0 0
  %2356 = vmatprep.subr.bf16.mxu0 0
  %2357 = vmatpush1.bf16.msra.mxu0 0
  %2358 = vmatprep.subr.bf16.mxu0 0
  %2359 = vmatpush1.bf16.msra.mxu0 0
  %2360 = vmatprep.subr.bf16.mxu0 0
  %2361 = vmatpush1.bf16.msra.mxu0 0
  %2362 = vmatprep.subr.bf16.mxu0 0
  %2363 = vmatpush1.bf16.msra.mxu0 0
  %2364 = vmatprep.subr.bf16.mxu0 0
  %2365 = vmatpush1.bf16.msra.mxu0 0
  %2366 = vmatprep.subr.bf16.mxu0 0
  %2367 = vmatpush1.bf16.msra.mxu0 0
  %2368 = vmatprep.subr.bf16.mxu0 0
  %2369 = vmatpush1.bf16.msra.mxu0 0
  %2370 = vmatprep.subr.bf16.mxu0 0
  %2371 = vmatpush1.bf16.msra.mxu0 0
  %2372 = vmatprep.mubr.bf16.mxu0 0
  %2373 = vmatmul.mubr.bf16.gmra.mrb[0].mxu0 %v2256
  %v2374 = vpop.f32.mrb[0].mxu0
  %v2375 = vadd.f32 0.0, %v2374
  %v2376 = vpop.f32.mrb[0].mxu0
  %v2377 = vpop.f32.mrb[0].mxu0
  %v2378 = vadd.f32 0.0, %v2377
  %v2379 = vpop.f32.mrb[0].mxu0
  %2380 = vdwg.mxu0
  %2381 = vmatprep.subr.bf16.mxu0 0
  %2382 = vmatpush1.bf16.msra.mxu0 %v2086
  %2383 = vmatprep.subr.bf16.mxu0 0
  %2384 = vmatpush1.bf16.msra.mxu0 %v2087
  %2385 = vmatprep.subr.bf16.mxu0 0
  %2386 = vmatpush1.bf16.msra.mxu0 0
  %2387 = vmatprep.subr.bf16.mxu0 0
  %2388 = vmatpush1.bf16.msra.mxu0 0
  %2389 = vmatprep.subr.bf16.mxu0 0
  %2390 = vmatpush1.bf16.msra.mxu0 0
  %2391 = vmatprep.subr.bf16.mxu0 0
  %2392 = vmatpush1.bf16.msra.mxu0 0
  %2393 = vmatprep.subr.bf16.mxu0 0
  %2394 = vmatpush1.bf16.msra.mxu0 0
  %2395 = vmatprep.subr.bf16.mxu0 0
  %2396 = vmatpush1.bf16.msra.mxu0 0
  %2397 = vmatprep.subr.bf16.mxu0 0
  %2398 = vmatpush1.bf16.msra.mxu0 0
  %2399 = vmatprep.subr.bf16.mxu0 0
  %2400 = vmatpush1.bf16.msra.mxu0 0
  %2401 = vmatprep.subr.bf16.mxu0 0
  %2402 = vmatpush1.bf16.msra.mxu0 0
  %2403 = vmatprep.subr.bf16.mxu0 0
  %2404 = vmatpush1.bf16.msra.mxu0 0
  %2405 = vmatprep.subr.bf16.mxu0 0
  %2406 = vmatpush1.bf16.msra.mxu0 0
  %2407 = vmatprep.subr.bf16.mxu0 0
  %2408 = vmatpush1.bf16.msra.mxu0 0
  %2409 = vmatprep.subr.bf16.mxu0 0
  %2410 = vmatpush1.bf16.msra.mxu0 0
  %2411 = vmatprep.subr.bf16.mxu0 0
  %2412 = vmatpush1.bf16.msra.mxu0 0
  %2413 = vmatprep.mubr.bf16.mxu0 0
  %2414 = vmatmul.mubr.bf16.gmra.mrb[0].mxu0 %v2256
  %v2415 = vpop.f32.mrb[0].mxu0
  %v2416 = vadd.f32 0.0, %v2415
  %v2417 = vpop.f32.mrb[0].mxu0
  %v2418 = vpop.f32.mrb[0].mxu0
  %v2419 = vadd.f32 0.0, %v2418
  %v2420 = vpop.f32.mrb[0].mxu0
  %2421 = vdwg.mxu0
  %v2422 = vpack.c.bf16 %v2129, %v2126
  %v2423 = vpack.c.bf16 %v2170, %v2167
  %v2424 = vpack.c.bf16 %v2211, %v2208
  %v2425 = vpack.c.bf16 %v2252, %v2249
  %v2426 = vpack.c.bf16 %v2296, %v2293
  %v2427 = vpack.c.bf16 %v2337, %v2334
  %v2428 = vpack.c.bf16 %v2378, %v2375
  %v2429 = vpack.c.bf16 %v2419, %v2416
  %2431 = vrot.lane.b32.xlu0 %v2422, 120
  %v2432 = vpop.permute.xlu0 %2431
  %v2434 = vsel %vm461, %v2422, 0
  %v2437 = vsel %vm461, %v2432, 0
  %2439 = vmatprep.subr.bf16.mxu0 0
  %2440 = vmatpush1.bf16.xpose.msra.mxu0 %v2437
  %2441 = vmatprep.subr.bf16.mxu0 0
  %2442 = vmatpush1.bf16.xpose.msra.mxu0 0
  %2443 = vmatprep.subr.bf16.mxu0 0
  %2444 = vmatpush1.bf16.xpose.msra.mxu0 0
  %2445 = vmatprep.subr.bf16.mxu0 0
  %2446 = vmatpush1.bf16.xpose.msra.mxu0 0
  %2447 = vmatprep.subr.bf16.mxu0 0
  %2448 = vmatpush1.bf16.xpose.msra.mxu0 0
  %2449 = vmatprep.subr.bf16.mxu0 0
  %2450 = vmatpush1.bf16.xpose.msra.mxu0 0
  %2451 = vmatprep.subr.bf16.mxu0 0
  %2452 = vmatpush1.bf16.xpose.msra.mxu0 0
  %2453 = vmatprep.subr.bf16.mxu0 0
  %2454 = vmatpush1.bf16.xpose.msra.mxu0 0
  %2455 = vmatprep.subr.bf16.mxu0 0
  %2456 = vmatpush1.bf16.xpose.msra.mxu0 0
  %2457 = vmatprep.subr.bf16.mxu0 0
  %2458 = vmatpush1.bf16.xpose.msra.mxu0 0
  %2459 = vmatprep.subr.bf16.mxu0 0
  %2460 = vmatpush1.bf16.xpose.msra.mxu0 0
  %2461 = vmatprep.subr.bf16.mxu0 0
  %2462 = vmatpush1.bf16.xpose.msra.mxu0 0
  %2463 = vmatprep.subr.bf16.mxu0 0
  %2464 = vmatpush1.bf16.xpose.msra.mxu0 0
  %2465 = vmatprep.subr.bf16.mxu0 0
  %2466 = vmatpush1.bf16.xpose.msra.mxu0 0
  %2467 = vmatprep.subr.bf16.mxu0 0
  %2468 = vmatpush1.bf16.xpose.msra.mxu0 0
  %2469 = vmatprep.subr.bf16.mxu0 0
  %2470 = vmatpush1.bf16.xpose.msra.mxu0 0
  %2471 = vmatprep.mubr.bf16.mxu0 0
  %2472 = vmatmul.mubr.bf16.gmra.mrb[0].mxu0 %v2434
  %v2473 = vpop.f32.mrb[0].mxu0
  %v2474 = vadd.f32 %v37, %v2473
  %v2475 = vpop.f32.mrb[0].mxu0
  %v2476 = vpop.f32.mrb[0].mxu0
  %v2477 = vadd.f32 %v38, %v2476
  %v2478 = vpop.f32.mrb[0].mxu0
  %2479 = vdwg.mxu0
  %2481 = vrot.lane.b32.xlu0 %v2423, 120
  %v2482 = vpop.permute.xlu0 %2481
  %v2484 = vsel %vm461, %v2423, 0
  %v2487 = vsel %vm461, %v2482, 0
  %2489 = vmatprep.subr.bf16.mxu0 0
  %2490 = vmatpush1.bf16.xpose.msra.mxu0 %v2487
  %2491 = vmatprep.subr.bf16.mxu0 0
  %2492 = vmatpush1.bf16.xpose.msra.mxu0 0
  %2493 = vmatprep.subr.bf16.mxu0 0
  %2494 = vmatpush1.bf16.xpose.msra.mxu0 0
  %2495 = vmatprep.subr.bf16.mxu0 0
  %2496 = vmatpush1.bf16.xpose.msra.mxu0 0
  %2497 = vmatprep.subr.bf16.mxu0 0
  %2498 = vmatpush1.bf16.xpose.msra.mxu0 0
  %2499 = vmatprep.subr.bf16.mxu0 0
  %2500 = vmatpush1.bf16.xpose.msra.mxu0 0
  %2501 = vmatprep.subr.bf16.mxu0 0
  %2502 = vmatpush1.bf16.xpose.msra.mxu0 0
  %2503 = vmatprep.subr.bf16.mxu0 0
  %2504 = vmatpush1.bf16.xpose.msra.mxu0 0
  %2505 = vmatprep.subr.bf16.mxu0 0
  %2506 = vmatpush1.bf16.xpose.msra.mxu0 0
  %2507 = vmatprep.subr.bf16.mxu0 0
  %2508 = vmatpush1.bf16.xpose.msra.mxu0 0
  %2509 = vmatprep.subr.bf16.mxu0 0
  %2510 = vmatpush1.bf16.xpose.msra.mxu0 0
  %2511 = vmatprep.subr.bf16.mxu0 0
  %2512 = vmatpush1.bf16.xpose.msra.mxu0 0
  %2513 = vmatprep.subr.bf16.mxu0 0
  %2514 = vmatpush1.bf16.xpose.msra.mxu0 0
  %2515 = vmatprep.subr.bf16.mxu0 0
  %2516 = vmatpush1.bf16.xpose.msra.mxu0 0
  %2517 = vmatprep.subr.bf16.mxu0 0
  %2518 = vmatpush1.bf16.xpose.msra.mxu0 0
  %2519 = vmatprep.subr.bf16.mxu0 0
  %2520 = vmatpush1.bf16.xpose.msra.mxu0 0
  %2521 = vmatprep.mubr.bf16.mxu0 0
  %2522 = vmatmul.mubr.bf16.gmra.mrb[0].mxu0 %v2484
  %v2523 = vpop.f32.mrb[0].mxu0
  %v2524 = vadd.f32 %v39, %v2523
  %v2525 = vpop.f32.mrb[0].mxu0
  %v2526 = vpop.f32.mrb[0].mxu0
  %v2527 = vadd.f32 %v40, %v2526
  %v2528 = vpop.f32.mrb[0].mxu0
  %2529 = vdwg.mxu0
  %2531 = vrot.lane.b32.xlu0 %v2424, 120
  %v2532 = vpop.permute.xlu0 %2531
  %v2534 = vsel %vm461, %v2424, 0
  %v2537 = vsel %vm461, %v2532, 0
  %2539 = vmatprep.subr.bf16.mxu0 0
  %2540 = vmatpush1.bf16.xpose.msra.mxu0 %v2537
  %2541 = vmatprep.subr.bf16.mxu0 0
  %2542 = vmatpush1.bf16.xpose.msra.mxu0 0
  %2543 = vmatprep.subr.bf16.mxu0 0
  %2544 = vmatpush1.bf16.xpose.msra.mxu0 0
  %2545 = vmatprep.subr.bf16.mxu0 0
  %2546 = vmatpush1.bf16.xpose.msra.mxu0 0
  %2547 = vmatprep.subr.bf16.mxu0 0
  %2548 = vmatpush1.bf16.xpose.msra.mxu0 0
  %2549 = vmatprep.subr.bf16.mxu0 0
  %2550 = vmatpush1.bf16.xpose.msra.mxu0 0
  %2551 = vmatprep.subr.bf16.mxu0 0
  %2552 = vmatpush1.bf16.xpose.msra.mxu0 0
  %2553 = vmatprep.subr.bf16.mxu0 0
  %2554 = vmatpush1.bf16.xpose.msra.mxu0 0
  %2555 = vmatprep.subr.bf16.mxu0 0
  %2556 = vmatpush1.bf16.xpose.msra.mxu0 0
  %2557 = vmatprep.subr.bf16.mxu0 0
  %2558 = vmatpush1.bf16.xpose.msra.mxu0 0
  %2559 = vmatprep.subr.bf16.mxu0 0
  %2560 = vmatpush1.bf16.xpose.msra.mxu0 0
  %2561 = vmatprep.subr.bf16.mxu0 0
  %2562 = vmatpush1.bf16.xpose.msra.mxu0 0
  %2563 = vmatprep.subr.bf16.mxu0 0
  %2564 = vmatpush1.bf16.xpose.msra.mxu0 0
  %2565 = vmatprep.subr.bf16.mxu0 0
  %2566 = vmatpush1.bf16.xpose.msra.mxu0 0
  %2567 = vmatprep.subr.bf16.mxu0 0
  %2568 = vmatpush1.bf16.xpose.msra.mxu0 0
  %2569 = vmatprep.subr.bf16.mxu0 0
  %2570 = vmatpush1.bf16.xpose.msra.mxu0 0
  %2571 = vmatprep.mubr.bf16.mxu0 0
  %2572 = vmatmul.mubr.bf16.gmra.mrb[0].mxu0 %v2534
  %v2573 = vpop.f32.mrb[0].mxu0
  %v2574 = vadd.f32 %v41, %v2573
  %v2575 = vpop.f32.mrb[0].mxu0
  %v2576 = vpop.f32.mrb[0].mxu0
  %v2577 = vadd.f32 %v42, %v2576
  %v2578 = vpop.f32.mrb[0].mxu0
  %2579 = vdwg.mxu0
  %2581 = vrot.lane.b32.xlu0 %v2425, 120
  %v2582 = vpop.permute.xlu0 %2581
  %v2584 = vsel %vm461, %v2425, 0
  %v2587 = vsel %vm461, %v2582, 0
  %2589 = vmatprep.subr.bf16.mxu0 0
  %2590 = vmatpush1.bf16.xpose.msra.mxu0 %v2587
  %2591 = vmatprep.subr.bf16.mxu0 0
  %2592 = vmatpush1.bf16.xpose.msra.mxu0 0
  %2593 = vmatprep.subr.bf16.mxu0 0
  %2594 = vmatpush1.bf16.xpose.msra.mxu0 0
  %2595 = vmatprep.subr.bf16.mxu0 0
  %2596 = vmatpush1.bf16.xpose.msra.mxu0 0
  %2597 = vmatprep.subr.bf16.mxu0 0
  %2598 = vmatpush1.bf16.xpose.msra.mxu0 0
  %2599 = vmatprep.subr.bf16.mxu0 0
  %2600 = vmatpush1.bf16.xpose.msra.mxu0 0
  %2601 = vmatprep.subr.bf16.mxu0 0
  %2602 = vmatpush1.bf16.xpose.msra.mxu0 0
  %2603 = vmatprep.subr.bf16.mxu0 0
  %2604 = vmatpush1.bf16.xpose.msra.mxu0 0
  %2605 = vmatprep.subr.bf16.mxu0 0
  %2606 = vmatpush1.bf16.xpose.msra.mxu0 0
  %2607 = vmatprep.subr.bf16.mxu0 0
  %2608 = vmatpush1.bf16.xpose.msra.mxu0 0
  %2609 = vmatprep.subr.bf16.mxu0 0
  %2610 = vmatpush1.bf16.xpose.msra.mxu0 0
  %2611 = vmatprep.subr.bf16.mxu0 0
  %2612 = vmatpush1.bf16.xpose.msra.mxu0 0
  %2613 = vmatprep.subr.bf16.mxu0 0
  %2614 = vmatpush1.bf16.xpose.msra.mxu0 0
  %2615 = vmatprep.subr.bf16.mxu0 0
  %2616 = vmatpush1.bf16.xpose.msra.mxu0 0
  %2617 = vmatprep.subr.bf16.mxu0 0
  %2618 = vmatpush1.bf16.xpose.msra.mxu0 0
  %2619 = vmatprep.subr.bf16.mxu0 0
  %2620 = vmatpush1.bf16.xpose.msra.mxu0 0
  %2621 = vmatprep.mubr.bf16.mxu0 0
  %2622 = vmatmul.mubr.bf16.gmra.mrb[0].mxu0 %v2584
  %v2623 = vpop.f32.mrb[0].mxu0
  %v2624 = vadd.f32 %v43, %v2623
  %v2625 = vpop.f32.mrb[0].mxu0
  %v2626 = vpop.f32.mrb[0].mxu0
  %v2627 = vadd.f32 %v44, %v2626
  %v2628 = vpop.f32.mrb[0].mxu0
  %2629 = vdwg.mxu0
  %2631 = vrot.lane.b32.xlu0 %v2426, 120
  %v2632 = vpop.permute.xlu0 %2631
  %v2634 = vsel %vm461, %v2426, 0
  %v2637 = vsel %vm461, %v2632, 0
  %2639 = vmatprep.subr.bf16.mxu0 0
  %2640 = vmatpush1.bf16.xpose.msra.mxu0 %v2637
  %2641 = vmatprep.subr.bf16.mxu0 0
  %2642 = vmatpush1.bf16.xpose.msra.mxu0 0
  %2643 = vmatprep.subr.bf16.mxu0 0
  %2644 = vmatpush1.bf16.xpose.msra.mxu0 0
  %2645 = vmatprep.subr.bf16.mxu0 0
  %2646 = vmatpush1.bf16.xpose.msra.mxu0 0
  %2647 = vmatprep.subr.bf16.mxu0 0
  %2648 = vmatpush1.bf16.xpose.msra.mxu0 0
  %2649 = vmatprep.subr.bf16.mxu0 0
  %2650 = vmatpush1.bf16.xpose.msra.mxu0 0
  %2651 = vmatprep.subr.bf16.mxu0 0
  %2652 = vmatpush1.bf16.xpose.msra.mxu0 0
  %2653 = vmatprep.subr.bf16.mxu0 0
  %2654 = vmatpush1.bf16.xpose.msra.mxu0 0
  %2655 = vmatprep.subr.bf16.mxu0 0
  %2656 = vmatpush1.bf16.xpose.msra.mxu0 0
  %2657 = vmatprep.subr.bf16.mxu0 0
  %2658 = vmatpush1.bf16.xpose.msra.mxu0 0
  %2659 = vmatprep.subr.bf16.mxu0 0
  %2660 = vmatpush1.bf16.xpose.msra.mxu0 0
  %2661 = vmatprep.subr.bf16.mxu0 0
  %2662 = vmatpush1.bf16.xpose.msra.mxu0 0
  %2663 = vmatprep.subr.bf16.mxu0 0
  %2664 = vmatpush1.bf16.xpose.msra.mxu0 0
  %2665 = vmatprep.subr.bf16.mxu0 0
  %2666 = vmatpush1.bf16.xpose.msra.mxu0 0
  %2667 = vmatprep.subr.bf16.mxu0 0
  %2668 = vmatpush1.bf16.xpose.msra.mxu0 0
  %2669 = vmatprep.subr.bf16.mxu0 0
  %2670 = vmatpush1.bf16.xpose.msra.mxu0 0
  %2671 = vmatprep.mubr.bf16.mxu0 0
  %2672 = vmatmul.mubr.bf16.gmra.mrb[0].mxu0 %v2634
  %v2673 = vpop.f32.mrb[0].mxu0
  %v2674 = vadd.f32 %v37, %v2673
  %v2675 = vpop.f32.mrb[0].mxu0
  %v2676 = vpop.f32.mrb[0].mxu0
  %v2677 = vadd.f32 %v38, %v2676
  %v2678 = vpop.f32.mrb[0].mxu0
  %2679 = vdwg.mxu0
  %2681 = vrot.lane.b32.xlu0 %v2427, 120
  %v2682 = vpop.permute.xlu0 %2681
  %v2684 = vsel %vm461, %v2427, 0
  %v2687 = vsel %vm461, %v2682, 0
  %2689 = vmatprep.subr.bf16.mxu0 0
  %2690 = vmatpush1.bf16.xpose.msra.mxu0 %v2687
  %2691 = vmatprep.subr.bf16.mxu0 0
  %2692 = vmatpush1.bf16.xpose.msra.mxu0 0
  %2693 = vmatprep.subr.bf16.mxu0 0
  %2694 = vmatpush1.bf16.xpose.msra.mxu0 0
  %2695 = vmatprep.subr.bf16.mxu0 0
  %2696 = vmatpush1.bf16.xpose.msra.mxu0 0
  %2697 = vmatprep.subr.bf16.mxu0 0
  %2698 = vmatpush1.bf16.xpose.msra.mxu0 0
  %2699 = vmatprep.subr.bf16.mxu0 0
  %2700 = vmatpush1.bf16.xpose.msra.mxu0 0
  %2701 = vmatprep.subr.bf16.mxu0 0
  %2702 = vmatpush1.bf16.xpose.msra.mxu0 0
  %2703 = vmatprep.subr.bf16.mxu0 0
  %2704 = vmatpush1.bf16.xpose.msra.mxu0 0
  %2705 = vmatprep.subr.bf16.mxu0 0
  %2706 = vmatpush1.bf16.xpose.msra.mxu0 0
  %2707 = vmatprep.subr.bf16.mxu0 0
  %2708 = vmatpush1.bf16.xpose.msra.mxu0 0
  %2709 = vmatprep.subr.bf16.mxu0 0
  %2710 = vmatpush1.bf16.xpose.msra.mxu0 0
  %2711 = vmatprep.subr.bf16.mxu0 0
  %2712 = vmatpush1.bf16.xpose.msra.mxu0 0
  %2713 = vmatprep.subr.bf16.mxu0 0
  %2714 = vmatpush1.bf16.xpose.msra.mxu0 0
  %2715 = vmatprep.subr.bf16.mxu0 0
  %2716 = vmatpush1.bf16.xpose.msra.mxu0 0
  %2717 = vmatprep.subr.bf16.mxu0 0
  %2718 = vmatpush1.bf16.xpose.msra.mxu0 0
  %2719 = vmatprep.subr.bf16.mxu0 0
  %2720 = vmatpush1.bf16.xpose.msra.mxu0 0
  %2721 = vmatprep.mubr.bf16.mxu0 0
  %2722 = vmatmul.mubr.bf16.gmra.mrb[0].mxu0 %v2684
  %v2723 = vpop.f32.mrb[0].mxu0
  %v2724 = vadd.f32 %v39, %v2723
  %v2725 = vpop.f32.mrb[0].mxu0
  %v2726 = vpop.f32.mrb[0].mxu0
  %v2727 = vadd.f32 %v40, %v2726
  %v2728 = vpop.f32.mrb[0].mxu0
  %2729 = vdwg.mxu0
  %2731 = vrot.lane.b32.xlu0 %v2428, 120
  %v2732 = vpop.permute.xlu0 %2731
  %v2734 = vsel %vm461, %v2428, 0
  %v2737 = vsel %vm461, %v2732, 0
  %2739 = vmatprep.subr.bf16.mxu0 0
  %2740 = vmatpush1.bf16.xpose.msra.mxu0 %v2737
  %2741 = vmatprep.subr.bf16.mxu0 0
  %2742 = vmatpush1.bf16.xpose.msra.mxu0 0
  %2743 = vmatprep.subr.bf16.mxu0 0
  %2744 = vmatpush1.bf16.xpose.msra.mxu0 0
  %2745 = vmatprep.subr.bf16.mxu0 0
  %2746 = vmatpush1.bf16.xpose.msra.mxu0 0
  %2747 = vmatprep.subr.bf16.mxu0 0
  %2748 = vmatpush1.bf16.xpose.msra.mxu0 0
  %2749 = vmatprep.subr.bf16.mxu0 0
  %2750 = vmatpush1.bf16.xpose.msra.mxu0 0
  %2751 = vmatprep.subr.bf16.mxu0 0
  %2752 = vmatpush1.bf16.xpose.msra.mxu0 0
  %2753 = vmatprep.subr.bf16.mxu0 0
  %2754 = vmatpush1.bf16.xpose.msra.mxu0 0
  %2755 = vmatprep.subr.bf16.mxu0 0
  %2756 = vmatpush1.bf16.xpose.msra.mxu0 0
  %2757 = vmatprep.subr.bf16.mxu0 0
  %2758 = vmatpush1.bf16.xpose.msra.mxu0 0
  %2759 = vmatprep.subr.bf16.mxu0 0
  %2760 = vmatpush1.bf16.xpose.msra.mxu0 0
  %2761 = vmatprep.subr.bf16.mxu0 0
  %2762 = vmatpush1.bf16.xpose.msra.mxu0 0
  %2763 = vmatprep.subr.bf16.mxu0 0
  %2764 = vmatpush1.bf16.xpose.msra.mxu0 0
  %2765 = vmatprep.subr.bf16.mxu0 0
  %2766 = vmatpush1.bf16.xpose.msra.mxu0 0
  %2767 = vmatprep.subr.bf16.mxu0 0
  %2768 = vmatpush1.bf16.xpose.msra.mxu0 0
  %2769 = vmatprep.subr.bf16.mxu0 0
  %2770 = vmatpush1.bf16.xpose.msra.mxu0 0
  %2771 = vmatprep.mubr.bf16.mxu0 0
  %2772 = vmatmul.mubr.bf16.gmra.mrb[0].mxu0 %v2734
  %v2773 = vpop.f32.mrb[0].mxu0
  %v2774 = vadd.f32 %v41, %v2773
  %v2775 = vpop.f32.mrb[0].mxu0
  %v2776 = vpop.f32.mrb[0].mxu0
  %v2777 = vadd.f32 %v42, %v2776
  %v2778 = vpop.f32.mrb[0].mxu0
  %2779 = vdwg.mxu0
  %2781 = vrot.lane.b32.xlu0 %v2429, 120
  %v2782 = vpop.permute.xlu0 %2781
  %v2784 = vsel %vm461, %v2429, 0
  %v2787 = vsel %vm461, %v2782, 0
  %2789 = vmatprep.subr.bf16.mxu0 0
  %2790 = vmatpush1.bf16.xpose.msra.mxu0 %v2787
  %2791 = vmatprep.subr.bf16.mxu0 0
  %2792 = vmatpush1.bf16.xpose.msra.mxu0 0
  %2793 = vmatprep.subr.bf16.mxu0 0
  %2794 = vmatpush1.bf16.xpose.msra.mxu0 0
  %2795 = vmatprep.subr.bf16.mxu0 0
  %2796 = vmatpush1.bf16.xpose.msra.mxu0 0
  %2797 = vmatprep.subr.bf16.mxu0 0
  %2798 = vmatpush1.bf16.xpose.msra.mxu0 0
  %2799 = vmatprep.subr.bf16.mxu0 0
  %2800 = vmatpush1.bf16.xpose.msra.mxu0 0
  %2801 = vmatprep.subr.bf16.mxu0 0
  %2802 = vmatpush1.bf16.xpose.msra.mxu0 0
  %2803 = vmatprep.subr.bf16.mxu0 0
  %2804 = vmatpush1.bf16.xpose.msra.mxu0 0
  %2805 = vmatprep.subr.bf16.mxu0 0
  %2806 = vmatpush1.bf16.xpose.msra.mxu0 0
  %2807 = vmatprep.subr.bf16.mxu0 0
  %2808 = vmatpush1.bf16.xpose.msra.mxu0 0
  %2809 = vmatprep.subr.bf16.mxu0 0
  %2810 = vmatpush1.bf16.xpose.msra.mxu0 0
  %2811 = vmatprep.subr.bf16.mxu0 0
  %2812 = vmatpush1.bf16.xpose.msra.mxu0 0
  %2813 = vmatprep.subr.bf16.mxu0 0
  %2814 = vmatpush1.bf16.xpose.msra.mxu0 0
  %2815 = vmatprep.subr.bf16.mxu0 0
  %2816 = vmatpush1.bf16.xpose.msra.mxu0 0
  %2817 = vmatprep.subr.bf16.mxu0 0
  %2818 = vmatpush1.bf16.xpose.msra.mxu0 0
  %2819 = vmatprep.subr.bf16.mxu0 0
  %2820 = vmatpush1.bf16.xpose.msra.mxu0 0
  %2821 = vmatprep.mubr.bf16.mxu0 0
  %2822 = vmatmul.mubr.bf16.gmra.mrb[0].mxu0 %v2784
  %v2823 = vpop.f32.mrb[0].mxu0
  %v2824 = vadd.f32 %v43, %v2823
  %v2825 = vpop.f32.mrb[0].mxu0
  %v2826 = vpop.f32.mrb[0].mxu0
  %v2827 = vadd.f32 %v44, %v2826
  %v2828 = vpop.f32.mrb[0].mxu0
  %2829 = vdwg.mxu0
  %v2830 = vsel %vm859, %v2474, -inf
  %2831 = vmax.xlane.f32.xlu0 %v2830
  %v2832 = vpop.xlane.xlu0 %2831
  %v2833 = vsel %vm859, %v2477, -inf
  %2834 = vmax.xlane.f32.xlu0 %v2833
  %v2835 = vpop.xlane.xlu0 %2834
  %v2836 = vsel %vm859, %v2524, -inf
  %2837 = vmax.xlane.f32.xlu0 %v2836
  %v2838 = vpop.xlane.xlu0 %2837
  %v2839 = vsel %vm859, %v2527, -inf
  %2840 = vmax.xlane.f32.xlu0 %v2839
  %v2841 = vpop.xlane.xlu0 %2840
  %v2842 = vsel %vm859, %v2574, -inf
  %2843 = vmax.xlane.f32.xlu0 %v2842
  %v2844 = vpop.xlane.xlu0 %2843
  %v2845 = vsel %vm859, %v2577, -inf
  %2846 = vmax.xlane.f32.xlu0 %v2845
  %v2847 = vpop.xlane.xlu0 %2846
  %v2848 = vsel %vm859, %v2624, -inf
  %2849 = vmax.xlane.f32.xlu0 %v2848
  %v2850 = vpop.xlane.xlu0 %2849
  %v2851 = vsel %vm859, %v2627, -inf
  %2852 = vmax.xlane.f32.xlu0 %v2851
  %v2853 = vpop.xlane.xlu0 %2852
  %v2854 = vsel %vm859, %v2674, -inf
  %2855 = vmax.xlane.f32.xlu0 %v2854
  %v2856 = vpop.xlane.xlu0 %2855
  %v2857 = vsel %vm859, %v2677, -inf
  %2858 = vmax.xlane.f32.xlu0 %v2857
  %v2859 = vpop.xlane.xlu0 %2858
  %v2860 = vsel %vm859, %v2724, -inf
  %2861 = vmax.xlane.f32.xlu0 %v2860
  %v2862 = vpop.xlane.xlu0 %2861
  %v2863 = vsel %vm859, %v2727, -inf
  %2864 = vmax.xlane.f32.xlu0 %v2863
  %v2865 = vpop.xlane.xlu0 %2864
  %v2866 = vsel %vm859, %v2774, -inf
  %2867 = vmax.xlane.f32.xlu0 %v2866
  %v2868 = vpop.xlane.xlu0 %2867
  %v2869 = vsel %vm859, %v2777, -inf
  %2870 = vmax.xlane.f32.xlu0 %v2869
  %v2871 = vpop.xlane.xlu0 %2870
  %v2872 = vsel %vm859, %v2824, -inf
  %2873 = vmax.xlane.f32.xlu0 %v2872
  %v2874 = vpop.xlane.xlu0 %2873
  %v2875 = vsel %vm859, %v2827, -inf
  %2876 = vmax.xlane.f32.xlu0 %v2875
  %v2877 = vpop.xlane.xlu0 %2876
  %v2878 = vsub.f32 %v2474, %v2832
  %v2879 = vsub.f32 %v2477, %v2835
  %v2880 = vsub.f32 %v2524, %v2838
  %v2881 = vsub.f32 %v2527, %v2841
  %v2882 = vsub.f32 %v2574, %v2844
  %v2883 = vsub.f32 %v2577, %v2847
  %v2884 = vsub.f32 %v2624, %v2850
  %v2885 = vsub.f32 %v2627, %v2853
  %v2886 = vsub.f32 %v2674, %v2856
  %v2887 = vsub.f32 %v2677, %v2859
  %v2888 = vsub.f32 %v2724, %v2862
  %v2889 = vsub.f32 %v2727, %v2865
  %v2890 = vsub.f32 %v2774, %v2868
  %v2891 = vsub.f32 %v2777, %v2871
  %v2892 = vsub.f32 %v2824, %v2874
  %v2893 = vsub.f32 %v2827, %v2877
  %v2894 = vmul.f32 %v2878, 1.442695
  %v2895 = vpow.pop %v2894
  %v2896 = vmul.f32 %v2879, 1.442695
  %v2897 = vpow.pop %v2896
  %v2898 = vmul.f32 %v2880, 1.442695
  %v2899 = vpow.pop %v2898
  %v2900 = vmul.f32 %v2881, 1.442695
  %v2901 = vpow.pop %v2900
  %v2902 = vmul.f32 %v2882, 1.442695
  %v2903 = vpow.pop %v2902
  %v2904 = vmul.f32 %v2883, 1.442695
  %v2905 = vpow.pop %v2904
  %v2906 = vmul.f32 %v2884, 1.442695
  %v2907 = vpow.pop %v2906
  %v2908 = vmul.f32 %v2885, 1.442695
  %v2909 = vpow.pop %v2908
  %v2910 = vmul.f32 %v2886, 1.442695
  %v2911 = vpow.pop %v2910
  %v2912 = vmul.f32 %v2887, 1.442695
  %v2913 = vpow.pop %v2912
  %v2914 = vmul.f32 %v2888, 1.442695
  %v2915 = vpow.pop %v2914
  %v2916 = vmul.f32 %v2889, 1.442695
  %v2917 = vpow.pop %v2916
  %v2918 = vmul.f32 %v2890, 1.442695
  %v2919 = vpow.pop %v2918
  %v2920 = vmul.f32 %v2891, 1.442695
  %v2921 = vpow.pop %v2920
  %v2922 = vmul.f32 %v2892, 1.442695
  %v2923 = vpow.pop %v2922
  %v2924 = vmul.f32 %v2893, 1.442695
  %v2925 = vpow.pop %v2924
  %v2926 = vsel %vm859, %v2895, 0.0
  %2927 = vadd.xlane.f32.xlu0 %v2926
  %v2928 = vpop.xlane.xlu0 %2927
  %v2929 = vsel %vm859, %v2897, 0.0
  %2930 = vadd.xlane.f32.xlu0 %v2929
  %v2931 = vpop.xlane.xlu0 %2930
  %v2932 = vsel %vm859, %v2899, 0.0
  %2933 = vadd.xlane.f32.xlu0 %v2932
  %v2934 = vpop.xlane.xlu0 %2933
  %v2935 = vsel %vm859, %v2901, 0.0
  %2936 = vadd.xlane.f32.xlu0 %v2935
  %v2937 = vpop.xlane.xlu0 %2936
  %v2938 = vsel %vm859, %v2903, 0.0
  %2939 = vadd.xlane.f32.xlu0 %v2938
  %v2940 = vpop.xlane.xlu0 %2939
  %v2941 = vsel %vm859, %v2905, 0.0
  %2942 = vadd.xlane.f32.xlu0 %v2941
  %v2943 = vpop.xlane.xlu0 %2942
  %v2944 = vsel %vm859, %v2907, 0.0
  %2945 = vadd.xlane.f32.xlu0 %v2944
  %v2946 = vpop.xlane.xlu0 %2945
  %v2947 = vsel %vm859, %v2909, 0.0
  %2948 = vadd.xlane.f32.xlu0 %v2947
  %v2949 = vpop.xlane.xlu0 %2948
  %v2950 = vsel %vm859, %v2911, 0.0
  %2951 = vadd.xlane.f32.xlu0 %v2950
  %v2952 = vpop.xlane.xlu0 %2951
  %v2953 = vsel %vm859, %v2913, 0.0
  %2954 = vadd.xlane.f32.xlu0 %v2953
  %v2955 = vpop.xlane.xlu0 %2954
  %v2956 = vsel %vm859, %v2915, 0.0
  %2957 = vadd.xlane.f32.xlu0 %v2956
  %v2958 = vpop.xlane.xlu0 %2957
  %v2959 = vsel %vm859, %v2917, 0.0
  %2960 = vadd.xlane.f32.xlu0 %v2959
  %v2961 = vpop.xlane.xlu0 %2960
  %v2962 = vsel %vm859, %v2919, 0.0
  %2963 = vadd.xlane.f32.xlu0 %v2962
  %v2964 = vpop.xlane.xlu0 %2963
  %v2965 = vsel %vm859, %v2921, 0.0
  %2966 = vadd.xlane.f32.xlu0 %v2965
  %v2967 = vpop.xlane.xlu0 %2966
  %v2968 = vsel %vm859, %v2923, 0.0
  %2969 = vadd.xlane.f32.xlu0 %v2968
  %v2970 = vpop.xlane.xlu0 %2969
  %v2971 = vsel %vm859, %v2925, 0.0
  %2972 = vadd.xlane.f32.xlu0 %v2971
  %v2973 = vpop.xlane.xlu0 %2972
  %v2974 = vrcp.pop %v2928
  %v2975 = vrcp.pop %v2931
  %v2976 = vrcp.pop %v2934
  %v2977 = vrcp.pop %v2937
  %v2978 = vrcp.pop %v2940
  %v2979 = vrcp.pop %v2943
  %v2980 = vrcp.pop %v2946
  %v2981 = vrcp.pop %v2949
  %v2982 = vrcp.pop %v2952
  %v2983 = vrcp.pop %v2955
  %v2984 = vrcp.pop %v2958
  %v2985 = vrcp.pop %v2961
  %v2986 = vrcp.pop %v2964
  %v2987 = vrcp.pop %v2967
  %v2988 = vrcp.pop %v2970
  %v2989 = vrcp.pop %v2973
  %v2990 = vmul.f32 %v2895, %v2974
  %v2991 = vmul.f32 %v2897, %v2975
  %v2992 = vmul.f32 %v2899, %v2976
  %v2993 = vmul.f32 %v2901, %v2977
  %v2994 = vmul.f32 %v2903, %v2978
  %v2995 = vmul.f32 %v2905, %v2979
  %v2996 = vmul.f32 %v2907, %v2980
  %v2997 = vmul.f32 %v2909, %v2981
  %v2998 = vmul.f32 %v2911, %v2982
  %v2999 = vmul.f32 %v2913, %v2983
  %v3000 = vmul.f32 %v2915, %v2984
  %v3001 = vmul.f32 %v2917, %v2985
  %v3002 = vmul.f32 %v2919, %v2986
  %v3003 = vmul.f32 %v2921, %v2987
  %v3004 = vmul.f32 %v2923, %v2988
  %v3005 = vmul.f32 %v2925, %v2989
  %v3006 = vpack.c.bf16 %v2991, %v2990
  %v3007 = vpack.c.bf16 %v2993, %v2992
  %v3008 = vpack.c.bf16 %v2995, %v2994
  %v3009 = vpack.c.bf16 %v2997, %v2996
  %v3010 = vpack.c.bf16 %v2999, %v2998
  %v3011 = vpack.c.bf16 %v3001, %v3000
  %v3012 = vpack.c.bf16 %v3003, %v3002
  %v3013 = vpack.c.bf16 %v3005, %v3004
  %3014 = vrot.lane.b32.xlu0 %v2422, 112
  %v3015 = vpop.permute.xlu0 %3014
  %v3018 = vsel %vm859, %v3006, 0
  %3020 = vmatprep.subr.bf16.mxu0 0
  %3021 = vmatpush1.bf16.msra.mxu0 %v3015
  %3022 = vmatprep.subr.bf16.mxu0 0
  %3023 = vmatpush1.bf16.msra.mxu0 0
  %3024 = vmatprep.subr.bf16.mxu0 0
  %3025 = vmatpush1.bf16.msra.mxu0 0
  %3026 = vmatprep.subr.bf16.mxu0 0
  %3027 = vmatpush1.bf16.msra.mxu0 0
  %3028 = vmatprep.subr.bf16.mxu0 0
  %3029 = vmatpush1.bf16.msra.mxu0 0
  %3030 = vmatprep.subr.bf16.mxu0 0
  %3031 = vmatpush1.bf16.msra.mxu0 0
  %3032 = vmatprep.subr.bf16.mxu0 0
  %3033 = vmatpush1.bf16.msra.mxu0 0
  %3034 = vmatprep.subr.bf16.mxu0 0
  %3035 = vmatpush1.bf16.msra.mxu0 0
  %3036 = vmatprep.subr.bf16.mxu0 0
  %3037 = vmatpush1.bf16.msra.mxu0 0
  %3038 = vmatprep.subr.bf16.mxu0 0
  %3039 = vmatpush1.bf16.msra.mxu0 0
  %3040 = vmatprep.subr.bf16.mxu0 0
  %3041 = vmatpush1.bf16.msra.mxu0 0
  %3042 = vmatprep.subr.bf16.mxu0 0
  %3043 = vmatpush1.bf16.msra.mxu0 0
  %3044 = vmatprep.subr.bf16.mxu0 0
  %3045 = vmatpush1.bf16.msra.mxu0 0
  %3046 = vmatprep.subr.bf16.mxu0 0
  %3047 = vmatpush1.bf16.msra.mxu0 0
  %3048 = vmatprep.subr.bf16.mxu0 0
  %3049 = vmatpush1.bf16.msra.mxu0 0
  %3050 = vmatprep.subr.bf16.mxu0 0
  %3051 = vmatpush1.bf16.msra.mxu0 0
  %3052 = vmatprep.mubr.bf16.mxu0 0
  %3053 = vmatmul.mubr.bf16.gmra.mrb[0].mxu0 %v3018
  %v3054 = vpop.f32.mrb[0].mxu0
  %v3055 = vadd.f32 0.0, %v3054
  %v3056 = vpop.f32.mrb[0].mxu0
  %v3057 = vpop.f32.mrb[0].mxu0
  %v3058 = vadd.f32 0.0, %v3057
  %v3059 = vpop.f32.mrb[0].mxu0
  %3060 = vdwg.mxu0
  %3061 = vrot.lane.b32.xlu0 %v2423, 112
  %v3062 = vpop.permute.xlu0 %3061
  %v3065 = vsel %vm859, %v3007, 0
  %3067 = vmatprep.subr.bf16.mxu0 0
  %3068 = vmatpush1.bf16.msra.mxu0 %v3062
  %3069 = vmatprep.subr.bf16.mxu0 0
  %3070 = vmatpush1.bf16.msra.mxu0 0
  %3071 = vmatprep.subr.bf16.mxu0 0
  %3072 = vmatpush1.bf16.msra.mxu0 0
  %3073 = vmatprep.subr.bf16.mxu0 0
  %3074 = vmatpush1.bf16.msra.mxu0 0
  %3075 = vmatprep.subr.bf16.mxu0 0
  %3076 = vmatpush1.bf16.msra.mxu0 0
  %3077 = vmatprep.subr.bf16.mxu0 0
  %3078 = vmatpush1.bf16.msra.mxu0 0
  %3079 = vmatprep.subr.bf16.mxu0 0
  %3080 = vmatpush1.bf16.msra.mxu0 0
  %3081 = vmatprep.subr.bf16.mxu0 0
  %3082 = vmatpush1.bf16.msra.mxu0 0
  %3083 = vmatprep.subr.bf16.mxu0 0
  %3084 = vmatpush1.bf16.msra.mxu0 0
  %3085 = vmatprep.subr.bf16.mxu0 0
  %3086 = vmatpush1.bf16.msra.mxu0 0
  %3087 = vmatprep.subr.bf16.mxu0 0
  %3088 = vmatpush1.bf16.msra.mxu0 0
  %3089 = vmatprep.subr.bf16.mxu0 0
  %3090 = vmatpush1.bf16.msra.mxu0 0
  %3091 = vmatprep.subr.bf16.mxu0 0
  %3092 = vmatpush1.bf16.msra.mxu0 0
  %3093 = vmatprep.subr.bf16.mxu0 0
  %3094 = vmatpush1.bf16.msra.mxu0 0
  %3095 = vmatprep.subr.bf16.mxu0 0
  %3096 = vmatpush1.bf16.msra.mxu0 0
  %3097 = vmatprep.subr.bf16.mxu0 0
  %3098 = vmatpush1.bf16.msra.mxu0 0
  %3099 = vmatprep.mubr.bf16.mxu0 0
  %3100 = vmatmul.mubr.bf16.gmra.mrb[0].mxu0 %v3065
  %v3101 = vpop.f32.mrb[0].mxu0
  %v3102 = vadd.f32 0.0, %v3101
  %v3103 = vpop.f32.mrb[0].mxu0
  %v3104 = vpop.f32.mrb[0].mxu0
  %v3105 = vadd.f32 0.0, %v3104
  %v3106 = vpop.f32.mrb[0].mxu0
  %3107 = vdwg.mxu0
  %3108 = vrot.lane.b32.xlu0 %v2424, 112
  %v3109 = vpop.permute.xlu0 %3108
  %v3112 = vsel %vm859, %v3008, 0
  %3114 = vmatprep.subr.bf16.mxu0 0
  %3115 = vmatpush1.bf16.msra.mxu0 %v3109
  %3116 = vmatprep.subr.bf16.mxu0 0
  %3117 = vmatpush1.bf16.msra.mxu0 0
  %3118 = vmatprep.subr.bf16.mxu0 0
  %3119 = vmatpush1.bf16.msra.mxu0 0
  %3120 = vmatprep.subr.bf16.mxu0 0
  %3121 = vmatpush1.bf16.msra.mxu0 0
  %3122 = vmatprep.subr.bf16.mxu0 0
  %3123 = vmatpush1.bf16.msra.mxu0 0
  %3124 = vmatprep.subr.bf16.mxu0 0
  %3125 = vmatpush1.bf16.msra.mxu0 0
  %3126 = vmatprep.subr.bf16.mxu0 0
  %3127 = vmatpush1.bf16.msra.mxu0 0
  %3128 = vmatprep.subr.bf16.mxu0 0
  %3129 = vmatpush1.bf16.msra.mxu0 0
  %3130 = vmatprep.subr.bf16.mxu0 0
  %3131 = vmatpush1.bf16.msra.mxu0 0
  %3132 = vmatprep.subr.bf16.mxu0 0
  %3133 = vmatpush1.bf16.msra.mxu0 0
  %3134 = vmatprep.subr.bf16.mxu0 0
  %3135 = vmatpush1.bf16.msra.mxu0 0
  %3136 = vmatprep.subr.bf16.mxu0 0
  %3137 = vmatpush1.bf16.msra.mxu0 0
  %3138 = vmatprep.subr.bf16.mxu0 0
  %3139 = vmatpush1.bf16.msra.mxu0 0
  %3140 = vmatprep.subr.bf16.mxu0 0
  %3141 = vmatpush1.bf16.msra.mxu0 0
  %3142 = vmatprep.subr.bf16.mxu0 0
  %3143 = vmatpush1.bf16.msra.mxu0 0
  %3144 = vmatprep.subr.bf16.mxu0 0
  %3145 = vmatpush1.bf16.msra.mxu0 0
  %3146 = vmatprep.mubr.bf16.mxu0 0
  %3147 = vmatmul.mubr.bf16.gmra.mrb[0].mxu0 %v3112
  %v3148 = vpop.f32.mrb[0].mxu0
  %v3149 = vadd.f32 0.0, %v3148
  %v3150 = vpop.f32.mrb[0].mxu0
  %v3151 = vpop.f32.mrb[0].mxu0
  %v3152 = vadd.f32 0.0, %v3151
  %v3153 = vpop.f32.mrb[0].mxu0
  %3154 = vdwg.mxu0
  %3155 = vrot.lane.b32.xlu0 %v2425, 112
  %v3156 = vpop.permute.xlu0 %3155
  %v3159 = vsel %vm859, %v3009, 0
  %3161 = vmatprep.subr.bf16.mxu0 0
  %3162 = vmatpush1.bf16.msra.mxu0 %v3156
  %3163 = vmatprep.subr.bf16.mxu0 0
  %3164 = vmatpush1.bf16.msra.mxu0 0
  %3165 = vmatprep.subr.bf16.mxu0 0
  %3166 = vmatpush1.bf16.msra.mxu0 0
  %3167 = vmatprep.subr.bf16.mxu0 0
  %3168 = vmatpush1.bf16.msra.mxu0 0
  %3169 = vmatprep.subr.bf16.mxu0 0
  %3170 = vmatpush1.bf16.msra.mxu0 0
  %3171 = vmatprep.subr.bf16.mxu0 0
  %3172 = vmatpush1.bf16.msra.mxu0 0
  %3173 = vmatprep.subr.bf16.mxu0 0
  %3174 = vmatpush1.bf16.msra.mxu0 0
  %3175 = vmatprep.subr.bf16.mxu0 0
  %3176 = vmatpush1.bf16.msra.mxu0 0
  %3177 = vmatprep.subr.bf16.mxu0 0
  %3178 = vmatpush1.bf16.msra.mxu0 0
  %3179 = vmatprep.subr.bf16.mxu0 0
  %3180 = vmatpush1.bf16.msra.mxu0 0
  %3181 = vmatprep.subr.bf16.mxu0 0
  %3182 = vmatpush1.bf16.msra.mxu0 0
  %3183 = vmatprep.subr.bf16.mxu0 0
  %3184 = vmatpush1.bf16.msra.mxu0 0
  %3185 = vmatprep.subr.bf16.mxu0 0
  %3186 = vmatpush1.bf16.msra.mxu0 0
  %3187 = vmatprep.subr.bf16.mxu0 0
  %3188 = vmatpush1.bf16.msra.mxu0 0
  %3189 = vmatprep.subr.bf16.mxu0 0
  %3190 = vmatpush1.bf16.msra.mxu0 0
  %3191 = vmatprep.subr.bf16.mxu0 0
  %3192 = vmatpush1.bf16.msra.mxu0 0
  %3193 = vmatprep.mubr.bf16.mxu0 0
  %3194 = vmatmul.mubr.bf16.gmra.mrb[0].mxu0 %v3159
  %v3195 = vpop.f32.mrb[0].mxu0
  %v3196 = vadd.f32 0.0, %v3195
  %v3197 = vpop.f32.mrb[0].mxu0
  %v3198 = vpop.f32.mrb[0].mxu0
  %v3199 = vadd.f32 0.0, %v3198
  %v3200 = vpop.f32.mrb[0].mxu0
  %3201 = vdwg.mxu0
  %3202 = vrot.lane.b32.xlu0 %v2426, 112
  %v3203 = vpop.permute.xlu0 %3202
  %v3206 = vsel %vm859, %v3010, 0
  %3208 = vmatprep.subr.bf16.mxu0 0
  %3209 = vmatpush1.bf16.msra.mxu0 %v3203
  %3210 = vmatprep.subr.bf16.mxu0 0
  %3211 = vmatpush1.bf16.msra.mxu0 0
  %3212 = vmatprep.subr.bf16.mxu0 0
  %3213 = vmatpush1.bf16.msra.mxu0 0
  %3214 = vmatprep.subr.bf16.mxu0 0
  %3215 = vmatpush1.bf16.msra.mxu0 0
  %3216 = vmatprep.subr.bf16.mxu0 0
  %3217 = vmatpush1.bf16.msra.mxu0 0
  %3218 = vmatprep.subr.bf16.mxu0 0
  %3219 = vmatpush1.bf16.msra.mxu0 0
  %3220 = vmatprep.subr.bf16.mxu0 0
  %3221 = vmatpush1.bf16.msra.mxu0 0
  %3222 = vmatprep.subr.bf16.mxu0 0
  %3223 = vmatpush1.bf16.msra.mxu0 0
  %3224 = vmatprep.subr.bf16.mxu0 0
  %3225 = vmatpush1.bf16.msra.mxu0 0
  %3226 = vmatprep.subr.bf16.mxu0 0
  %3227 = vmatpush1.bf16.msra.mxu0 0
  %3228 = vmatprep.subr.bf16.mxu0 0
  %3229 = vmatpush1.bf16.msra.mxu0 0
  %3230 = vmatprep.subr.bf16.mxu0 0
  %3231 = vmatpush1.bf16.msra.mxu0 0
  %3232 = vmatprep.subr.bf16.mxu0 0
  %3233 = vmatpush1.bf16.msra.mxu0 0
  %3234 = vmatprep.subr.bf16.mxu0 0
  %3235 = vmatpush1.bf16.msra.mxu0 0
  %3236 = vmatprep.subr.bf16.mxu0 0
  %3237 = vmatpush1.bf16.msra.mxu0 0
  %3238 = vmatprep.subr.bf16.mxu0 0
  %3239 = vmatpush1.bf16.msra.mxu0 0
  %3240 = vmatprep.mubr.bf16.mxu0 0
  %3241 = vmatmul.mubr.bf16.gmra.mrb[0].mxu0 %v3206
  %v3242 = vpop.f32.mrb[0].mxu0
  %v3243 = vadd.f32 0.0, %v3242
  %v3244 = vpop.f32.mrb[0].mxu0
  %v3245 = vpop.f32.mrb[0].mxu0
  %v3246 = vadd.f32 0.0, %v3245
  %v3247 = vpop.f32.mrb[0].mxu0
  %3248 = vdwg.mxu0
  %3249 = vrot.lane.b32.xlu0 %v2427, 112
  %v3250 = vpop.permute.xlu0 %3249
  %v3253 = vsel %vm859, %v3011, 0
  %3255 = vmatprep.subr.bf16.mxu0 0
  %3256 = vmatpush1.bf16.msra.mxu0 %v3250
  %3257 = vmatprep.subr.bf16.mxu0 0
  %3258 = vmatpush1.bf16.msra.mxu0 0
  %3259 = vmatprep.subr.bf16.mxu0 0
  %3260 = vmatpush1.bf16.msra.mxu0 0
  %3261 = vmatprep.subr.bf16.mxu0 0
  %3262 = vmatpush1.bf16.msra.mxu0 0
  %3263 = vmatprep.subr.bf16.mxu0 0
  %3264 = vmatpush1.bf16.msra.mxu0 0
  %3265 = vmatprep.subr.bf16.mxu0 0
  %3266 = vmatpush1.bf16.msra.mxu0 0
  %3267 = vmatprep.subr.bf16.mxu0 0
  %3268 = vmatpush1.bf16.msra.mxu0 0
  %3269 = vmatprep.subr.bf16.mxu0 0
  %3270 = vmatpush1.bf16.msra.mxu0 0
  %3271 = vmatprep.subr.bf16.mxu0 0
  %3272 = vmatpush1.bf16.msra.mxu0 0
  %3273 = vmatprep.subr.bf16.mxu0 0
  %3274 = vmatpush1.bf16.msra.mxu0 0
  %3275 = vmatprep.subr.bf16.mxu0 0
  %3276 = vmatpush1.bf16.msra.mxu0 0
  %3277 = vmatprep.subr.bf16.mxu0 0
  %3278 = vmatpush1.bf16.msra.mxu0 0
  %3279 = vmatprep.subr.bf16.mxu0 0
  %3280 = vmatpush1.bf16.msra.mxu0 0
  %3281 = vmatprep.subr.bf16.mxu0 0
  %3282 = vmatpush1.bf16.msra.mxu0 0
  %3283 = vmatprep.subr.bf16.mxu0 0
  %3284 = vmatpush1.bf16.msra.mxu0 0
  %3285 = vmatprep.subr.bf16.mxu0 0
  %3286 = vmatpush1.bf16.msra.mxu0 0
  %3287 = vmatprep.mubr.bf16.mxu0 0
  %3288 = vmatmul.mubr.bf16.gmra.mrb[0].mxu0 %v3253
  %v3289 = vpop.f32.mrb[0].mxu0
  %v3290 = vadd.f32 0.0, %v3289
  %v3291 = vpop.f32.mrb[0].mxu0
  %v3292 = vpop.f32.mrb[0].mxu0
  %v3293 = vadd.f32 0.0, %v3292
  %v3294 = vpop.f32.mrb[0].mxu0
  %3295 = vdwg.mxu0
  %3296 = vrot.lane.b32.xlu0 %v2428, 112
  %v3297 = vpop.permute.xlu0 %3296
  %v3300 = vsel %vm859, %v3012, 0
  %3302 = vmatprep.subr.bf16.mxu0 0
  %3303 = vmatpush1.bf16.msra.mxu0 %v3297
  %3304 = vmatprep.subr.bf16.mxu0 0
  %3305 = vmatpush1.bf16.msra.mxu0 0
  %3306 = vmatprep.subr.bf16.mxu0 0
  %3307 = vmatpush1.bf16.msra.mxu0 0
  %3308 = vmatprep.subr.bf16.mxu0 0
  %3309 = vmatpush1.bf16.msra.mxu0 0
  %3310 = vmatprep.subr.bf16.mxu0 0
  %3311 = vmatpush1.bf16.msra.mxu0 0
  %3312 = vmatprep.subr.bf16.mxu0 0
  %3313 = vmatpush1.bf16.msra.mxu0 0
  %3314 = vmatprep.subr.bf16.mxu0 0
  %3315 = vmatpush1.bf16.msra.mxu0 0
  %3316 = vmatprep.subr.bf16.mxu0 0
  %3317 = vmatpush1.bf16.msra.mxu0 0
  %3318 = vmatprep.subr.bf16.mxu0 0
  %3319 = vmatpush1.bf16.msra.mxu0 0
  %3320 = vmatprep.subr.bf16.mxu0 0
  %3321 = vmatpush1.bf16.msra.mxu0 0
  %3322 = vmatprep.subr.bf16.mxu0 0
  %3323 = vmatpush1.bf16.msra.mxu0 0
  %3324 = vmatprep.subr.bf16.mxu0 0
  %3325 = vmatpush1.bf16.msra.mxu0 0
  %3326 = vmatprep.subr.bf16.mxu0 0
  %3327 = vmatpush1.bf16.msra.mxu0 0
  %3328 = vmatprep.subr.bf16.mxu0 0
  %3329 = vmatpush1.bf16.msra.mxu0 0
  %3330 = vmatprep.subr.bf16.mxu0 0
  %3331 = vmatpush1.bf16.msra.mxu0 0
  %3332 = vmatprep.subr.bf16.mxu0 0
  %3333 = vmatpush1.bf16.msra.mxu0 0
  %3334 = vmatprep.mubr.bf16.mxu0 0
  %3335 = vmatmul.mubr.bf16.gmra.mrb[0].mxu0 %v3300
  %v3336 = vpop.f32.mrb[0].mxu0
  %v3337 = vadd.f32 0.0, %v3336
  %v3338 = vpop.f32.mrb[0].mxu0
  %v3339 = vpop.f32.mrb[0].mxu0
  %v3340 = vadd.f32 0.0, %v3339
  %v3341 = vpop.f32.mrb[0].mxu0
  %3342 = vdwg.mxu0
  %3343 = vrot.lane.b32.xlu0 %v2429, 112
  %v3344 = vpop.permute.xlu0 %3343
  %v3347 = vsel %vm859, %v3013, 0
  %3349 = vmatprep.subr.bf16.mxu0 0
  %3350 = vmatpush1.bf16.msra.mxu0 %v3344
  %3351 = vmatprep.subr.bf16.mxu0 0
  %3352 = vmatpush1.bf16.msra.mxu0 0
  %3353 = vmatprep.subr.bf16.mxu0 0
  %3354 = vmatpush1.bf16.msra.mxu0 0
  %3355 = vmatprep.subr.bf16.mxu0 0
  %3356 = vmatpush1.bf16.msra.mxu0 0
  %3357 = vmatprep.subr.bf16.mxu0 0
  %3358 = vmatpush1.bf16.msra.mxu0 0
  %3359 = vmatprep.subr.bf16.mxu0 0
  %3360 = vmatpush1.bf16.msra.mxu0 0
  %3361 = vmatprep.subr.bf16.mxu0 0
  %3362 = vmatpush1.bf16.msra.mxu0 0
  %3363 = vmatprep.subr.bf16.mxu0 0
  %3364 = vmatpush1.bf16.msra.mxu0 0
  %3365 = vmatprep.subr.bf16.mxu0 0
  %3366 = vmatpush1.bf16.msra.mxu0 0
  %3367 = vmatprep.subr.bf16.mxu0 0
  %3368 = vmatpush1.bf16.msra.mxu0 0
  %3369 = vmatprep.subr.bf16.mxu0 0
  %3370 = vmatpush1.bf16.msra.mxu0 0
  %3371 = vmatprep.subr.bf16.mxu0 0
  %3372 = vmatpush1.bf16.msra.mxu0 0
  %3373 = vmatprep.subr.bf16.mxu0 0
  %3374 = vmatpush1.bf16.msra.mxu0 0
  %3375 = vmatprep.subr.bf16.mxu0 0
  %3376 = vmatpush1.bf16.msra.mxu0 0
  %3377 = vmatprep.subr.bf16.mxu0 0
  %3378 = vmatpush1.bf16.msra.mxu0 0
  %3379 = vmatprep.subr.bf16.mxu0 0
  %3380 = vmatpush1.bf16.msra.mxu0 0
  %3381 = vmatprep.mubr.bf16.mxu0 0
  %3382 = vmatmul.mubr.bf16.gmra.mrb[0].mxu0 %v3347
  %v3383 = vpop.f32.mrb[0].mxu0
  %v3384 = vadd.f32 0.0, %v3383
  %v3385 = vpop.f32.mrb[0].mxu0
  %v3386 = vpop.f32.mrb[0].mxu0
  %v3387 = vadd.f32 0.0, %v3386
  %v3388 = vpop.f32.mrb[0].mxu0
  %3389 = vdwg.mxu0
  %s3390 = scalar_lea.vmem %s4, 32
  %v3391 = vld [vmem:[%s3390] sm:$0xff]
  %v3392 = vld [vmem:[%s3390 + $0x8] sm:$0xff]
  %v3393 = vld [vmem:[%s3390 + $0x10] sm:$0xff]
  %v3394 = vld [vmem:[%s3390 + $0x18] sm:$0xff]
  %v3395 = vpack.c.bf16 %v3391, %v3391
  %v3396 = vpack.c.bf16 %v3392, %v3392
  %v3397 = vpack.c.bf16 %v3393, %v3393
  %v3398 = vpack.c.bf16 %v3394, %v3394
  %v3399 = vpack.c.bf16 %v3058, %v3055
  %v3400 = vpack.c.bf16 %v3105, %v3102
  %v3401 = vpack.c.bf16 %v3152, %v3149
  %v3402 = vpack.c.bf16 %v3199, %v3196
  %v3403 = vpack.c.bf16 %v3246, %v3243
  %v3404 = vpack.c.bf16 %v3293, %v3290
  %v3405 = vpack.c.bf16 %v3340, %v3337
  %v3406 = vpack.c.bf16 %v3387, %v3384
  %v3408 = vsel %vm461, %v3399, 0
  %v3411 = vsel %vm1439, %v3395, 0
  %3413 = vmatprep.subr.bf16.mxu0 0
  %3414 = vmatpush1.bf16.msra.mxu0 %v3411
  %3415 = vmatprep.subr.bf16.mxu0 0
  %3416 = vmatpush1.bf16.msra.mxu0 0
  %3417 = vmatprep.subr.bf16.mxu0 0
  %3418 = vmatpush1.bf16.msra.mxu0 0
  %3419 = vmatprep.subr.bf16.mxu0 0
  %3420 = vmatpush1.bf16.msra.mxu0 0
  %3421 = vmatprep.subr.bf16.mxu0 0
  %3422 = vmatpush1.bf16.msra.mxu0 0
  %3423 = vmatprep.subr.bf16.mxu0 0
  %3424 = vmatpush1.bf16.msra.mxu0 0
  %3425 = vmatprep.subr.bf16.mxu0 0
  %3426 = vmatpush1.bf16.msra.mxu0 0
  %3427 = vmatprep.subr.bf16.mxu0 0
  %3428 = vmatpush1.bf16.msra.mxu0 0
  %3429 = vmatprep.subr.bf16.mxu0 0
  %3430 = vmatpush1.bf16.msra.mxu0 0
  %3431 = vmatprep.subr.bf16.mxu0 0
  %3432 = vmatpush1.bf16.msra.mxu0 0
  %3433 = vmatprep.subr.bf16.mxu0 0
  %3434 = vmatpush1.bf16.msra.mxu0 0
  %3435 = vmatprep.subr.bf16.mxu0 0
  %3436 = vmatpush1.bf16.msra.mxu0 0
  %3437 = vmatprep.subr.bf16.mxu0 0
  %3438 = vmatpush1.bf16.msra.mxu0 0
  %3439 = vmatprep.subr.bf16.mxu0 0
  %3440 = vmatpush1.bf16.msra.mxu0 0
  %3441 = vmatprep.subr.bf16.mxu0 0
  %3442 = vmatpush1.bf16.msra.mxu0 0
  %3443 = vmatprep.subr.bf16.mxu0 0
  %3444 = vmatpush1.bf16.msra.mxu0 0
  %3445 = vmatprep.mubr.bf16.mxu0 0
  %3446 = vmatmul.mubr.bf16.gmra.mrb[0].mxu0 %v3408
  %v3447 = vpop.f32.mrb[0].mxu0
  %v3448 = vadd.f32 0.0, %v3447
  %v3449 = vpop.f32.mrb[0].mxu0
  %v3450 = vpop.f32.mrb[0].mxu0
  %v3451 = vadd.f32 0.0, %v3450
  %v3452 = vpop.f32.mrb[0].mxu0
  %3453 = vdwg.mxu0
  %v3455 = vsel %vm461, %v3400, 0
  %v3458 = vsel %vm1439, %v3396, 0
  %3460 = vmatprep.subr.bf16.mxu0 0
  %3461 = vmatpush1.bf16.msra.mxu0 %v3458
  %3462 = vmatprep.subr.bf16.mxu0 0
  %3463 = vmatpush1.bf16.msra.mxu0 0
  %3464 = vmatprep.subr.bf16.mxu0 0
  %3465 = vmatpush1.bf16.msra.mxu0 0
  %3466 = vmatprep.subr.bf16.mxu0 0
  %3467 = vmatpush1.bf16.msra.mxu0 0
  %3468 = vmatprep.subr.bf16.mxu0 0
  %3469 = vmatpush1.bf16.msra.mxu0 0
  %3470 = vmatprep.subr.bf16.mxu0 0
  %3471 = vmatpush1.bf16.msra.mxu0 0
  %3472 = vmatprep.subr.bf16.mxu0 0
  %3473 = vmatpush1.bf16.msra.mxu0 0
  %3474 = vmatprep.subr.bf16.mxu0 0
  %3475 = vmatpush1.bf16.msra.mxu0 0
  %3476 = vmatprep.subr.bf16.mxu0 0
  %3477 = vmatpush1.bf16.msra.mxu0 0
  %3478 = vmatprep.subr.bf16.mxu0 0
  %3479 = vmatpush1.bf16.msra.mxu0 0
  %3480 = vmatprep.subr.bf16.mxu0 0
  %3481 = vmatpush1.bf16.msra.mxu0 0
  %3482 = vmatprep.subr.bf16.mxu0 0
  %3483 = vmatpush1.bf16.msra.mxu0 0
  %3484 = vmatprep.subr.bf16.mxu0 0
  %3485 = vmatpush1.bf16.msra.mxu0 0
  %3486 = vmatprep.subr.bf16.mxu0 0
  %3487 = vmatpush1.bf16.msra.mxu0 0
  %3488 = vmatprep.subr.bf16.mxu0 0
  %3489 = vmatpush1.bf16.msra.mxu0 0
  %3490 = vmatprep.subr.bf16.mxu0 0
  %3491 = vmatpush1.bf16.msra.mxu0 0
  %3492 = vmatprep.mubr.bf16.mxu0 0
  %3493 = vmatmul.mubr.bf16.gmra.mrb[0].mxu0 %v3455
  %v3494 = vpop.f32.mrb[0].mxu0
  %v3495 = vadd.f32 0.0, %v3494
  %v3496 = vpop.f32.mrb[0].mxu0
  %v3497 = vpop.f32.mrb[0].mxu0
  %v3498 = vadd.f32 0.0, %v3497
  %v3499 = vpop.f32.mrb[0].mxu0
  %3500 = vdwg.mxu0
  %v3502 = vsel %vm461, %v3401, 0
  %v3505 = vsel %vm1439, %v3397, 0
  %3507 = vmatprep.subr.bf16.mxu0 0
  %3508 = vmatpush1.bf16.msra.mxu0 %v3505
  %3509 = vmatprep.subr.bf16.mxu0 0
  %3510 = vmatpush1.bf16.msra.mxu0 0
  %3511 = vmatprep.subr.bf16.mxu0 0
  %3512 = vmatpush1.bf16.msra.mxu0 0
  %3513 = vmatprep.subr.bf16.mxu0 0
  %3514 = vmatpush1.bf16.msra.mxu0 0
  %3515 = vmatprep.subr.bf16.mxu0 0
  %3516 = vmatpush1.bf16.msra.mxu0 0
  %3517 = vmatprep.subr.bf16.mxu0 0
  %3518 = vmatpush1.bf16.msra.mxu0 0
  %3519 = vmatprep.subr.bf16.mxu0 0
  %3520 = vmatpush1.bf16.msra.mxu0 0
  %3521 = vmatprep.subr.bf16.mxu0 0
  %3522 = vmatpush1.bf16.msra.mxu0 0
  %3523 = vmatprep.subr.bf16.mxu0 0
  %3524 = vmatpush1.bf16.msra.mxu0 0
  %3525 = vmatprep.subr.bf16.mxu0 0
  %3526 = vmatpush1.bf16.msra.mxu0 0
  %3527 = vmatprep.subr.bf16.mxu0 0
  %3528 = vmatpush1.bf16.msra.mxu0 0
  %3529 = vmatprep.subr.bf16.mxu0 0
  %3530 = vmatpush1.bf16.msra.mxu0 0
  %3531 = vmatprep.subr.bf16.mxu0 0
  %3532 = vmatpush1.bf16.msra.mxu0 0
  %3533 = vmatprep.subr.bf16.mxu0 0
  %3534 = vmatpush1.bf16.msra.mxu0 0
  %3535 = vmatprep.subr.bf16.mxu0 0
  %3536 = vmatpush1.bf16.msra.mxu0 0
  %3537 = vmatprep.subr.bf16.mxu0 0
  %3538 = vmatpush1.bf16.msra.mxu0 0
  %3539 = vmatprep.mubr.bf16.mxu0 0
  %3540 = vmatmul.mubr.bf16.gmra.mrb[0].mxu0 %v3502
  %v3541 = vpop.f32.mrb[0].mxu0
  %v3542 = vadd.f32 0.0, %v3541
  %v3543 = vpop.f32.mrb[0].mxu0
  %v3544 = vpop.f32.mrb[0].mxu0
  %v3545 = vadd.f32 0.0, %v3544
  %v3546 = vpop.f32.mrb[0].mxu0
  %3547 = vdwg.mxu0
  %v3549 = vsel %vm461, %v3402, 0
  %v3552 = vsel %vm1439, %v3398, 0
  %3554 = vmatprep.subr.bf16.mxu0 0
  %3555 = vmatpush1.bf16.msra.mxu0 %v3552
  %3556 = vmatprep.subr.bf16.mxu0 0
  %3557 = vmatpush1.bf16.msra.mxu0 0
  %3558 = vmatprep.subr.bf16.mxu0 0
  %3559 = vmatpush1.bf16.msra.mxu0 0
  %3560 = vmatprep.subr.bf16.mxu0 0
  %3561 = vmatpush1.bf16.msra.mxu0 0
  %3562 = vmatprep.subr.bf16.mxu0 0
  %3563 = vmatpush1.bf16.msra.mxu0 0
  %3564 = vmatprep.subr.bf16.mxu0 0
  %3565 = vmatpush1.bf16.msra.mxu0 0
  %3566 = vmatprep.subr.bf16.mxu0 0
  %3567 = vmatpush1.bf16.msra.mxu0 0
  %3568 = vmatprep.subr.bf16.mxu0 0
  %3569 = vmatpush1.bf16.msra.mxu0 0
  %3570 = vmatprep.subr.bf16.mxu0 0
  %3571 = vmatpush1.bf16.msra.mxu0 0
  %3572 = vmatprep.subr.bf16.mxu0 0
  %3573 = vmatpush1.bf16.msra.mxu0 0
  %3574 = vmatprep.subr.bf16.mxu0 0
  %3575 = vmatpush1.bf16.msra.mxu0 0
  %3576 = vmatprep.subr.bf16.mxu0 0
  %3577 = vmatpush1.bf16.msra.mxu0 0
  %3578 = vmatprep.subr.bf16.mxu0 0
  %3579 = vmatpush1.bf16.msra.mxu0 0
  %3580 = vmatprep.subr.bf16.mxu0 0
  %3581 = vmatpush1.bf16.msra.mxu0 0
  %3582 = vmatprep.subr.bf16.mxu0 0
  %3583 = vmatpush1.bf16.msra.mxu0 0
  %3584 = vmatprep.subr.bf16.mxu0 0
  %3585 = vmatpush1.bf16.msra.mxu0 0
  %3586 = vmatprep.mubr.bf16.mxu0 0
  %3587 = vmatmul.mubr.bf16.gmra.mrb[0].mxu0 %v3549
  %v3588 = vpop.f32.mrb[0].mxu0
  %v3589 = vadd.f32 0.0, %v3588
  %v3590 = vpop.f32.mrb[0].mxu0
  %v3591 = vpop.f32.mrb[0].mxu0
  %v3592 = vadd.f32 0.0, %v3591
  %v3593 = vpop.f32.mrb[0].mxu0
  %3594 = vdwg.mxu0
  %v3596 = vsel %vm461, %v3403, 0
  %3598 = vmatprep.subr.bf16.mxu0 0
  %3599 = vmatpush1.bf16.msra.mxu0 %v3411
  %3600 = vmatprep.subr.bf16.mxu0 0
  %3601 = vmatpush1.bf16.msra.mxu0 0
  %3602 = vmatprep.subr.bf16.mxu0 0
  %3603 = vmatpush1.bf16.msra.mxu0 0
  %3604 = vmatprep.subr.bf16.mxu0 0
  %3605 = vmatpush1.bf16.msra.mxu0 0
  %3606 = vmatprep.subr.bf16.mxu0 0
  %3607 = vmatpush1.bf16.msra.mxu0 0
  %3608 = vmatprep.subr.bf16.mxu0 0
  %3609 = vmatpush1.bf16.msra.mxu0 0
  %3610 = vmatprep.subr.bf16.mxu0 0
  %3611 = vmatpush1.bf16.msra.mxu0 0
  %3612 = vmatprep.subr.bf16.mxu0 0
  %3613 = vmatpush1.bf16.msra.mxu0 0
  %3614 = vmatprep.subr.bf16.mxu0 0
  %3615 = vmatpush1.bf16.msra.mxu0 0
  %3616 = vmatprep.subr.bf16.mxu0 0
  %3617 = vmatpush1.bf16.msra.mxu0 0
  %3618 = vmatprep.subr.bf16.mxu0 0
  %3619 = vmatpush1.bf16.msra.mxu0 0
  %3620 = vmatprep.subr.bf16.mxu0 0
  %3621 = vmatpush1.bf16.msra.mxu0 0
  %3622 = vmatprep.subr.bf16.mxu0 0
  %3623 = vmatpush1.bf16.msra.mxu0 0
  %3624 = vmatprep.subr.bf16.mxu0 0
  %3625 = vmatpush1.bf16.msra.mxu0 0
  %3626 = vmatprep.subr.bf16.mxu0 0
  %3627 = vmatpush1.bf16.msra.mxu0 0
  %3628 = vmatprep.subr.bf16.mxu0 0
  %3629 = vmatpush1.bf16.msra.mxu0 0
  %3630 = vmatprep.mubr.bf16.mxu0 0
  %3631 = vmatmul.mubr.bf16.gmra.mrb[0].mxu0 %v3596
  %v3632 = vpop.f32.mrb[0].mxu0
  %v3633 = vadd.f32 0.0, %v3632
  %v3634 = vpop.f32.mrb[0].mxu0
  %v3635 = vpop.f32.mrb[0].mxu0
  %v3636 = vadd.f32 0.0, %v3635
  %v3637 = vpop.f32.mrb[0].mxu0
  %3638 = vdwg.mxu0
  %v3640 = vsel %vm461, %v3404, 0
  %3642 = vmatprep.subr.bf16.mxu0 0
  %3643 = vmatpush1.bf16.msra.mxu0 %v3458
  %3644 = vmatprep.subr.bf16.mxu0 0
  %3645 = vmatpush1.bf16.msra.mxu0 0
  %3646 = vmatprep.subr.bf16.mxu0 0
  %3647 = vmatpush1.bf16.msra.mxu0 0
  %3648 = vmatprep.subr.bf16.mxu0 0
  %3649 = vmatpush1.bf16.msra.mxu0 0
  %3650 = vmatprep.subr.bf16.mxu0 0
  %3651 = vmatpush1.bf16.msra.mxu0 0
  %3652 = vmatprep.subr.bf16.mxu0 0
  %3653 = vmatpush1.bf16.msra.mxu0 0
  %3654 = vmatprep.subr.bf16.mxu0 0
  %3655 = vmatpush1.bf16.msra.mxu0 0
  %3656 = vmatprep.subr.bf16.mxu0 0
  %3657 = vmatpush1.bf16.msra.mxu0 0
  %3658 = vmatprep.subr.bf16.mxu0 0
  %3659 = vmatpush1.bf16.msra.mxu0 0
  %3660 = vmatprep.subr.bf16.mxu0 0
  %3661 = vmatpush1.bf16.msra.mxu0 0
  %3662 = vmatprep.subr.bf16.mxu0 0
  %3663 = vmatpush1.bf16.msra.mxu0 0
  %3664 = vmatprep.subr.bf16.mxu0 0
  %3665 = vmatpush1.bf16.msra.mxu0 0
  %3666 = vmatprep.subr.bf16.mxu0 0
  %3667 = vmatpush1.bf16.msra.mxu0 0
  %3668 = vmatprep.subr.bf16.mxu0 0
  %3669 = vmatpush1.bf16.msra.mxu0 0
  %3670 = vmatprep.subr.bf16.mxu0 0
  %3671 = vmatpush1.bf16.msra.mxu0 0
  %3672 = vmatprep.subr.bf16.mxu0 0
  %3673 = vmatpush1.bf16.msra.mxu0 0
  %3674 = vmatprep.mubr.bf16.mxu0 0
  %3675 = vmatmul.mubr.bf16.gmra.mrb[0].mxu0 %v3640
  %v3676 = vpop.f32.mrb[0].mxu0
  %v3677 = vadd.f32 0.0, %v3676
  %v3678 = vpop.f32.mrb[0].mxu0
  %v3679 = vpop.f32.mrb[0].mxu0
  %v3680 = vadd.f32 0.0, %v3679
  %v3681 = vpop.f32.mrb[0].mxu0
  %3682 = vdwg.mxu0
  %v3684 = vsel %vm461, %v3405, 0
  %3686 = vmatprep.subr.bf16.mxu0 0
  %3687 = vmatpush1.bf16.msra.mxu0 %v3505
  %3688 = vmatprep.subr.bf16.mxu0 0
  %3689 = vmatpush1.bf16.msra.mxu0 0
  %3690 = vmatprep.subr.bf16.mxu0 0
  %3691 = vmatpush1.bf16.msra.mxu0 0
  %3692 = vmatprep.subr.bf16.mxu0 0
  %3693 = vmatpush1.bf16.msra.mxu0 0
  %3694 = vmatprep.subr.bf16.mxu0 0
  %3695 = vmatpush1.bf16.msra.mxu0 0
  %3696 = vmatprep.subr.bf16.mxu0 0
  %3697 = vmatpush1.bf16.msra.mxu0 0
  %3698 = vmatprep.subr.bf16.mxu0 0
  %3699 = vmatpush1.bf16.msra.mxu0 0
  %3700 = vmatprep.subr.bf16.mxu0 0
  %3701 = vmatpush1.bf16.msra.mxu0 0
  %3702 = vmatprep.subr.bf16.mxu0 0
  %3703 = vmatpush1.bf16.msra.mxu0 0
  %3704 = vmatprep.subr.bf16.mxu0 0
  %3705 = vmatpush1.bf16.msra.mxu0 0
  %3706 = vmatprep.subr.bf16.mxu0 0
  %3707 = vmatpush1.bf16.msra.mxu0 0
  %3708 = vmatprep.subr.bf16.mxu0 0
  %3709 = vmatpush1.bf16.msra.mxu0 0
  %3710 = vmatprep.subr.bf16.mxu0 0
  %3711 = vmatpush1.bf16.msra.mxu0 0
  %3712 = vmatprep.subr.bf16.mxu0 0
  %3713 = vmatpush1.bf16.msra.mxu0 0
  %3714 = vmatprep.subr.bf16.mxu0 0
  %3715 = vmatpush1.bf16.msra.mxu0 0
  %3716 = vmatprep.subr.bf16.mxu0 0
  %3717 = vmatpush1.bf16.msra.mxu0 0
  %3718 = vmatprep.mubr.bf16.mxu0 0
  %3719 = vmatmul.mubr.bf16.gmra.mrb[0].mxu0 %v3684
  %v3720 = vpop.f32.mrb[0].mxu0
  %v3721 = vadd.f32 0.0, %v3720
  %v3722 = vpop.f32.mrb[0].mxu0
  %v3723 = vpop.f32.mrb[0].mxu0
  %v3724 = vadd.f32 0.0, %v3723
  %v3725 = vpop.f32.mrb[0].mxu0
  %3726 = vdwg.mxu0
  %v3728 = vsel %vm461, %v3406, 0
  %3730 = vmatprep.subr.bf16.mxu0 0
  %3731 = vmatpush1.bf16.msra.mxu0 %v3552
  %3732 = vmatprep.subr.bf16.mxu0 0
  %3733 = vmatpush1.bf16.msra.mxu0 0
  %3734 = vmatprep.subr.bf16.mxu0 0
  %3735 = vmatpush1.bf16.msra.mxu0 0
  %3736 = vmatprep.subr.bf16.mxu0 0
  %3737 = vmatpush1.bf16.msra.mxu0 0
  %3738 = vmatprep.subr.bf16.mxu0 0
  %3739 = vmatpush1.bf16.msra.mxu0 0
  %3740 = vmatprep.subr.bf16.mxu0 0
  %3741 = vmatpush1.bf16.msra.mxu0 0
  %3742 = vmatprep.subr.bf16.mxu0 0
  %3743 = vmatpush1.bf16.msra.mxu0 0
  %3744 = vmatprep.subr.bf16.mxu0 0
  %3745 = vmatpush1.bf16.msra.mxu0 0
  %3746 = vmatprep.subr.bf16.mxu0 0
  %3747 = vmatpush1.bf16.msra.mxu0 0
  %3748 = vmatprep.subr.bf16.mxu0 0
  %3749 = vmatpush1.bf16.msra.mxu0 0
  %3750 = vmatprep.subr.bf16.mxu0 0
  %3751 = vmatpush1.bf16.msra.mxu0 0
  %3752 = vmatprep.subr.bf16.mxu0 0
  %3753 = vmatpush1.bf16.msra.mxu0 0
  %3754 = vmatprep.subr.bf16.mxu0 0
  %3755 = vmatpush1.bf16.msra.mxu0 0
  %3756 = vmatprep.subr.bf16.mxu0 0
  %3757 = vmatpush1.bf16.msra.mxu0 0
  %3758 = vmatprep.subr.bf16.mxu0 0
  %3759 = vmatpush1.bf16.msra.mxu0 0
  %3760 = vmatprep.subr.bf16.mxu0 0
  %3761 = vmatpush1.bf16.msra.mxu0 0
  %3762 = vmatprep.mubr.bf16.mxu0 0
  %3763 = vmatmul.mubr.bf16.gmra.mrb[0].mxu0 %v3728
  %v3764 = vpop.f32.mrb[0].mxu0
  %v3765 = vadd.f32 0.0, %v3764
  %v3766 = vpop.f32.mrb[0].mxu0
  %v3767 = vpop.f32.mrb[0].mxu0
  %v3768 = vadd.f32 0.0, %v3767
  %v3769 = vpop.f32.mrb[0].mxu0
  %3770 = vdwg.mxu0
  %v3771 = vsel %vm50, %v3448, 0.0
  %v3772 = vsel %vm50, %v3495, 0.0
  %v3773 = vadd.f32 %v3771, %v3772
  %v3774 = vsel %vm50, %v3542, 0.0
  %v3775 = vadd.f32 %v3773, %v3774
  %v3776 = vsel %vm50, %v3589, 0.0
  %v3777 = vadd.f32 %v3775, %v3776
  %v3778 = vsel %vm50, %v3451, 0.0
  %v3779 = vsel %vm50, %v3498, 0.0
  %v3780 = vadd.f32 %v3778, %v3779
  %v3781 = vsel %vm50, %v3545, 0.0
  %v3782 = vadd.f32 %v3780, %v3781
  %v3783 = vsel %vm50, %v3592, 0.0
  %v3784 = vadd.f32 %v3782, %v3783
  %v3785 = vsel %vm50, %v3633, 0.0
  %v3786 = vsel %vm50, %v3677, 0.0
  %v3787 = vadd.f32 %v3785, %v3786
  %v3788 = vsel %vm50, %v3721, 0.0
  %v3789 = vadd.f32 %v3787, %v3788
  %v3790 = vsel %vm50, %v3765, 0.0
  %v3791 = vadd.f32 %v3789, %v3790
  %v3792 = vsel %vm50, %v3636, 0.0
  %v3793 = vsel %vm50, %v3680, 0.0
  %v3794 = vadd.f32 %v3792, %v3793
  %v3795 = vsel %vm50, %v3724, 0.0
  %v3796 = vadd.f32 %v3794, %v3795
  %v3797 = vsel %vm50, %v3768, 0.0
  %v3798 = vadd.f32 %v3796, %v3797
  %v3799 = vadd.f32 %v2013, %v3777
  %v3800 = vadd.f32 %v2014, %v3784
  %v3801 = vadd.f32 %v2015, %v3791
  %v3802 = vadd.f32 %v2016, %v3798
  %s3803 = scalar_lea.vmem %s5, 1
  %v3804 = vld [vmem:[%s3803] sm:$0x1]
  %v3805 = vmul.f32 %v3799, %v3799
  %v3806 = vmul.f32 %v3800, %v3800
  %v3807 = vmul.f32 %v3801, %v3801
  %v3808 = vmul.f32 %v3802, %v3802
  %v3809 = vsel %vm50, %v3805, 0.0
  %3810 = vadd.xlane.f32.xlu0 %v3809
  %v3811 = vpop.xlane.xlu0 %3810
  %v3812 = vsel %vm50, %v3806, 0.0
  %3813 = vadd.xlane.f32.xlu0 %v3812
  %v3814 = vpop.xlane.xlu0 %3813
  %v3815 = vsel %vm50, %v3807, 0.0
  %3816 = vadd.xlane.f32.xlu0 %v3815
  %v3817 = vpop.xlane.xlu0 %3816
  %v3818 = vsel %vm50, %v3808, 0.0
  %3819 = vadd.xlane.f32.xlu0 %v3818
  %v3820 = vpop.xlane.xlu0 %3819
  %v3821 = vmul.f32 %v3811, %v63
  %v3822 = vmul.f32 %v3814, %v63
  %v3823 = vmul.f32 %v3817, %v63
  %v3824 = vmul.f32 %v3820, %v63
  %v3825 = vadd.f32 %v3821, 1e-06
  %v3826 = vadd.f32 %v3822, 1e-06
  %v3827 = vadd.f32 %v3823, 1e-06
  %v3828 = vadd.f32 %v3824, 1e-06
  %v3829 = vrsqrt.pop %v3825
  %v3830 = vrsqrt.pop %v3826
  %v3831 = vrsqrt.pop %v3827
  %v3832 = vrsqrt.pop %v3828
  %v3833 = vmul.f32 %v3799, %v3829
  %v3834 = vmul.f32 %v3800, %v3830
  %v3835 = vmul.f32 %v3801, %v3831
  %v3836 = vmul.f32 %v3802, %v3832
  %v3838 = vlaneseq
  %v3839 = vshrl.u32 %v3838, 7
  %v3840 = vsub.s32 0, %v3839
  %v3841 = vrot.slane %v3804, %v3840
  %v3843 = vmul.f32 %v3833, %v3841
  %v3844 = vmul.f32 %v3834, %v3841
  %v3845 = vmul.f32 %v3835, %v3841
  %v3846 = vmul.f32 %v3836, %v3841
  %v3847 = vpack.c.bf16 %v3844, %v3843
  %v3848 = vpack.c.bf16 %v3846, %v3845
  %s3849 = scalar_lea.vmem %s6, 32
  %v3850 = vld [vmem:[%s3849] sm:$0xff]
  %v3851 = vld [vmem:[%s3849 + $0x8] sm:$0xff]
  %v3852 = vld [vmem:[%s3849 + $0x10] sm:$0xff]
  %v3853 = vld [vmem:[%s3849 + $0x18] sm:$0xff]
  %v3854 = vpack.c.bf16 %v3851, %v3850
  %v3855 = vpack.c.bf16 %v3853, %v3852
  %v3857 = vsel %vm50, %v3847, 0
  %v3860 = vsel %vm50, %v3848, 0
  %3862 = vmatprep.subr.bf16.mxu0 0
  %3863 = vmatpush1.bf16.msra.mxu0 %v3854
  %3864 = vmatprep.subr.bf16.mxu0 0
  %3865 = vmatpush1.bf16.msra.mxu0 %v3855
  %3866 = vmatprep.subr.bf16.mxu0 0
  %3867 = vmatpush1.bf16.msra.mxu0 0
  %3868 = vmatprep.subr.bf16.mxu0 0
  %3869 = vmatpush1.bf16.msra.mxu0 0
  %3870 = vmatprep.subr.bf16.mxu0 0
  %3871 = vmatpush1.bf16.msra.mxu0 0
  %3872 = vmatprep.subr.bf16.mxu0 0
  %3873 = vmatpush1.bf16.msra.mxu0 0
  %3874 = vmatprep.subr.bf16.mxu0 0
  %3875 = vmatpush1.bf16.msra.mxu0 0
  %3876 = vmatprep.subr.bf16.mxu0 0
  %3877 = vmatpush1.bf16.msra.mxu0 0
  %3878 = vmatprep.subr.bf16.mxu0 0
  %3879 = vmatpush1.bf16.msra.mxu0 0
  %3880 = vmatprep.subr.bf16.mxu0 0
  %3881 = vmatpush1.bf16.msra.mxu0 0
  %3882 = vmatprep.subr.bf16.mxu0 0
  %3883 = vmatpush1.bf16.msra.mxu0 0
  %3884 = vmatprep.subr.bf16.mxu0 0
  %3885 = vmatpush1.bf16.msra.mxu0 0
  %3886 = vmatprep.subr.bf16.mxu0 0
  %3887 = vmatpush1.bf16.msra.mxu0 0
  %3888 = vmatprep.subr.bf16.mxu0 0
  %3889 = vmatpush1.bf16.msra.mxu0 0
  %3890 = vmatprep.subr.bf16.mxu0 0
  %3891 = vmatpush1.bf16.msra.mxu0 0
  %3892 = vmatprep.subr.bf16.mxu0 0
  %3893 = vmatpush1.bf16.msra.mxu0 0
  %3894 = vmatprep.mubr.bf16.mxu0 0
  %3895 = vmatmul.mubr.bf16.gmra.mrb[0].mxu0 %v3857
  %v3896 = vpop.f32.mrb[0].mxu0
  %v3897 = vadd.f32 0.0, %v3896
  %v3898 = vpop.f32.mrb[0].mxu0
  %v3899 = vpop.f32.mrb[0].mxu0
  %v3900 = vadd.f32 0.0, %v3899
  %v3901 = vpop.f32.mrb[0].mxu0
  %3902 = vmatprep.mubr.bf16.mxu0 0
  %3903 = vmatmul.mubr.bf16.gmra.mrb[0].mxu0 %v3860
  %v3904 = vpop.f32.mrb[0].mxu0
  %v3905 = vadd.f32 0.0, %v3904
  %v3906 = vpop.f32.mrb[0].mxu0
  %v3907 = vpop.f32.mrb[0].mxu0
  %v3908 = vadd.f32 0.0, %v3907
  %v3909 = vpop.f32.mrb[0].mxu0
  %3910 = vdwg.mxu0
  %v3911 = vmax.f32 %v3897, 0.0
  %v3912 = vmax.f32 %v3900, 0.0
  %v3913 = vmax.f32 %v3905, 0.0
  %v3914 = vmax.f32 %v3908, 0.0
  %v3915 = vpack.c.bf16 %v3912, %v3911
  %v3916 = vpack.c.bf16 %v3914, %v3913
  %s3917 = scalar_lea.vmem %s7, 64
  %v3918 = vld [vmem:[%s3917] sm:$0xff]
  %v3919 = vld [vmem:[%s3917 + $0x8] sm:$0xff]
  %v3920 = vld [vmem:[%s3917 + $0x10] sm:$0xff]
  %v3921 = vld [vmem:[%s3917 + $0x18] sm:$0xff]
  %v3922 = vld [vmem:[%s3917 + $0x20] sm:$0xff]
  %v3923 = vld [vmem:[%s3917 + $0x28] sm:$0xff]
  %v3924 = vld [vmem:[%s3917 + $0x30] sm:$0xff]
  %v3925 = vld [vmem:[%s3917 + $0x38] sm:$0xff]
  %v3926 = vpack.c.bf16 %v3919, %v3918
  %v3927 = vpack.c.bf16 %v3921, %v3920
  %v3928 = vpack.c.bf16 %v3923, %v3922
  %v3929 = vpack.c.bf16 %v3925, %v3924
  %v3931 = vsel %vm1957, %v3915, 0
  %v3934 = vsel %vm1957, %v3916, 0
  %3936 = vmatprep.subr.bf16.mxu0 0
  %3937 = vmatpush1.bf16.msra.mxu0 %v3926
  %3938 = vmatprep.subr.bf16.mxu0 0
  %3939 = vmatpush1.bf16.msra.mxu0 %v3927
  %3940 = vmatprep.subr.bf16.mxu0 0
  %3941 = vmatpush1.bf16.msra.mxu0 %v3928
  %3942 = vmatprep.subr.bf16.mxu0 0
  %3943 = vmatpush1.bf16.msra.mxu0 %v3929
  %3944 = vmatprep.subr.bf16.mxu0 0
  %3945 = vmatpush1.bf16.msra.mxu0 0
  %3946 = vmatprep.subr.bf16.mxu0 0
  %3947 = vmatpush1.bf16.msra.mxu0 0
  %3948 = vmatprep.subr.bf16.mxu0 0
  %3949 = vmatpush1.bf16.msra.mxu0 0
  %3950 = vmatprep.subr.bf16.mxu0 0
  %3951 = vmatpush1.bf16.msra.mxu0 0
  %3952 = vmatprep.subr.bf16.mxu0 0
  %3953 = vmatpush1.bf16.msra.mxu0 0
  %3954 = vmatprep.subr.bf16.mxu0 0
  %3955 = vmatpush1.bf16.msra.mxu0 0
  %3956 = vmatprep.subr.bf16.mxu0 0
  %3957 = vmatpush1.bf16.msra.mxu0 0
  %3958 = vmatprep.subr.bf16.mxu0 0
  %3959 = vmatpush1.bf16.msra.mxu0 0
  %3960 = vmatprep.subr.bf16.mxu0 0
  %3961 = vmatpush1.bf16.msra.mxu0 0
  %3962 = vmatprep.subr.bf16.mxu0 0
  %3963 = vmatpush1.bf16.msra.mxu0 0
  %3964 = vmatprep.subr.bf16.mxu0 0
  %3965 = vmatpush1.bf16.msra.mxu0 0
  %3966 = vmatprep.subr.bf16.mxu0 0
  %3967 = vmatpush1.bf16.msra.mxu0 0
  %3968 = vmatprep.mubr.bf16.mxu0 0
  %3969 = vmatmul.mubr.bf16.gmra.mrb[0].mxu0 %v3931
  %v3970 = vpop.f32.mrb[0].mxu0
  %v3971 = vadd.f32 0.0, %v3970
  %v3972 = vpop.f32.mrb[0].mxu0
  %v3973 = vpop.f32.mrb[0].mxu0
  %v3974 = vadd.f32 0.0, %v3973
  %v3975 = vpop.f32.mrb[0].mxu0
  %3976 = vmatprep.mubr.bf16.mxu0 0
  %3977 = vmatmul.mubr.bf16.gmra.mrb[0].mxu0 %v3934
  %v3978 = vpop.f32.mrb[0].mxu0
  %v3979 = vadd.f32 0.0, %v3978
  %v3980 = vpop.f32.mrb[0].mxu0
  %v3981 = vpop.f32.mrb[0].mxu0
  %v3982 = vadd.f32 0.0, %v3981
  %v3983 = vpop.f32.mrb[0].mxu0
  %3984 = vdwg.mxu0
  %v3985 = vadd.f32 %v3799, %v3971
  %v3986 = vadd.f32 %v3800, %v3974
  %v3987 = vadd.f32 %v3801, %v3979
  %v3988 = vadd.f32 %v3802, %v3982
  %v3989 = vld [vmem:[%s8] sm:$0x1]
  %v3990 = vmul.f32 %v3985, %v3985
  %v3991 = vmul.f32 %v3986, %v3986
  %v3992 = vmul.f32 %v3987, %v3987
  %v3993 = vmul.f32 %v3988, %v3988
  %v3994 = vsel %vm50, %v3990, 0.0
  %3995 = vadd.xlane.f32.xlu0 %v3994
  %v3996 = vpop.xlane.xlu0 %3995
  %v3997 = vsel %vm50, %v3991, 0.0
  %3998 = vadd.xlane.f32.xlu0 %v3997
  %v3999 = vpop.xlane.xlu0 %3998
  %v4000 = vsel %vm50, %v3992, 0.0
  %4001 = vadd.xlane.f32.xlu0 %v4000
  %v4002 = vpop.xlane.xlu0 %4001
  %v4003 = vsel %vm50, %v3993, 0.0
  %4004 = vadd.xlane.f32.xlu0 %v4003
  %v4005 = vpop.xlane.xlu0 %4004
  %v4006 = vmul.f32 %v3996, %v63
  %v4007 = vmul.f32 %v3999, %v63
  %v4008 = vmul.f32 %v4002, %v63
  %v4009 = vmul.f32 %v4005, %v63
  %v4010 = vadd.f32 %v4006, 1e-06
  %v4011 = vadd.f32 %v4007, 1e-06
  %v4012 = vadd.f32 %v4008, 1e-06
  %v4013 = vadd.f32 %v4009, 1e-06
  %v4014 = vrsqrt.pop %v4010
  %v4015 = vrsqrt.pop %v4011
  %v4016 = vrsqrt.pop %v4012
  %v4017 = vrsqrt.pop %v4013
  %v4018 = vmul.f32 %v3985, %v4014
  %v4019 = vmul.f32 %v3986, %v4015
  %v4020 = vmul.f32 %v3987, %v4016
  %v4021 = vmul.f32 %v3988, %v4017
  %v4023 = vlaneseq
  %v4024 = vshrl.u32 %v4023, 7
  %v4025 = vsub.s32 0, %v4024
  %v4026 = vrot.slane %v3989, %v4025
  %v4028 = vmul.f32 %v4018, %v4026
  %v4029 = vmul.f32 %v4019, %v4026
  %v4030 = vmul.f32 %v4020, %v4026
  %v4031 = vmul.f32 %v4021, %v4026
  %4032 = vst.msk [vmem:[%s9] sm:$0xff] %vm50, %v4028
  %4033 = vst.msk [vmem:[%s9 + $0x8] sm:$0xff] %vm50, %v4029
  %4034 = vst.msk [vmem:[%s9 + $0x10] sm:$0xff] %vm50, %v4030
  %4035 = vst.msk [vmem:[%s9 + $0x18] sm:$0xff] %vm50, %v4031
  // Predicated region
  $region38: #{prost_t5_forward.1} parent=0 // pred_check
    _
  $region39: #{prost_t5_forward.1} parent=0 // pred_check_branch
    %4037 = sbr.rel (0) target = $region41
  $region40: #{prost_t5_forward.1} parent=0 // pred_region
    _
  $region41: #{prost_t5_forward.1} parent=0 // pred_fallthru
    _
  // Predicated region
  $region42: #{prost_t5_forward.1} parent=0 // pred_check
    _
  $region43: #{prost_t5_forward.1} parent=0 // pred_check_branch
    %4039 = sbr.rel (0) target = $region45
  $region44: #{prost_t5_forward.1} parent=0 // pred_region
    _
  $region45: #{prost_t5_forward.1} parent=0 // pred_fallthru
    _

</llo_original>
